<compile_context>
chip_gen: v7x
topology: tpu7x:2x2x1
jax: 0.10.0
libtpu: 0.0.40
codegen_flags: <defaults>
</compile_context>

<pallas_src>
import functools
import math

import jax
import jax.numpy as jnp
from jax.experimental import pallas as pl
from jax.experimental.pallas import tpu as pltpu

# ----------------------------- model config (small) -------------------------------
IMG = 16
PATCH = 8
IN_CHANS = 4
EMBED = 32
DEPTH = 2
HEADS = 4
HEAD_DIM = EMBED // HEADS
MLP_HID = int(EMBED * 4.0)
ADAPTER_BN = 8                      # tuning_config.ffn_num
NUM_PATCHES = (IMG // PATCH) ** 2
SEQ = NUM_PATCHES + 1               # + cls token
SEQ_P = 8                           # sequence padded to a sublane multiple
PATCH_DIM = IN_CHANS * PATCH * PATCH
ATTN_SCALE = HEAD_DIM ** -0.5

OUT_W = 128                         # lane-dense output width (first EMBED cols used)
VEC_ROWS = 16                       # per-layer vector slab rows (12 used)
VEC_W = 128
TARGET_ROWS = 256                   # target matmul rows per grid step (v6e/v7x MXU)

# Packing order of the per-layer small vectors inside the (DEPTH, VEC_ROWS, 128) slab.
_LAYER_VEC_ORDER = ("ln1_g", "ln1_b", "bqkv", "bo", "ad_ln_g", "ad_ln_b",
                    "ad_down_b", "ad_up_b", "ln2_g", "ln2_b", "b1", "b2")


# ------------------------------ in-kernel helpers ----------------------------------
def _ln(x, g, b, eps):
    mu = jnp.mean(x, axis=-1, keepdims=True)
    xc = x - mu
    var = jnp.mean(xc * xc, axis=-1, keepdims=True)
    return xc * jax.lax.rsqrt(var + eps) * g + b


def _gelu(y):
    # TODO(synk): nn.GELU() is erf-exact; tanh approximation used (erf lowering
    # not guaranteed in Mosaic).
    c = math.sqrt(2.0 / math.pi)
    return 0.5 * y * (1.0 + jnp.tanh(c * (y + 0.044715 * y * y * y)))


# --------------------------------- fused kernel ------------------------------------
def _vit_fused_kernel(bt, patches_ref, base_ref, pw_ref, wqkv_ref, wo_ref,
                      ad_dw_ref, ad_uw_ref, w1_ref, w2_ref, vec_ref, gvec_ref,
                      out_ref, ao_scr):
    rows = bt * SEQ_P

    # ---- patch embedding; `base` already folds cls token + pos-embed + patch bias ----
    x = jnp.dot(patches_ref[...], pw_ref[...],
                preferred_element_type=jnp.float32) + base_ref[...]          # (rows, E)

    # Keys at padded token positions [SEQ, SEQ_P) are masked out of every softmax.
    kmask = jnp.where(
        jax.lax.broadcasted_iota(jnp.int32, (1, SEQ_P), 1) < SEQ,
        0.0, -1e30).astype(jnp.float32)                                      # (1, SEQ_P)

    for d in range(DEPTH):
        vec = vec_ref[d]                                   # (VEC_ROWS, 128) param slab
        row = lambda i, w: vec[i:i + 1, :w]                # static slab slices
        ln1_g, ln1_b = row(0, EMBED), row(1, EMBED)
        bqkv, bo = row(2, 3 * EMBED), row(3, EMBED)
        ad_g, ad_b = row(4, EMBED), row(5, EMBED)
        ad_db, ad_ub = row(6, ADAPTER_BN), row(7, EMBED)
        ln2_g, ln2_b = row(8, EMBED), row(9, EMBED)
        b1, b2 = row(10, MLP_HID), row(11, EMBED)

        # ---- attention branch: x = x + attn(norm1(x)) ----
        h = _ln(x, ln1_g, ln1_b, 1e-6)
        qkv = jnp.dot(h, wqkv_ref[d],
                      preferred_element_type=jnp.float32) + bqkv             # (rows, 3E)
        qkv3 = qkv.reshape(bt, SEQ_P, 3 * EMBED)
        for hh in range(HEADS):
            q = qkv3[:, :, hh * HEAD_DIM:(hh + 1) * HEAD_DIM]
            k = qkv3[:, :, EMBED + hh * HEAD_DIM:EMBED + (hh + 1) * HEAD_DIM]
            v = qkv3[:, :, 2 * EMBED + hh * HEAD_DIM:2 * EMBED + (hh + 1) * HEAD_DIM]
            s = jnp.einsum("bqd,bkd->bqk", q, k,
                           preferred_element_type=jnp.float32) * ATTN_SCALE + kmask
            s = s - jnp.max(s, axis=-1, keepdims=True)
            p = jnp.exp(s)
            p = p * pl.reciprocal(jnp.sum(p, axis=-1, keepdims=True), approx=True)
            # TODO(synk): source has `torch.bmm(attn_probs)` (missing `v`); the
            # intended `attn_probs @ v` is implemented.
            o = jnp.einsum("bqk,bkd->bqd", p, v, preferred_element_type=jnp.float32)
            # Head results land in a VMEM scratch at static column offsets (no concat).
            ao_scr[:, :, hh * HEAD_DIM:(hh + 1) * HEAD_DIM] = o
        ao = ao_scr[...].reshape(rows, EMBED)
        x = x + jnp.dot(ao, wo_ref[d], preferred_element_type=jnp.float32) + bo

        # ---- parallel AdaptFormer adapter (add_residual=False, scale=1.0, LN 'in') ----
        a = _ln(x, ad_g, ad_b, 1e-5)
        a = jnp.maximum(jnp.dot(a, ad_dw_ref[d],
                                preferred_element_type=jnp.float32) + ad_db, 0.0)
        adapt_x = jnp.dot(a, ad_uw_ref[d],
                          preferred_element_type=jnp.float32) + ad_ub

        # ---- MLP branch ----
        h2 = _ln(x, ln2_g, ln2_b, 1e-6)
        h2 = _gelu(jnp.dot(h2, w1_ref[d],
                           preferred_element_type=jnp.float32) + b1)
        mlp = jnp.dot(h2, w2_ref[d], preferred_element_type=jnp.float32) + b2

        x = x + mlp + adapt_x

    # ---- final norm of each sample's cls row; lane-dense (bt, 128) store ----
    cls = x.reshape(bt, SEQ_P, EMBED)[:, 0, :]                               # (bt, E)
    g = gvec_ref[...]
    cls = _ln(cls, g[0:1, :EMBED], g[1:2, :EMBED], 1e-6)
    out_ref[0] = jnp.concatenate(
        [cls, jnp.zeros((bt, OUT_W - EMBED), jnp.float32)], axis=-1)


# --------------------------------- param packing -----------------------------------
def _pad_lane(v, width=VEC_W):
    v = v.reshape(-1)
    return jnp.pad(v, (0, width - v.shape[0]))


def _pack_params(params):
    """Pack per-layer vectors into one (DEPTH, VEC_ROWS, 128) lane-dense slab and the
    final-norm vectors into one (8, 128) slab (one DMA each, instead of ~20 tiny ones)."""
    layers = []
    for d in range(DEPTH):
        rows = [_pad_lane(params[name][d]) for name in _LAYER_VEC_ORDER]
        rows += [jnp.zeros((VEC_W,), jnp.float32)] * (VEC_ROWS - len(rows))
        layers.append(jnp.stack(rows))
    vslab = jnp.stack(layers)                                   # (DEPTH, VEC_ROWS, 128)
    grow = [_pad_lane(params["norm_g"]), _pad_lane(params["norm_b"])]
    grow += [jnp.zeros((VEC_W,), jnp.float32)] * (8 - len(grow))
    gslab = jnp.stack(grow)                                     # (8, 128)
    return vslab, gslab


# --------------------------------- forward pass ------------------------------------
def vit_forward(x, params, *, batch_tile=None):
    """x: (B, C, H, W) NCHW float32 -> (B, EMBED): LN of the cls token (global_pool=False)."""
    B, C, H, W = x.shape
    assert (C, H, W) == (IN_CHANS, IMG, IMG)

    # Samples per grid step: aim for ~TARGET_ROWS matmul rows per step, but keep
    # >=2 grid steps when the batch allows it (megacore / v7x 2-TC distribution).
    if batch_tile is None:
        bt = max(1, min(B, TARGET_ROWS // SEQ_P))
        if B > 1 and pl.cdiv(B, bt) < 2:
            bt = pl.cdiv(B, 2)
    else:
        bt = int(batch_tile)
    n_steps = pl.cdiv(B, bt)
    b_pad = n_steps * bt

    # Patchify (order matches Conv2d weight (D, C, ph, pw) flattening) and insert the
    # all-zero cls / padding rows.  Plain XLA, fuses into the surrounding jit.
    Hp, Wp = H // PATCH, W // PATCH
    p = x.reshape(B, C, Hp, PATCH, Wp, PATCH).transpose(0, 2, 4, 1, 3, 5)
    p = p.reshape(B, NUM_PATCHES, PATCH_DIM)
    pa = jnp.zeros((b_pad, SEQ_P, PATCH_DIM), jnp.float32)
    pa = pa.at[:B, 1:1 + NUM_PATCHES, :].set(p)
    patches2d = pa.reshape(b_pad * SEQ_P, PATCH_DIM)

    # Additive base rows: row 0 = cls + pos[0]; rows 1..NP = pos + patch bias;
    # padded rows = 0.  Replaces the in-kernel cls-token concat.
    base = jnp.zeros((SEQ_P, EMBED), jnp.float32)
    base = base.at[0].set(params["cls_token"] + params["pos_embed"][0])
    base = base.at[1:SEQ].set(params["pos_embed"][1:] + params["patch_b"][None, :])
    base_tiled = jnp.tile(base, (bt, 1))                        # (bt*SEQ_P, EMBED)

    vslab, gslab = _pack_params(params)

    def _const(shape):
        """Full-array block, same block every grid step (stays VMEM-resident)."""
        return pl.BlockSpec(shape, lambda s, _z=(0,) * len(shape): _z)

    operands = (patches2d, base_tiled, params["patch_w"],
                params["wqkv"], params["wo"],
                params["ad_down_w"], params["ad_up_w"],
                params["w1"], params["w2"], vslab, gslab)

    in_specs = [pl.BlockSpec((bt * SEQ_P, PATCH_DIM), lambda s: (s, 0))]
    in_specs += [_const(op.shape) for op in operands[1:]]
    # NOTE: constant-index weight blocks could use pipeline_mode=pl.Buffered(1) to drop
    # their redundant second buffer; left at the default since VMEM is not a constraint
    # at these sizes (few hundred KiB total, far under even v7x's 64 MiB/TC).

    out = pl.pallas_call(
        functools.partial(_vit_fused_kernel, bt),
        out_shape=jax.ShapeDtypeStruct((n_steps, bt, OUT_W), jnp.float32),
        grid=(n_steps,),
        in_specs=in_specs,
        out_specs=pl.BlockSpec((1, bt, OUT_W), lambda s: (s, 0, 0)),
        scratch_shapes=[pltpu.VMEM((bt, SEQ_P, EMBED), jnp.float32)],
        compiler_params=pltpu.CompilerParams(dimension_semantics=("parallel",)),
    )(*operands)
    return out.reshape(b_pad, OUT_W)[:B, :EMBED]


# ----------------------------- deterministic init ----------------------------------
def init_params(key):
    def nrm(k, shape, scale=0.02):
        return scale * jax.random.normal(k, shape, dtype=jnp.float32)

    keys = iter(jax.random.split(key, 128))
    params = {
        "patch_w": nrm(next(keys), (PATCH_DIM, EMBED)),
        "patch_b": jnp.zeros((EMBED,), jnp.float32),
        "cls_token": nrm(next(keys), (EMBED,)),
        "pos_embed": nrm(next(keys), (SEQ, EMBED)),
        "norm_g": jnp.ones((EMBED,), jnp.float32),
        "norm_b": jnp.zeros((EMBED,), jnp.float32),
    }

    acc = {n: [] for n in
           ("ln1_g", "ln1_b", "wqkv", "bqkv", "wo", "bo",
            "ad_ln_g", "ad_ln_b", "ad_down_w", "ad_down_b", "ad_up_w", "ad_up_b",
            "ln2_g", "ln2_b", "w1", "b1", "w2", "b2")}
    for _ in range(DEPTH):
        acc["ln1_g"].append(jnp.ones((EMBED,), jnp.float32))
        acc["ln1_b"].append(jnp.zeros((EMBED,), jnp.float32))
        wq, wk, wv = (nrm(next(keys), (EMBED, EMBED)) for _ in range(3))
        acc["wqkv"].append(jnp.concatenate([wq, wk, wv], axis=1))     # (E, 3E) fused QKV
        acc["bqkv"].append(nrm(next(keys), (3 * EMBED,)))
        acc["wo"].append(nrm(next(keys), (EMBED, EMBED)))
        acc["bo"].append(jnp.zeros((EMBED,), jnp.float32))
        # Adapter ('lora' init: up_proj weight and both biases zeroed)
        acc["ad_ln_g"].append(jnp.ones((EMBED,), jnp.float32))
        acc["ad_ln_b"].append(jnp.zeros((EMBED,), jnp.float32))
        acc["ad_down_w"].append(nrm(next(keys), (EMBED, ADAPTER_BN)))
        acc["ad_down_b"].append(jnp.zeros((ADAPTER_BN,), jnp.float32))
        acc["ad_up_w"].append(jnp.zeros((ADAPTER_BN, EMBED), jnp.float32))
        acc["ad_up_b"].append(jnp.zeros((EMBED,), jnp.float32))
        acc["ln2_g"].append(jnp.ones((EMBED,), jnp.float32))
        acc["ln2_b"].append(jnp.zeros((EMBED,), jnp.float32))
        acc["w1"].append(nrm(next(keys), (EMBED, MLP_HID)))
        acc["b1"].append(jnp.zeros((MLP_HID,), jnp.float32))
        acc["w2"].append(nrm(next(keys), (MLP_HID, EMBED)))
        acc["b2"].append(jnp.zeros((EMBED,), jnp.float32))

    for n, vals in acc.items():
        params[n] = jnp.stack(vals, axis=0)   # leading depth axis
    return params


# ------------------------------ pure-JAX reference ----------------------------------
def vit_reference(x, params):
    """Pure-JAX reference of the same forward (exact softmax division) for validation."""
    B = x.shape[0]
    Hp, Wp = IMG // PATCH, IMG // PATCH
    p = x.reshape(B, IN_CHANS, Hp, PATCH, Wp, PATCH).transpose(0, 2, 4, 1, 3, 5)
    p = p.reshape(B, NUM_PATCHES, PATCH_DIM)
    tok = p @ params["patch_w"] + params["patch_b"]
    cls = jnp.broadcast_to(params["cls_token"], (B, 1, EMBED))
    xx = jnp.concatenate([cls, tok], axis=1) + params["pos_embed"][None]

    def ln(v, g, b, eps):
        mu = v.mean(-1, keepdims=True)
        c = v - mu
        return c * jax.lax.rsqrt((c * c).mean(-1, keepdims=True) + eps) * g + b

    for d in range(DEPTH):
        h = ln(xx, params["ln1_g"][d], params["ln1_b"][d], 1e-6)
        qkv = h @ params["wqkv"][d] + params["bqkv"][d]
        q, k, v = jnp.split(qkv, 3, axis=-1)
        sh = lambda t: t.reshape(B, SEQ, HEADS, HEAD_DIM).transpose(0, 2, 1, 3)
        q, k, v = sh(q), sh(k), sh(v)
        s = jnp.einsum("bhqd,bhkd->bhqk", q, k) * ATTN_SCALE
        pr = jax.nn.softmax(s, axis=-1)
        o = jnp.einsum("bhqk,bhkd->bhqd", pr, v)
        o = o.transpose(0, 2, 1, 3).reshape(B, SEQ, EMBED)
        xx = xx + o @ params["wo"][d] + params["bo"][d]

        a = ln(xx, params["ad_ln_g"][d], params["ad_ln_b"][d], 1e-5)
        a = jnp.maximum(a @ params["ad_down_w"][d] + params["ad_down_b"][d], 0.0)
        adapt = a @ params["ad_up_w"][d] + params["ad_up_b"][d]

        h2 = ln(xx, params["ln2_g"][d], params["ln2_b"][d], 1e-6)
        h2 = _gelu(h2 @ params["w1"][d] + params["b1"][d])
        mlp = h2 @ params["w2"][d] + params["b2"][d]
        xx = xx + mlp + adapt
    return ln(xx[:, 0], params["norm_g"], params["norm_b"], 1e-6)


# ------------------------------------- main -----------------------------------------
if __name__ == "__main__":
    x = jax.random.normal(jax.random.PRNGKey(0), (2, IN_CHANS, IMG, IMG),
                          dtype=jnp.float32)
    params = init_params(jax.random.PRNGKey(1))

    out = jax.jit(vit_forward)(x, params)
    out = jax.block_until_ready(out)

    assert out.shape == (2, EMBED), out.shape
    assert bool(jnp.all(jnp.isfinite(out)))

    ref = vit_reference(x, params)
    err = float(jnp.max(jnp.abs(out - ref)))
    assert err < 5e-2, f"kernel/reference mismatch: max abs err {err}"

    print("KERNEL_OK")
</pallas_src>

<mosaic_0001>
module attributes {stable_mosaic.version = 11 : i64} {
  func.func @_vit_fused_kernel(%arg0: i32, %arg1: memref<8x256xf32, #tpu.memory_space<vmem>>, %arg2: memref<8x32xf32, #tpu.memory_space<vmem>>, %arg3: memref<256x32xf32, #tpu.memory_space<vmem>>, %arg4: memref<2x32x96xf32, #tpu.memory_space<vmem>>, %arg5: memref<2x32x32xf32, #tpu.memory_space<vmem>>, %arg6: memref<2x32x8xf32, #tpu.memory_space<vmem>>, %arg7: memref<2x8x32xf32, #tpu.memory_space<vmem>>, %arg8: memref<2x32x128xf32, #tpu.memory_space<vmem>>, %arg9: memref<2x128x32xf32, #tpu.memory_space<vmem>>, %arg10: memref<2x16x128xf32, #tpu.memory_space<vmem>>, %arg11: memref<8x128xf32, #tpu.memory_space<vmem>>, %arg12: memref<1x1x128xf32, #tpu.memory_space<vmem>>, %arg13: memref<1x8x32xf32, #tpu.memory_space<vmem>>) attributes {dimension_semantics = [#tpu.dimension_semantics<parallel>], iteration_bounds = array<i64: 2>, scalar_prefetch = 0 : i64, scratch_operands = 1 : i64, tpu.core_type = #tpu.core_type<tc>, window_params = [{transform_indices = @transform_0, window_bounds = array<i64: 8, 256>}, {pipeline_mode = #tpu.pipeline_mode<synchronous>, transform_indices = @transform_1, window_bounds = array<i64: 8, 32>}, {pipeline_mode = #tpu.pipeline_mode<synchronous>, transform_indices = @transform_2, window_bounds = array<i64: 256, 32>}, {pipeline_mode = #tpu.pipeline_mode<synchronous>, transform_indices = @transform_3, window_bounds = array<i64: 2, 32, 96>}, {pipeline_mode = #tpu.pipeline_mode<synchronous>, transform_indices = @transform_4, window_bounds = array<i64: 2, 32, 32>}, {pipeline_mode = #tpu.pipeline_mode<synchronous>, transform_indices = @transform_5, window_bounds = array<i64: 2, 32, 8>}, {pipeline_mode = #tpu.pipeline_mode<synchronous>, transform_indices = @transform_6, window_bounds = array<i64: 2, 8, 32>}, {pipeline_mode = #tpu.pipeline_mode<synchronous>, transform_indices = @transform_7, window_bounds = array<i64: 2, 32, 128>}, {pipeline_mode = #tpu.pipeline_mode<synchronous>, transform_indices = @transform_8, window_bounds = array<i64: 2, 128, 32>}, {pipeline_mode = #tpu.pipeline_mode<synchronous>, transform_indices = @transform_9, window_bounds = array<i64: 2, 16, 128>}, {pipeline_mode = #tpu.pipeline_mode<synchronous>, transform_indices = @transform_10, window_bounds = array<i64: 8, 128>}, {transform_indices = @transform_11, window_bounds = array<i64: 1, 1, 128>}]} {
    %c0 = arith.constant 0 : index
    %c0_0 = arith.constant 0 : index
    %0 = vector.load %arg1[%c0, %c0_0] : memref<8x256xf32, #tpu.memory_space<vmem>>, vector<8x256xf32>
    %c0_1 = arith.constant 0 : index
    %c0_2 = arith.constant 0 : index
    %1 = vector.load %arg3[%c0_1, %c0_2] : memref<256x32xf32, #tpu.memory_space<vmem>>, vector<256x32xf32>
    %cst = arith.constant dense<0.000000e+00> : vector<8x32xf32>
    %2 = tpu.matmul %0, %1, %cst {dimension_numbers = #tpu.dot_dimension_numbers<[1], [0], [0], [1], [0, 0, 1, 1], [], []>} : vector<8x256xf32>, vector<256x32xf32>, vector<8x32xf32> -> vector<8x32xf32>
    %c0_3 = arith.constant 0 : index
    %c0_4 = arith.constant 0 : index
    %3 = vector.load %arg2[%c0_3, %c0_4] : memref<8x32xf32, #tpu.memory_space<vmem>>, vector<8x32xf32>
    %4 = arith.addf %2, %3 : vector<8x32xf32>
    %5 = tpu.iota {dimensions = array<i32: 1>} : vector<1x8xi32>
    %c5_i32 = arith.constant 5 : i32
    %6 = vector.broadcast %c5_i32 : i32 to vector<1x8xi32>
    %7 = arith.cmpi slt, %5, %6 : vector<1x8xi32>
    %cst_5 = arith.constant 0.000000e+00 : f32
    %cst_6 = arith.constant -1.000000e+30 : f32
    %8 = vector.broadcast %cst_5 : f32 to vector<1x8xf32>
    %9 = vector.broadcast %cst_6 : f32 to vector<1x8xf32>
    %10 = arith.select %7, %8, %9 : vector<1x8xi1>, vector<1x8xf32>
    %c0_7 = arith.constant 0 : index
    %c0_8 = arith.constant 0 : index
    %c0_9 = arith.constant 0 : index
    %11 = vector.load %arg10[%c0_7, %c0_8, %c0_9] : memref<2x16x128xf32, #tpu.memory_space<vmem>>, vector<1x16x128xf32>
    %12 = vector.shape_cast %11 : vector<1x16x128xf32> to vector<16x128xf32>
    %13 = vector.extract_strided_slice %12 {offsets = [0, 0], sizes = [1, 32], strides = [1, 1]} : vector<16x128xf32> to vector<1x32xf32>
    %14 = vector.extract_strided_slice %12 {offsets = [1, 0], sizes = [1, 32], strides = [1, 1]} : vector<16x128xf32> to vector<1x32xf32>
    %15 = vector.extract_strided_slice %12 {offsets = [2, 0], sizes = [1, 96], strides = [1, 1]} : vector<16x128xf32> to vector<1x96xf32>
    %16 = vector.extract_strided_slice %12 {offsets = [3, 0], sizes = [1, 32], strides = [1, 1]} : vector<16x128xf32> to vector<1x32xf32>
    %17 = vector.extract_strided_slice %12 {offsets = [4, 0], sizes = [1, 32], strides = [1, 1]} : vector<16x128xf32> to vector<1x32xf32>
    %18 = vector.extract_strided_slice %12 {offsets = [5, 0], sizes = [1, 32], strides = [1, 1]} : vector<16x128xf32> to vector<1x32xf32>
    %19 = vector.extract_strided_slice %12 {offsets = [6, 0], sizes = [1, 8], strides = [1, 1]} : vector<16x128xf32> to vector<1x8xf32>
    %20 = vector.extract_strided_slice %12 {offsets = [7, 0], sizes = [1, 32], strides = [1, 1]} : vector<16x128xf32> to vector<1x32xf32>
    %21 = vector.extract_strided_slice %12 {offsets = [8, 0], sizes = [1, 32], strides = [1, 1]} : vector<16x128xf32> to vector<1x32xf32>
    %22 = vector.extract_strided_slice %12 {offsets = [9, 0], sizes = [1, 32], strides = [1, 1]} : vector<16x128xf32> to vector<1x32xf32>
    %23 = vector.extract_strided_slice %12 {offsets = [10, 0], sizes = [1, 128], strides = [1, 1]} : vector<16x128xf32> to vector<1x128xf32>
    %24 = vector.extract_strided_slice %12 {offsets = [11, 0], sizes = [1, 32], strides = [1, 1]} : vector<16x128xf32> to vector<1x32xf32>
    %cst_10 = arith.constant dense<0.000000e+00> : vector<8xf32>
    %25 = vector.multi_reduction <add>, %4, %cst_10 [1] : vector<8x32xf32> to vector<8xf32>
    %26 = vector.shape_cast %25 : vector<8xf32> to vector<8x1xf32>
    %cst_11 = arith.constant 3.200000e+01 : f32
    %27 = vector.broadcast %cst_11 : f32 to vector<8x1xf32>
    %28 = arith.divf %26, %27 : vector<8x1xf32>
    %29 = vector.broadcast %28 : vector<8x1xf32> to vector<8x32xf32>
    %30 = arith.subf %4, %29 : vector<8x32xf32>
    %31 = arith.mulf %30, %30 : vector<8x32xf32>
    %cst_12 = arith.constant dense<0.000000e+00> : vector<8xf32>
    %32 = vector.multi_reduction <add>, %31, %cst_12 [1] : vector<8x32xf32> to vector<8xf32>
    %33 = vector.shape_cast %32 : vector<8xf32> to vector<8x1xf32>
    %cst_13 = arith.constant 3.200000e+01 : f32
    %34 = vector.broadcast %cst_13 : f32 to vector<8x1xf32>
    %35 = arith.divf %33, %34 : vector<8x1xf32>
    %cst_14 = arith.constant 9.99999997E-7 : f32
    %36 = vector.broadcast %cst_14 : f32 to vector<8x1xf32>
    %37 = arith.addf %35, %36 : vector<8x1xf32>
    %38 = math.rsqrt %37 : vector<8x1xf32>
    %39 = vector.broadcast %38 : vector<8x1xf32> to vector<8x32xf32>
    %40 = arith.mulf %30, %39 : vector<8x32xf32>
    %41 = vector.broadcast %13 : vector<1x32xf32> to vector<8x32xf32>
    %42 = arith.mulf %40, %41 : vector<8x32xf32>
    %43 = vector.broadcast %14 : vector<1x32xf32> to vector<8x32xf32>
    %44 = arith.addf %42, %43 : vector<8x32xf32>
    %c0_15 = arith.constant 0 : index
    %c0_16 = arith.constant 0 : index
    %c0_17 = arith.constant 0 : index
    %45 = vector.load %arg4[%c0_15, %c0_16, %c0_17] : memref<2x32x96xf32, #tpu.memory_space<vmem>>, vector<1x32x96xf32>
    %46 = vector.shape_cast %45 : vector<1x32x96xf32> to vector<32x96xf32>
    %cst_18 = arith.constant dense<0.000000e+00> : vector<8x96xf32>
    %47 = tpu.matmul %44, %46, %cst_18 {dimension_numbers = #tpu.dot_dimension_numbers<[1], [0], [0], [1], [0, 0, 1, 1], [], []>} : vector<8x32xf32>, vector<32x96xf32>, vector<8x96xf32> -> vector<8x96xf32>
    %48 = vector.broadcast %15 : vector<1x96xf32> to vector<8x96xf32>
    %49 = arith.addf %47, %48 : vector<8x96xf32>
    %50 = vector.shape_cast %49 : vector<8x96xf32> to vector<1x8x96xf32>
    %51 = vector.extract_strided_slice %50 {offsets = [0, 0, 0], sizes = [1, 8, 8], strides = [1, 1, 1]} : vector<1x8x96xf32> to vector<1x8x8xf32>
    %52 = vector.extract_strided_slice %50 {offsets = [0, 0, 32], sizes = [1, 8, 8], strides = [1, 1, 1]} : vector<1x8x96xf32> to vector<1x8x8xf32>
    %53 = vector.extract_strided_slice %50 {offsets = [0, 0, 64], sizes = [1, 8, 8], strides = [1, 1, 1]} : vector<1x8x96xf32> to vector<1x8x8xf32>
    "tpu.trace_start"() <{level = 10 : i32, message = "bqd,bkd->bqk"}> : () -> ()
    %cst_19 = arith.constant dense<0.000000e+00> : vector<1x8x8xf32>
    %54 = tpu.matmul %51, %52, %cst_19 {dimension_numbers = #tpu.dot_dimension_numbers<[2], [2], [1], [1], [0, 0, 0, 1, 1, 1], [0], [0]>} : vector<1x8x8xf32>, vector<1x8x8xf32>, vector<1x8x8xf32> -> vector<1x8x8xf32>
    "tpu.trace_stop"() : () -> ()
    %cst_20 = arith.constant 0.353553385 : f32
    %55 = vector.broadcast %cst_20 : f32 to vector<1x8x8xf32>
    %56 = arith.mulf %54, %55 : vector<1x8x8xf32>
    %57 = vector.shape_cast %10 : vector<1x8xf32> to vector<1x1x8xf32>
    %58 = vector.broadcast %57 : vector<1x1x8xf32> to vector<1x8x8xf32>
    %59 = arith.addf %56, %58 : vector<1x8x8xf32>
    %cst_21 = arith.constant dense<0xFF800000> : vector<1x8xf32>
    %60 = vector.multi_reduction <maximumf>, %59, %cst_21 [2] : vector<1x8x8xf32> to vector<1x8xf32>
    %61 = vector.shape_cast %60 : vector<1x8xf32> to vector<1x8x1xf32>
    %62 = vector.broadcast %61 : vector<1x8x1xf32> to vector<1x8x8xf32>
    %63 = arith.subf %59, %62 : vector<1x8x8xf32>
    %64 = math.exp %63 : vector<1x8x8xf32>
    %cst_22 = arith.constant dense<0.000000e+00> : vector<1x8xf32>
    %65 = vector.multi_reduction <add>, %64, %cst_22 [2] : vector<1x8x8xf32> to vector<1x8xf32>
    %66 = vector.shape_cast %65 : vector<1x8xf32> to vector<1x8x1xf32>
    %67 = tpu.reciprocal %66 {approx = true} : vector<1x8x1xf32> -> vector<1x8x1xf32>
    %68 = vector.broadcast %67 : vector<1x8x1xf32> to vector<1x8x8xf32>
    %69 = arith.mulf %64, %68 : vector<1x8x8xf32>
    "tpu.trace_start"() <{level = 10 : i32, message = "bqk,bkd->bqd"}> : () -> ()
    %cst_23 = arith.constant dense<0.000000e+00> : vector<1x8x8xf32>
    %70 = tpu.matmul %69, %53, %cst_23 {dimension_numbers = #tpu.dot_dimension_numbers<[2], [1], [1], [2], [0, 0, 0, 1, 1, 2], [0], [0]>} : vector<1x8x8xf32>, vector<1x8x8xf32>, vector<1x8x8xf32> -> vector<1x8x8xf32>
    "tpu.trace_stop"() : () -> ()
    %c0_24 = arith.constant 0 : index
    %c0_25 = arith.constant 0 : index
    %c0_26 = arith.constant 0 : index
    %71 = vector.load %arg13[%c0_24, %c0_25, %c0_26] : memref<1x8x32xf32, #tpu.memory_space<vmem>>, vector<1x8x8xf32>
    tpu.vector_store %arg13[%c0_24, %c0_25, %c0_26], %70 {strides = array<i32>} : memref<1x8x32xf32, #tpu.memory_space<vmem>>, vector<1x8x8xf32>,
    %72 = vector.extract_strided_slice %50 {offsets = [0, 0, 8], sizes = [1, 8, 8], strides = [1, 1, 1]} : vector<1x8x96xf32> to vector<1x8x8xf32>
    %73 = vector.extract_strided_slice %50 {offsets = [0, 0, 40], sizes = [1, 8, 8], strides = [1, 1, 1]} : vector<1x8x96xf32> to vector<1x8x8xf32>
    %74 = vector.extract_strided_slice %50 {offsets = [0, 0, 72], sizes = [1, 8, 8], strides = [1, 1, 1]} : vector<1x8x96xf32> to vector<1x8x8xf32>
    "tpu.trace_start"() <{level = 10 : i32, message = "bqd,bkd->bqk"}> : () -> ()
    %cst_27 = arith.constant dense<0.000000e+00> : vector<1x8x8xf32>
    %75 = tpu.matmul %72, %73, %cst_27 {dimension_numbers = #tpu.dot_dimension_numbers<[2], [2], [1], [1], [0, 0, 0, 1, 1, 1], [0], [0]>} : vector<1x8x8xf32>, vector<1x8x8xf32>, vector<1x8x8xf32> -> vector<1x8x8xf32>
    "tpu.trace_stop"() : () -> ()
    %cst_28 = arith.constant 0.353553385 : f32
    %76 = vector.broadcast %cst_28 : f32 to vector<1x8x8xf32>
    %77 = arith.mulf %75, %76 : vector<1x8x8xf32>
    %78 = vector.shape_cast %10 : vector<1x8xf32> to vector<1x1x8xf32>
    %79 = vector.broadcast %78 : vector<1x1x8xf32> to vector<1x8x8xf32>
    %80 = arith.addf %77, %79 : vector<1x8x8xf32>
    %cst_29 = arith.constant dense<0xFF800000> : vector<1x8xf32>
    %81 = vector.multi_reduction <maximumf>, %80, %cst_29 [2] : vector<1x8x8xf32> to vector<1x8xf32>
    %82 = vector.shape_cast %81 : vector<1x8xf32> to vector<1x8x1xf32>
    %83 = vector.broadcast %82 : vector<1x8x1xf32> to vector<1x8x8xf32>
    %84 = arith.subf %80, %83 : vector<1x8x8xf32>
    %85 = math.exp %84 : vector<1x8x8xf32>
    %cst_30 = arith.constant dense<0.000000e+00> : vector<1x8xf32>
    %86 = vector.multi_reduction <add>, %85, %cst_30 [2] : vector<1x8x8xf32> to vector<1x8xf32>
    %87 = vector.shape_cast %86 : vector<1x8xf32> to vector<1x8x1xf32>
    %88 = tpu.reciprocal %87 {approx = true} : vector<1x8x1xf32> -> vector<1x8x1xf32>
    %89 = vector.broadcast %88 : vector<1x8x1xf32> to vector<1x8x8xf32>
    %90 = arith.mulf %85, %89 : vector<1x8x8xf32>
    "tpu.trace_start"() <{level = 10 : i32, message = "bqk,bkd->bqd"}> : () -> ()
    %cst_31 = arith.constant dense<0.000000e+00> : vector<1x8x8xf32>
    %91 = tpu.matmul %90, %74, %cst_31 {dimension_numbers = #tpu.dot_dimension_numbers<[2], [1], [1], [2], [0, 0, 0, 1, 1, 2], [0], [0]>} : vector<1x8x8xf32>, vector<1x8x8xf32>, vector<1x8x8xf32> -> vector<1x8x8xf32>
    "tpu.trace_stop"() : () -> ()
    %c0_32 = arith.constant 0 : index
    %c0_33 = arith.constant 0 : index
    %c8 = arith.constant 8 : index
    %92 = vector.load %arg13[%c0_32, %c0_33, %c8] : memref<1x8x32xf32, #tpu.memory_space<vmem>>, vector<1x8x8xf32>
    tpu.vector_store %arg13[%c0_32, %c0_33, %c8], %91 {strides = array<i32>} : memref<1x8x32xf32, #tpu.memory_space<vmem>>, vector<1x8x8xf32>,
    %93 = vector.extract_strided_slice %50 {offsets = [0, 0, 16], sizes = [1, 8, 8], strides = [1, 1, 1]} : vector<1x8x96xf32> to vector<1x8x8xf32>
    %94 = vector.extract_strided_slice %50 {offsets = [0, 0, 48], sizes = [1, 8, 8], strides = [1, 1, 1]} : vector<1x8x96xf32> to vector<1x8x8xf32>
    %95 = vector.extract_strided_slice %50 {offsets = [0, 0, 80], sizes = [1, 8, 8], strides = [1, 1, 1]} : vector<1x8x96xf32> to vector<1x8x8xf32>
    "tpu.trace_start"() <{level = 10 : i32, message = "bqd,bkd->bqk"}> : () -> ()
    %cst_34 = arith.constant dense<0.000000e+00> : vector<1x8x8xf32>
    %96 = tpu.matmul %93, %94, %cst_34 {dimension_numbers = #tpu.dot_dimension_numbers<[2], [2], [1], [1], [0, 0, 0, 1, 1, 1], [0], [0]>} : vector<1x8x8xf32>, vector<1x8x8xf32>, vector<1x8x8xf32> -> vector<1x8x8xf32>
    "tpu.trace_stop"() : () -> ()
    %cst_35 = arith.constant 0.353553385 : f32
    %97 = vector.broadcast %cst_35 : f32 to vector<1x8x8xf32>
    %98 = arith.mulf %96, %97 : vector<1x8x8xf32>
    %99 = vector.shape_cast %10 : vector<1x8xf32> to vector<1x1x8xf32>
    %100 = vector.broadcast %99 : vector<1x1x8xf32> to vector<1x8x8xf32>
    %101 = arith.addf %98, %100 : vector<1x8x8xf32>
    %cst_36 = arith.constant dense<0xFF800000> : vector<1x8xf32>
    %102 = vector.multi_reduction <maximumf>, %101, %cst_36 [2] : vector<1x8x8xf32> to vector<1x8xf32>
    %103 = vector.shape_cast %102 : vector<1x8xf32> to vector<1x8x1xf32>
    %104 = vector.broadcast %103 : vector<1x8x1xf32> to vector<1x8x8xf32>
    %105 = arith.subf %101, %104 : vector<1x8x8xf32>
    %106 = math.exp %105 : vector<1x8x8xf32>
    %cst_37 = arith.constant dense<0.000000e+00> : vector<1x8xf32>
    %107 = vector.multi_reduction <add>, %106, %cst_37 [2] : vector<1x8x8xf32> to vector<1x8xf32>
    %108 = vector.shape_cast %107 : vector<1x8xf32> to vector<1x8x1xf32>
    %109 = tpu.reciprocal %108 {approx = true} : vector<1x8x1xf32> -> vector<1x8x1xf32>
    %110 = vector.broadcast %109 : vector<1x8x1xf32> to vector<1x8x8xf32>
    %111 = arith.mulf %106, %110 : vector<1x8x8xf32>
    "tpu.trace_start"() <{level = 10 : i32, message = "bqk,bkd->bqd"}> : () -> ()
    %cst_38 = arith.constant dense<0.000000e+00> : vector<1x8x8xf32>
    %112 = tpu.matmul %111, %95, %cst_38 {dimension_numbers = #tpu.dot_dimension_numbers<[2], [1], [1], [2], [0, 0, 0, 1, 1, 2], [0], [0]>} : vector<1x8x8xf32>, vector<1x8x8xf32>, vector<1x8x8xf32> -> vector<1x8x8xf32>
    "tpu.trace_stop"() : () -> ()
    %c0_39 = arith.constant 0 : index
    %c0_40 = arith.constant 0 : index
    %c16 = arith.constant 16 : index
    %113 = vector.load %arg13[%c0_39, %c0_40, %c16] : memref<1x8x32xf32, #tpu.memory_space<vmem>>, vector<1x8x8xf32>
    tpu.vector_store %arg13[%c0_39, %c0_40, %c16], %112 {strides = array<i32>} : memref<1x8x32xf32, #tpu.memory_space<vmem>>, vector<1x8x8xf32>,
    %114 = vector.extract_strided_slice %50 {offsets = [0, 0, 24], sizes = [1, 8, 8], strides = [1, 1, 1]} : vector<1x8x96xf32> to vector<1x8x8xf32>
    %115 = vector.extract_strided_slice %50 {offsets = [0, 0, 56], sizes = [1, 8, 8], strides = [1, 1, 1]} : vector<1x8x96xf32> to vector<1x8x8xf32>
    %116 = vector.extract_strided_slice %50 {offsets = [0, 0, 88], sizes = [1, 8, 8], strides = [1, 1, 1]} : vector<1x8x96xf32> to vector<1x8x8xf32>
    "tpu.trace_start"() <{level = 10 : i32, message = "bqd,bkd->bqk"}> : () -> ()
    %cst_41 = arith.constant dense<0.000000e+00> : vector<1x8x8xf32>
    %117 = tpu.matmul %114, %115, %cst_41 {dimension_numbers = #tpu.dot_dimension_numbers<[2], [2], [1], [1], [0, 0, 0, 1, 1, 1], [0], [0]>} : vector<1x8x8xf32>, vector<1x8x8xf32>, vector<1x8x8xf32> -> vector<1x8x8xf32>
    "tpu.trace_stop"() : () -> ()
    %cst_42 = arith.constant 0.353553385 : f32
    %118 = vector.broadcast %cst_42 : f32 to vector<1x8x8xf32>
    %119 = arith.mulf %117, %118 : vector<1x8x8xf32>
    %120 = vector.shape_cast %10 : vector<1x8xf32> to vector<1x1x8xf32>
    %121 = vector.broadcast %120 : vector<1x1x8xf32> to vector<1x8x8xf32>
    %122 = arith.addf %119, %121 : vector<1x8x8xf32>
    %cst_43 = arith.constant dense<0xFF800000> : vector<1x8xf32>
    %123 = vector.multi_reduction <maximumf>, %122, %cst_43 [2] : vector<1x8x8xf32> to vector<1x8xf32>
    %124 = vector.shape_cast %123 : vector<1x8xf32> to vector<1x8x1xf32>
    %125 = vector.broadcast %124 : vector<1x8x1xf32> to vector<1x8x8xf32>
    %126 = arith.subf %122, %125 : vector<1x8x8xf32>
    %127 = math.exp %126 : vector<1x8x8xf32>
    %cst_44 = arith.constant dense<0.000000e+00> : vector<1x8xf32>
    %128 = vector.multi_reduction <add>, %127, %cst_44 [2] : vector<1x8x8xf32> to vector<1x8xf32>
    %129 = vector.shape_cast %128 : vector<1x8xf32> to vector<1x8x1xf32>
    %130 = tpu.reciprocal %129 {approx = true} : vector<1x8x1xf32> -> vector<1x8x1xf32>
    %131 = vector.broadcast %130 : vector<1x8x1xf32> to vector<1x8x8xf32>
    %132 = arith.mulf %127, %131 : vector<1x8x8xf32>
    "tpu.trace_start"() <{level = 10 : i32, message = "bqk,bkd->bqd"}> : () -> ()
    %cst_45 = arith.constant dense<0.000000e+00> : vector<1x8x8xf32>
    %133 = tpu.matmul %132, %116, %cst_45 {dimension_numbers = #tpu.dot_dimension_numbers<[2], [1], [1], [2], [0, 0, 0, 1, 1, 2], [0], [0]>} : vector<1x8x8xf32>, vector<1x8x8xf32>, vector<1x8x8xf32> -> vector<1x8x8xf32>
    "tpu.trace_stop"() : () -> ()
    %c0_46 = arith.constant 0 : index
    %c0_47 = arith.constant 0 : index
    %c24 = arith.constant 24 : index
    %134 = vector.load %arg13[%c0_46, %c0_47, %c24] : memref<1x8x32xf32, #tpu.memory_space<vmem>>, vector<1x8x8xf32>
    tpu.vector_store %arg13[%c0_46, %c0_47, %c24], %133 {strides = array<i32>} : memref<1x8x32xf32, #tpu.memory_space<vmem>>, vector<1x8x8xf32>,
    %c0_48 = arith.constant 0 : index
    %c0_49 = arith.constant 0 : index
    %c0_50 = arith.constant 0 : index
    %135 = vector.load %arg13[%c0_48, %c0_49, %c0_50] : memref<1x8x32xf32, #tpu.memory_space<vmem>>, vector<1x8x32xf32>
    %136 = vector.shape_cast %135 : vector<1x8x32xf32> to vector<8x32xf32>
    %c0_51 = arith.constant 0 : index
    %c0_52 = arith.constant 0 : index
    %c0_53 = arith.constant 0 : index
    %137 = vector.load %arg5[%c0_51, %c0_52, %c0_53] : memref<2x32x32xf32, #tpu.memory_space<vmem>>, vector<1x32x32xf32>
    %138 = vector.shape_cast %137 : vector<1x32x32xf32> to vector<32x32xf32>
    %cst_54 = arith.constant dense<0.000000e+00> : vector<8x32xf32>
    %139 = tpu.matmul %136, %138, %cst_54 {dimension_numbers = #tpu.dot_dimension_numbers<[1], [0], [0], [1], [0, 0, 1, 1], [], []>} : vector<8x32xf32>, vector<32x32xf32>, vector<8x32xf32> -> vector<8x32xf32>
    %140 = arith.addf %4, %139 : vector<8x32xf32>
    %141 = vector.broadcast %16 : vector<1x32xf32> to vector<8x32xf32>
    %142 = arith.addf %140, %141 : vector<8x32xf32>
    %cst_55 = arith.constant dense<0.000000e+00> : vector<8xf32>
    %143 = vector.multi_reduction <add>, %142, %cst_55 [1] : vector<8x32xf32> to vector<8xf32>
    %144 = vector.shape_cast %143 : vector<8xf32> to vector<8x1xf32>
    %cst_56 = arith.constant 3.200000e+01 : f32
    %145 = vector.broadcast %cst_56 : f32 to vector<8x1xf32>
    %146 = arith.divf %144, %145 : vector<8x1xf32>
    %147 = vector.broadcast %146 : vector<8x1xf32> to vector<8x32xf32>
    %148 = arith.subf %142, %147 : vector<8x32xf32>
    %149 = arith.mulf %148, %148 : vector<8x32xf32>
    %cst_57 = arith.constant dense<0.000000e+00> : vector<8xf32>
    %150 = vector.multi_reduction <add>, %149, %cst_57 [1] : vector<8x32xf32> to vector<8xf32>
    %151 = vector.shape_cast %150 : vector<8xf32> to vector<8x1xf32>
    %cst_58 = arith.constant 3.200000e+01 : f32
    %152 = vector.broadcast %cst_58 : f32 to vector<8x1xf32>
    %153 = arith.divf %151, %152 : vector<8x1xf32>
    %cst_59 = arith.constant 9.99999974E-6 : f32
    %154 = vector.broadcast %cst_59 : f32 to vector<8x1xf32>
    %155 = arith.addf %153, %154 : vector<8x1xf32>
    %156 = math.rsqrt %155 : vector<8x1xf32>
    %157 = vector.broadcast %156 : vector<8x1xf32> to vector<8x32xf32>
    %158 = arith.mulf %148, %157 : vector<8x32xf32>
    %159 = vector.broadcast %17 : vector<1x32xf32> to vector<8x32xf32>
    %160 = arith.mulf %158, %159 : vector<8x32xf32>
    %161 = vector.broadcast %18 : vector<1x32xf32> to vector<8x32xf32>
    %162 = arith.addf %160, %161 : vector<8x32xf32>
    %c0_60 = arith.constant 0 : index
    %c0_61 = arith.constant 0 : index
    %c0_62 = arith.constant 0 : index
    %163 = vector.load %arg6[%c0_60, %c0_61, %c0_62] : memref<2x32x8xf32, #tpu.memory_space<vmem>>, vector<1x32x8xf32>
    %164 = vector.shape_cast %163 : vector<1x32x8xf32> to vector<32x8xf32>
    %cst_63 = arith.constant dense<0.000000e+00> : vector<8x8xf32>
    %165 = tpu.matmul %162, %164, %cst_63 {dimension_numbers = #tpu.dot_dimension_numbers<[1], [0], [0], [1], [0, 0, 1, 1], [], []>} : vector<8x32xf32>, vector<32x8xf32>, vector<8x8xf32> -> vector<8x8xf32>
    %166 = vector.broadcast %19 : vector<1x8xf32> to vector<8x8xf32>
    %167 = arith.addf %165, %166 : vector<8x8xf32>
    %cst_64 = arith.constant 0.000000e+00 : f32
    %168 = vector.broadcast %cst_64 : f32 to vector<8x8xf32>
    %169 = arith.maximumf %167, %168 : vector<8x8xf32>
    %c0_65 = arith.constant 0 : index
    %c0_66 = arith.constant 0 : index
    %c0_67 = arith.constant 0 : index
    %170 = vector.load %arg7[%c0_65, %c0_66, %c0_67] : memref<2x8x32xf32, #tpu.memory_space<vmem>>, vector<1x8x32xf32>
    %171 = vector.shape_cast %170 : vector<1x8x32xf32> to vector<8x32xf32>
    %cst_68 = arith.constant dense<0.000000e+00> : vector<8x32xf32>
    %172 = tpu.matmul %169, %171, %cst_68 {dimension_numbers = #tpu.dot_dimension_numbers<[1], [0], [0], [1], [0, 0, 1, 1], [], []>} : vector<8x8xf32>, vector<8x32xf32>, vector<8x32xf32> -> vector<8x32xf32>
    %173 = vector.broadcast %20 : vector<1x32xf32> to vector<8x32xf32>
    %174 = arith.addf %172, %173 : vector<8x32xf32>
    %cst_69 = arith.constant dense<0.000000e+00> : vector<8xf32>
    %175 = vector.multi_reduction <add>, %142, %cst_69 [1] : vector<8x32xf32> to vector<8xf32>
    %176 = vector.shape_cast %175 : vector<8xf32> to vector<8x1xf32>
    %cst_70 = arith.constant 3.200000e+01 : f32
    %177 = vector.broadcast %cst_70 : f32 to vector<8x1xf32>
    %178 = arith.divf %176, %177 : vector<8x1xf32>
    %179 = vector.broadcast %178 : vector<8x1xf32> to vector<8x32xf32>
    %180 = arith.subf %142, %179 : vector<8x32xf32>
    %181 = arith.mulf %180, %180 : vector<8x32xf32>
    %cst_71 = arith.constant dense<0.000000e+00> : vector<8xf32>
    %182 = vector.multi_reduction <add>, %181, %cst_71 [1] : vector<8x32xf32> to vector<8xf32>
    %183 = vector.shape_cast %182 : vector<8xf32> to vector<8x1xf32>
    %cst_72 = arith.constant 3.200000e+01 : f32
    %184 = vector.broadcast %cst_72 : f32 to vector<8x1xf32>
    %185 = arith.divf %183, %184 : vector<8x1xf32>
    %cst_73 = arith.constant 9.99999997E-7 : f32
    %186 = vector.broadcast %cst_73 : f32 to vector<8x1xf32>
    %187 = arith.addf %185, %186 : vector<8x1xf32>
    %188 = math.rsqrt %187 : vector<8x1xf32>
    %189 = vector.broadcast %188 : vector<8x1xf32> to vector<8x32xf32>
    %190 = arith.mulf %180, %189 : vector<8x32xf32>
    %191 = vector.broadcast %21 : vector<1x32xf32> to vector<8x32xf32>
    %192 = arith.mulf %190, %191 : vector<8x32xf32>
    %193 = vector.broadcast %22 : vector<1x32xf32> to vector<8x32xf32>
    %194 = arith.addf %192, %193 : vector<8x32xf32>
    %c0_74 = arith.constant 0 : index
    %c0_75 = arith.constant 0 : index
    %c0_76 = arith.constant 0 : index
    %195 = vector.load %arg8[%c0_74, %c0_75, %c0_76] : memref<2x32x128xf32, #tpu.memory_space<vmem>>, vector<1x32x128xf32>
    %196 = vector.shape_cast %195 : vector<1x32x128xf32> to vector<32x128xf32>
    %cst_77 = arith.constant dense<0.000000e+00> : vector<8x128xf32>
    %197 = tpu.matmul %194, %196, %cst_77 {dimension_numbers = #tpu.dot_dimension_numbers<[1], [0], [0], [1], [0, 0, 1, 1], [], []>} : vector<8x32xf32>, vector<32x128xf32>, vector<8x128xf32> -> vector<8x128xf32>
    %198 = vector.broadcast %23 : vector<1x128xf32> to vector<8x128xf32>
    %199 = arith.addf %197, %198 : vector<8x128xf32>
    %cst_78 = arith.constant 5.000000e-01 : f32
    %200 = vector.broadcast %cst_78 : f32 to vector<8x128xf32>
    %201 = arith.mulf %200, %199 : vector<8x128xf32>
    %cst_79 = arith.constant 4.471500e-02 : f32
    %202 = vector.broadcast %cst_79 : f32 to vector<8x128xf32>
    %203 = arith.mulf %202, %199 : vector<8x128xf32>
    %204 = arith.mulf %203, %199 : vector<8x128xf32>
    %205 = arith.mulf %204, %199 : vector<8x128xf32>
    %206 = arith.addf %199, %205 : vector<8x128xf32>
    %cst_80 = arith.constant 0.797884583 : f32
    %207 = vector.broadcast %cst_80 : f32 to vector<8x128xf32>
    %208 = arith.mulf %207, %206 : vector<8x128xf32>
    %209 = math.tanh %208 : vector<8x128xf32>
    %cst_81 = arith.constant 1.000000e+00 : f32
    %210 = vector.broadcast %cst_81 : f32 to vector<8x128xf32>
    %211 = arith.addf %210, %209 : vector<8x128xf32>
    %212 = arith.mulf %201, %211 : vector<8x128xf32>
    %c0_82 = arith.constant 0 : index
    %c0_83 = arith.constant 0 : index
    %c0_84 = arith.constant 0 : index
    %213 = vector.load %arg9[%c0_82, %c0_83, %c0_84] : memref<2x128x32xf32, #tpu.memory_space<vmem>>, vector<1x128x32xf32>
    %214 = vector.shape_cast %213 : vector<1x128x32xf32> to vector<128x32xf32>
    %cst_85 = arith.constant dense<0.000000e+00> : vector<8x32xf32>
    %215 = tpu.matmul %212, %214, %cst_85 {dimension_numbers = #tpu.dot_dimension_numbers<[1], [0], [0], [1], [0, 0, 1, 1], [], []>} : vector<8x128xf32>, vector<128x32xf32>, vector<8x32xf32> -> vector<8x32xf32>
    %216 = vector.broadcast %24 : vector<1x32xf32> to vector<8x32xf32>
    %217 = arith.addf %215, %216 : vector<8x32xf32>
    %218 = arith.addf %142, %217 : vector<8x32xf32>
    %219 = arith.addf %218, %174 : vector<8x32xf32>
    %c1 = arith.constant 1 : index
    %c0_86 = arith.constant 0 : index
    %c0_87 = arith.constant 0 : index
    %220 = vector.load %arg10[%c1, %c0_86, %c0_87] : memref<2x16x128xf32, #tpu.memory_space<vmem>>, vector<1x16x128xf32>
    %221 = vector.shape_cast %220 : vector<1x16x128xf32> to vector<16x128xf32>
    %222 = vector.extract_strided_slice %221 {offsets = [0, 0], sizes = [1, 32], strides = [1, 1]} : vector<16x128xf32> to vector<1x32xf32>
    %223 = vector.extract_strided_slice %221 {offsets = [1, 0], sizes = [1, 32], strides = [1, 1]} : vector<16x128xf32> to vector<1x32xf32>
    %224 = vector.extract_strided_slice %221 {offsets = [2, 0], sizes = [1, 96], strides = [1, 1]} : vector<16x128xf32> to vector<1x96xf32>
    %225 = vector.extract_strided_slice %221 {offsets = [3, 0], sizes = [1, 32], strides = [1, 1]} : vector<16x128xf32> to vector<1x32xf32>
    %226 = vector.extract_strided_slice %221 {offsets = [4, 0], sizes = [1, 32], strides = [1, 1]} : vector<16x128xf32> to vector<1x32xf32>
    %227 = vector.extract_strided_slice %221 {offsets = [5, 0], sizes = [1, 32], strides = [1, 1]} : vector<16x128xf32> to vector<1x32xf32>
    %228 = vector.extract_strided_slice %221 {offsets = [6, 0], sizes = [1, 8], strides = [1, 1]} : vector<16x128xf32> to vector<1x8xf32>
    %229 = vector.extract_strided_slice %221 {offsets = [7, 0], sizes = [1, 32], strides = [1, 1]} : vector<16x128xf32> to vector<1x32xf32>
    %230 = vector.extract_strided_slice %221 {offsets = [8, 0], sizes = [1, 32], strides = [1, 1]} : vector<16x128xf32> to vector<1x32xf32>
    %231 = vector.extract_strided_slice %221 {offsets = [9, 0], sizes = [1, 32], strides = [1, 1]} : vector<16x128xf32> to vector<1x32xf32>
    %232 = vector.extract_strided_slice %221 {offsets = [10, 0], sizes = [1, 128], strides = [1, 1]} : vector<16x128xf32> to vector<1x128xf32>
    %233 = vector.extract_strided_slice %221 {offsets = [11, 0], sizes = [1, 32], strides = [1, 1]} : vector<16x128xf32> to vector<1x32xf32>
    %cst_88 = arith.constant dense<0.000000e+00> : vector<8xf32>
    %234 = vector.multi_reduction <add>, %219, %cst_88 [1] : vector<8x32xf32> to vector<8xf32>
    %235 = vector.shape_cast %234 : vector<8xf32> to vector<8x1xf32>
    %cst_89 = arith.constant 3.200000e+01 : f32
    %236 = vector.broadcast %cst_89 : f32 to vector<8x1xf32>
    %237 = arith.divf %235, %236 : vector<8x1xf32>
    %238 = vector.broadcast %237 : vector<8x1xf32> to vector<8x32xf32>
    %239 = arith.subf %219, %238 : vector<8x32xf32>
    %240 = arith.mulf %239, %239 : vector<8x32xf32>
    %cst_90 = arith.constant dense<0.000000e+00> : vector<8xf32>
    %241 = vector.multi_reduction <add>, %240, %cst_90 [1] : vector<8x32xf32> to vector<8xf32>
    %242 = vector.shape_cast %241 : vector<8xf32> to vector<8x1xf32>
    %cst_91 = arith.constant 3.200000e+01 : f32
    %243 = vector.broadcast %cst_91 : f32 to vector<8x1xf32>
    %244 = arith.divf %242, %243 : vector<8x1xf32>
    %cst_92 = arith.constant 9.99999997E-7 : f32
    %245 = vector.broadcast %cst_92 : f32 to vector<8x1xf32>
    %246 = arith.addf %244, %245 : vector<8x1xf32>
    %247 = math.rsqrt %246 : vector<8x1xf32>
    %248 = vector.broadcast %247 : vector<8x1xf32> to vector<8x32xf32>
    %249 = arith.mulf %239, %248 : vector<8x32xf32>
    %250 = vector.broadcast %222 : vector<1x32xf32> to vector<8x32xf32>
    %251 = arith.mulf %249, %250 : vector<8x32xf32>
    %252 = vector.broadcast %223 : vector<1x32xf32> to vector<8x32xf32>
    %253 = arith.addf %251, %252 : vector<8x32xf32>
    %c1_93 = arith.constant 1 : index
    %c0_94 = arith.constant 0 : index
    %c0_95 = arith.constant 0 : index
    %254 = vector.load %arg4[%c1_93, %c0_94, %c0_95] : memref<2x32x96xf32, #tpu.memory_space<vmem>>, vector<1x32x96xf32>
    %255 = vector.shape_cast %254 : vector<1x32x96xf32> to vector<32x96xf32>
    %cst_96 = arith.constant dense<0.000000e+00> : vector<8x96xf32>
    %256 = tpu.matmul %253, %255, %cst_96 {dimension_numbers = #tpu.dot_dimension_numbers<[1], [0], [0], [1], [0, 0, 1, 1], [], []>} : vector<8x32xf32>, vector<32x96xf32>, vector<8x96xf32> -> vector<8x96xf32>
    %257 = vector.broadcast %224 : vector<1x96xf32> to vector<8x96xf32>
    %258 = arith.addf %256, %257 : vector<8x96xf32>
    %259 = vector.shape_cast %258 : vector<8x96xf32> to vector<1x8x96xf32>
    %260 = vector.extract_strided_slice %259 {offsets = [0, 0, 0], sizes = [1, 8, 8], strides = [1, 1, 1]} : vector<1x8x96xf32> to vector<1x8x8xf32>
    %261 = vector.extract_strided_slice %259 {offsets = [0, 0, 32], sizes = [1, 8, 8], strides = [1, 1, 1]} : vector<1x8x96xf32> to vector<1x8x8xf32>
    %262 = vector.extract_strided_slice %259 {offsets = [0, 0, 64], sizes = [1, 8, 8], strides = [1, 1, 1]} : vector<1x8x96xf32> to vector<1x8x8xf32>
    "tpu.trace_start"() <{level = 10 : i32, message = "bqd,bkd->bqk"}> : () -> ()
    %cst_97 = arith.constant dense<0.000000e+00> : vector<1x8x8xf32>
    %263 = tpu.matmul %260, %261, %cst_97 {dimension_numbers = #tpu.dot_dimension_numbers<[2], [2], [1], [1], [0, 0, 0, 1, 1, 1], [0], [0]>} : vector<1x8x8xf32>, vector<1x8x8xf32>, vector<1x8x8xf32> -> vector<1x8x8xf32>
    "tpu.trace_stop"() : () -> ()
    %cst_98 = arith.constant 0.353553385 : f32
    %264 = vector.broadcast %cst_98 : f32 to vector<1x8x8xf32>
    %265 = arith.mulf %263, %264 : vector<1x8x8xf32>
    %266 = vector.shape_cast %10 : vector<1x8xf32> to vector<1x1x8xf32>
    %267 = vector.broadcast %266 : vector<1x1x8xf32> to vector<1x8x8xf32>
    %268 = arith.addf %265, %267 : vector<1x8x8xf32>
    %cst_99 = arith.constant dense<0xFF800000> : vector<1x8xf32>
    %269 = vector.multi_reduction <maximumf>, %268, %cst_99 [2] : vector<1x8x8xf32> to vector<1x8xf32>
    %270 = vector.shape_cast %269 : vector<1x8xf32> to vector<1x8x1xf32>
    %271 = vector.broadcast %270 : vector<1x8x1xf32> to vector<1x8x8xf32>
    %272 = arith.subf %268, %271 : vector<1x8x8xf32>
    %273 = math.exp %272 : vector<1x8x8xf32>
    %cst_100 = arith.constant dense<0.000000e+00> : vector<1x8xf32>
    %274 = vector.multi_reduction <add>, %273, %cst_100 [2] : vector<1x8x8xf32> to vector<1x8xf32>
    %275 = vector.shape_cast %274 : vector<1x8xf32> to vector<1x8x1xf32>
    %276 = tpu.reciprocal %275 {approx = true} : vector<1x8x1xf32> -> vector<1x8x1xf32>
    %277 = vector.broadcast %276 : vector<1x8x1xf32> to vector<1x8x8xf32>
    %278 = arith.mulf %273, %277 : vector<1x8x8xf32>
    "tpu.trace_start"() <{level = 10 : i32, message = "bqk,bkd->bqd"}> : () -> ()
    %cst_101 = arith.constant dense<0.000000e+00> : vector<1x8x8xf32>
    %279 = tpu.matmul %278, %262, %cst_101 {dimension_numbers = #tpu.dot_dimension_numbers<[2], [1], [1], [2], [0, 0, 0, 1, 1, 2], [0], [0]>} : vector<1x8x8xf32>, vector<1x8x8xf32>, vector<1x8x8xf32> -> vector<1x8x8xf32>
    "tpu.trace_stop"() : () -> ()
    %c0_102 = arith.constant 0 : index
    %c0_103 = arith.constant 0 : index
    %c0_104 = arith.constant 0 : index
    %280 = vector.load %arg13[%c0_102, %c0_103, %c0_104] : memref<1x8x32xf32, #tpu.memory_space<vmem>>, vector<1x8x8xf32>
    tpu.vector_store %arg13[%c0_102, %c0_103, %c0_104], %279 {strides = array<i32>} : memref<1x8x32xf32, #tpu.memory_space<vmem>>, vector<1x8x8xf32>,
    %281 = vector.extract_strided_slice %259 {offsets = [0, 0, 8], sizes = [1, 8, 8], strides = [1, 1, 1]} : vector<1x8x96xf32> to vector<1x8x8xf32>
    %282 = vector.extract_strided_slice %259 {offsets = [0, 0, 40], sizes = [1, 8, 8], strides = [1, 1, 1]} : vector<1x8x96xf32> to vector<1x8x8xf32>
    %283 = vector.extract_strided_slice %259 {offsets = [0, 0, 72], sizes = [1, 8, 8], strides = [1, 1, 1]} : vector<1x8x96xf32> to vector<1x8x8xf32>
    "tpu.trace_start"() <{level = 10 : i32, message = "bqd,bkd->bqk"}> : () -> ()
    %cst_105 = arith.constant dense<0.000000e+00> : vector<1x8x8xf32>
    %284 = tpu.matmul %281, %282, %cst_105 {dimension_numbers = #tpu.dot_dimension_numbers<[2], [2], [1], [1], [0, 0, 0, 1, 1, 1], [0], [0]>} : vector<1x8x8xf32>, vector<1x8x8xf32>, vector<1x8x8xf32> -> vector<1x8x8xf32>
    "tpu.trace_stop"() : () -> ()
    %cst_106 = arith.constant 0.353553385 : f32
    %285 = vector.broadcast %cst_106 : f32 to vector<1x8x8xf32>
    %286 = arith.mulf %284, %285 : vector<1x8x8xf32>
    %287 = vector.shape_cast %10 : vector<1x8xf32> to vector<1x1x8xf32>
    %288 = vector.broadcast %287 : vector<1x1x8xf32> to vector<1x8x8xf32>
    %289 = arith.addf %286, %288 : vector<1x8x8xf32>
    %cst_107 = arith.constant dense<0xFF800000> : vector<1x8xf32>
    %290 = vector.multi_reduction <maximumf>, %289, %cst_107 [2] : vector<1x8x8xf32> to vector<1x8xf32>
    %291 = vector.shape_cast %290 : vector<1x8xf32> to vector<1x8x1xf32>
    %292 = vector.broadcast %291 : vector<1x8x1xf32> to vector<1x8x8xf32>
    %293 = arith.subf %289, %292 : vector<1x8x8xf32>
    %294 = math.exp %293 : vector<1x8x8xf32>
    %cst_108 = arith.constant dense<0.000000e+00> : vector<1x8xf32>
    %295 = vector.multi_reduction <add>, %294, %cst_108 [2] : vector<1x8x8xf32> to vector<1x8xf32>
    %296 = vector.shape_cast %295 : vector<1x8xf32> to vector<1x8x1xf32>
    %297 = tpu.reciprocal %296 {approx = true} : vector<1x8x1xf32> -> vector<1x8x1xf32>
    %298 = vector.broadcast %297 : vector<1x8x1xf32> to vector<1x8x8xf32>
    %299 = arith.mulf %294, %298 : vector<1x8x8xf32>
    "tpu.trace_start"() <{level = 10 : i32, message = "bqk,bkd->bqd"}> : () -> ()
    %cst_109 = arith.constant dense<0.000000e+00> : vector<1x8x8xf32>
    %300 = tpu.matmul %299, %283, %cst_109 {dimension_numbers = #tpu.dot_dimension_numbers<[2], [1], [1], [2], [0, 0, 0, 1, 1, 2], [0], [0]>} : vector<1x8x8xf32>, vector<1x8x8xf32>, vector<1x8x8xf32> -> vector<1x8x8xf32>
    "tpu.trace_stop"() : () -> ()
    %c0_110 = arith.constant 0 : index
    %c0_111 = arith.constant 0 : index
    %c8_112 = arith.constant 8 : index
    %301 = vector.load %arg13[%c0_110, %c0_111, %c8_112] : memref<1x8x32xf32, #tpu.memory_space<vmem>>, vector<1x8x8xf32>
    tpu.vector_store %arg13[%c0_110, %c0_111, %c8_112], %300 {strides = array<i32>} : memref<1x8x32xf32, #tpu.memory_space<vmem>>, vector<1x8x8xf32>,
    %302 = vector.extract_strided_slice %259 {offsets = [0, 0, 16], sizes = [1, 8, 8], strides = [1, 1, 1]} : vector<1x8x96xf32> to vector<1x8x8xf32>
    %303 = vector.extract_strided_slice %259 {offsets = [0, 0, 48], sizes = [1, 8, 8], strides = [1, 1, 1]} : vector<1x8x96xf32> to vector<1x8x8xf32>
    %304 = vector.extract_strided_slice %259 {offsets = [0, 0, 80], sizes = [1, 8, 8], strides = [1, 1, 1]} : vector<1x8x96xf32> to vector<1x8x8xf32>
    "tpu.trace_start"() <{level = 10 : i32, message = "bqd,bkd->bqk"}> : () -> ()
    %cst_113 = arith.constant dense<0.000000e+00> : vector<1x8x8xf32>
    %305 = tpu.matmul %302, %303, %cst_113 {dimension_numbers = #tpu.dot_dimension_numbers<[2], [2], [1], [1], [0, 0, 0, 1, 1, 1], [0], [0]>} : vector<1x8x8xf32>, vector<1x8x8xf32>, vector<1x8x8xf32> -> vector<1x8x8xf32>
    "tpu.trace_stop"() : () -> ()
    %cst_114 = arith.constant 0.353553385 : f32
    %306 = vector.broadcast %cst_114 : f32 to vector<1x8x8xf32>
    %307 = arith.mulf %305, %306 : vector<1x8x8xf32>
    %308 = vector.shape_cast %10 : vector<1x8xf32> to vector<1x1x8xf32>
    %309 = vector.broadcast %308 : vector<1x1x8xf32> to vector<1x8x8xf32>
    %310 = arith.addf %307, %309 : vector<1x8x8xf32>
    %cst_115 = arith.constant dense<0xFF800000> : vector<1x8xf32>
    %311 = vector.multi_reduction <maximumf>, %310, %cst_115 [2] : vector<1x8x8xf32> to vector<1x8xf32>
    %312 = vector.shape_cast %311 : vector<1x8xf32> to vector<1x8x1xf32>
    %313 = vector.broadcast %312 : vector<1x8x1xf32> to vector<1x8x8xf32>
    %314 = arith.subf %310, %313 : vector<1x8x8xf32>
    %315 = math.exp %314 : vector<1x8x8xf32>
    %cst_116 = arith.constant dense<0.000000e+00> : vector<1x8xf32>
    %316 = vector.multi_reduction <add>, %315, %cst_116 [2] : vector<1x8x8xf32> to vector<1x8xf32>
    %317 = vector.shape_cast %316 : vector<1x8xf32> to vector<1x8x1xf32>
    %318 = tpu.reciprocal %317 {approx = true} : vector<1x8x1xf32> -> vector<1x8x1xf32>
    %319 = vector.broadcast %318 : vector<1x8x1xf32> to vector<1x8x8xf32>
    %320 = arith.mulf %315, %319 : vector<1x8x8xf32>
    "tpu.trace_start"() <{level = 10 : i32, message = "bqk,bkd->bqd"}> : () -> ()
    %cst_117 = arith.constant dense<0.000000e+00> : vector<1x8x8xf32>
    %321 = tpu.matmul %320, %304, %cst_117 {dimension_numbers = #tpu.dot_dimension_numbers<[2], [1], [1], [2], [0, 0, 0, 1, 1, 2], [0], [0]>} : vector<1x8x8xf32>, vector<1x8x8xf32>, vector<1x8x8xf32> -> vector<1x8x8xf32>
    "tpu.trace_stop"() : () -> ()
    %c0_118 = arith.constant 0 : index
    %c0_119 = arith.constant 0 : index
    %c16_120 = arith.constant 16 : index
    %322 = vector.load %arg13[%c0_118, %c0_119, %c16_120] : memref<1x8x32xf32, #tpu.memory_space<vmem>>, vector<1x8x8xf32>
    tpu.vector_store %arg13[%c0_118, %c0_119, %c16_120], %321 {strides = array<i32>} : memref<1x8x32xf32, #tpu.memory_space<vmem>>, vector<1x8x8xf32>,
    %323 = vector.extract_strided_slice %259 {offsets = [0, 0, 24], sizes = [1, 8, 8], strides = [1, 1, 1]} : vector<1x8x96xf32> to vector<1x8x8xf32>
    %324 = vector.extract_strided_slice %259 {offsets = [0, 0, 56], sizes = [1, 8, 8], strides = [1, 1, 1]} : vector<1x8x96xf32> to vector<1x8x8xf32>
    %325 = vector.extract_strided_slice %259 {offsets = [0, 0, 88], sizes = [1, 8, 8], strides = [1, 1, 1]} : vector<1x8x96xf32> to vector<1x8x8xf32>
    "tpu.trace_start"() <{level = 10 : i32, message = "bqd,bkd->bqk"}> : () -> ()
    %cst_121 = arith.constant dense<0.000000e+00> : vector<1x8x8xf32>
    %326 = tpu.matmul %323, %324, %cst_121 {dimension_numbers = #tpu.dot_dimension_numbers<[2], [2], [1], [1], [0, 0, 0, 1, 1, 1], [0], [0]>} : vector<1x8x8xf32>, vector<1x8x8xf32>, vector<1x8x8xf32> -> vector<1x8x8xf32>
    "tpu.trace_stop"() : () -> ()
    %cst_122 = arith.constant 0.353553385 : f32
    %327 = vector.broadcast %cst_122 : f32 to vector<1x8x8xf32>
    %328 = arith.mulf %326, %327 : vector<1x8x8xf32>
    %329 = vector.shape_cast %10 : vector<1x8xf32> to vector<1x1x8xf32>
    %330 = vector.broadcast %329 : vector<1x1x8xf32> to vector<1x8x8xf32>
    %331 = arith.addf %328, %330 : vector<1x8x8xf32>
    %cst_123 = arith.constant dense<0xFF800000> : vector<1x8xf32>
    %332 = vector.multi_reduction <maximumf>, %331, %cst_123 [2] : vector<1x8x8xf32> to vector<1x8xf32>
    %333 = vector.shape_cast %332 : vector<1x8xf32> to vector<1x8x1xf32>
    %334 = vector.broadcast %333 : vector<1x8x1xf32> to vector<1x8x8xf32>
    %335 = arith.subf %331, %334 : vector<1x8x8xf32>
    %336 = math.exp %335 : vector<1x8x8xf32>
    %cst_124 = arith.constant dense<0.000000e+00> : vector<1x8xf32>
    %337 = vector.multi_reduction <add>, %336, %cst_124 [2] : vector<1x8x8xf32> to vector<1x8xf32>
    %338 = vector.shape_cast %337 : vector<1x8xf32> to vector<1x8x1xf32>
    %339 = tpu.reciprocal %338 {approx = true} : vector<1x8x1xf32> -> vector<1x8x1xf32>
    %340 = vector.broadcast %339 : vector<1x8x1xf32> to vector<1x8x8xf32>
    %341 = arith.mulf %336, %340 : vector<1x8x8xf32>
    "tpu.trace_start"() <{level = 10 : i32, message = "bqk,bkd->bqd"}> : () -> ()
    %cst_125 = arith.constant dense<0.000000e+00> : vector<1x8x8xf32>
    %342 = tpu.matmul %341, %325, %cst_125 {dimension_numbers = #tpu.dot_dimension_numbers<[2], [1], [1], [2], [0, 0, 0, 1, 1, 2], [0], [0]>} : vector<1x8x8xf32>, vector<1x8x8xf32>, vector<1x8x8xf32> -> vector<1x8x8xf32>
    "tpu.trace_stop"() : () -> ()
    %c0_126 = arith.constant 0 : index
    %c0_127 = arith.constant 0 : index
    %c24_128 = arith.constant 24 : index
    %343 = vector.load %arg13[%c0_126, %c0_127, %c24_128] : memref<1x8x32xf32, #tpu.memory_space<vmem>>, vector<1x8x8xf32>
    tpu.vector_store %arg13[%c0_126, %c0_127, %c24_128], %342 {strides = array<i32>} : memref<1x8x32xf32, #tpu.memory_space<vmem>>, vector<1x8x8xf32>,
    %c0_129 = arith.constant 0 : index
    %c0_130 = arith.constant 0 : index
    %c0_131 = arith.constant 0 : index
    %344 = vector.load %arg13[%c0_129, %c0_130, %c0_131] : memref<1x8x32xf32, #tpu.memory_space<vmem>>, vector<1x8x32xf32>
    %345 = vector.shape_cast %344 : vector<1x8x32xf32> to vector<8x32xf32>
    %c1_132 = arith.constant 1 : index
    %c0_133 = arith.constant 0 : index
    %c0_134 = arith.constant 0 : index
    %346 = vector.load %arg5[%c1_132, %c0_133, %c0_134] : memref<2x32x32xf32, #tpu.memory_space<vmem>>, vector<1x32x32xf32>
    %347 = vector.shape_cast %346 : vector<1x32x32xf32> to vector<32x32xf32>
    %cst_135 = arith.constant dense<0.000000e+00> : vector<8x32xf32>
    %348 = tpu.matmul %345, %347, %cst_135 {dimension_numbers = #tpu.dot_dimension_numbers<[1], [0], [0], [1], [0, 0, 1, 1], [], []>} : vector<8x32xf32>, vector<32x32xf32>, vector<8x32xf32> -> vector<8x32xf32>
    %349 = arith.addf %219, %348 : vector<8x32xf32>
    %350 = vector.broadcast %225 : vector<1x32xf32> to vector<8x32xf32>
    %351 = arith.addf %349, %350 : vector<8x32xf32>
    %cst_136 = arith.constant dense<0.000000e+00> : vector<8xf32>
    %352 = vector.multi_reduction <add>, %351, %cst_136 [1] : vector<8x32xf32> to vector<8xf32>
    %353 = vector.shape_cast %352 : vector<8xf32> to vector<8x1xf32>
    %cst_137 = arith.constant 3.200000e+01 : f32
    %354 = vector.broadcast %cst_137 : f32 to vector<8x1xf32>
    %355 = arith.divf %353, %354 : vector<8x1xf32>
    %356 = vector.broadcast %355 : vector<8x1xf32> to vector<8x32xf32>
    %357 = arith.subf %351, %356 : vector<8x32xf32>
    %358 = arith.mulf %357, %357 : vector<8x32xf32>
    %cst_138 = arith.constant dense<0.000000e+00> : vector<8xf32>
    %359 = vector.multi_reduction <add>, %358, %cst_138 [1] : vector<8x32xf32> to vector<8xf32>
    %360 = vector.shape_cast %359 : vector<8xf32> to vector<8x1xf32>
    %cst_139 = arith.constant 3.200000e+01 : f32
    %361 = vector.broadcast %cst_139 : f32 to vector<8x1xf32>
    %362 = arith.divf %360, %361 : vector<8x1xf32>
    %cst_140 = arith.constant 9.99999974E-6 : f32
    %363 = vector.broadcast %cst_140 : f32 to vector<8x1xf32>
    %364 = arith.addf %362, %363 : vector<8x1xf32>
    %365 = math.rsqrt %364 : vector<8x1xf32>
    %366 = vector.broadcast %365 : vector<8x1xf32> to vector<8x32xf32>
    %367 = arith.mulf %357, %366 : vector<8x32xf32>
    %368 = vector.broadcast %226 : vector<1x32xf32> to vector<8x32xf32>
    %369 = arith.mulf %367, %368 : vector<8x32xf32>
    %370 = vector.broadcast %227 : vector<1x32xf32> to vector<8x32xf32>
    %371 = arith.addf %369, %370 : vector<8x32xf32>
    %c1_141 = arith.constant 1 : index
    %c0_142 = arith.constant 0 : index
    %c0_143 = arith.constant 0 : index
    %372 = vector.load %arg6[%c1_141, %c0_142, %c0_143] : memref<2x32x8xf32, #tpu.memory_space<vmem>>, vector<1x32x8xf32>
    %373 = vector.shape_cast %372 : vector<1x32x8xf32> to vector<32x8xf32>
    %cst_144 = arith.constant dense<0.000000e+00> : vector<8x8xf32>
    %374 = tpu.matmul %371, %373, %cst_144 {dimension_numbers = #tpu.dot_dimension_numbers<[1], [0], [0], [1], [0, 0, 1, 1], [], []>} : vector<8x32xf32>, vector<32x8xf32>, vector<8x8xf32> -> vector<8x8xf32>
    %375 = vector.broadcast %228 : vector<1x8xf32> to vector<8x8xf32>
    %376 = arith.addf %374, %375 : vector<8x8xf32>
    %cst_145 = arith.constant 0.000000e+00 : f32
    %377 = vector.broadcast %cst_145 : f32 to vector<8x8xf32>
    %378 = arith.maximumf %376, %377 : vector<8x8xf32>
    %c1_146 = arith.constant 1 : index
    %c0_147 = arith.constant 0 : index
    %c0_148 = arith.constant 0 : index
    %379 = vector.load %arg7[%c1_146, %c0_147, %c0_148] : memref<2x8x32xf32, #tpu.memory_space<vmem>>, vector<1x8x32xf32>
    %380 = vector.shape_cast %379 : vector<1x8x32xf32> to vector<8x32xf32>
    %cst_149 = arith.constant dense<0.000000e+00> : vector<8x32xf32>
    %381 = tpu.matmul %378, %380, %cst_149 {dimension_numbers = #tpu.dot_dimension_numbers<[1], [0], [0], [1], [0, 0, 1, 1], [], []>} : vector<8x8xf32>, vector<8x32xf32>, vector<8x32xf32> -> vector<8x32xf32>
    %382 = vector.broadcast %229 : vector<1x32xf32> to vector<8x32xf32>
    %383 = arith.addf %381, %382 : vector<8x32xf32>
    %cst_150 = arith.constant dense<0.000000e+00> : vector<8xf32>
    %384 = vector.multi_reduction <add>, %351, %cst_150 [1] : vector<8x32xf32> to vector<8xf32>
    %385 = vector.shape_cast %384 : vector<8xf32> to vector<8x1xf32>
    %cst_151 = arith.constant 3.200000e+01 : f32
    %386 = vector.broadcast %cst_151 : f32 to vector<8x1xf32>
    %387 = arith.divf %385, %386 : vector<8x1xf32>
    %388 = vector.broadcast %387 : vector<8x1xf32> to vector<8x32xf32>
    %389 = arith.subf %351, %388 : vector<8x32xf32>
    %390 = arith.mulf %389, %389 : vector<8x32xf32>
    %cst_152 = arith.constant dense<0.000000e+00> : vector<8xf32>
    %391 = vector.multi_reduction <add>, %390, %cst_152 [1] : vector<8x32xf32> to vector<8xf32>
    %392 = vector.shape_cast %391 : vector<8xf32> to vector<8x1xf32>
    %cst_153 = arith.constant 3.200000e+01 : f32
    %393 = vector.broadcast %cst_153 : f32 to vector<8x1xf32>
    %394 = arith.divf %392, %393 : vector<8x1xf32>
    %cst_154 = arith.constant 9.99999997E-7 : f32
    %395 = vector.broadcast %cst_154 : f32 to vector<8x1xf32>
    %396 = arith.addf %394, %395 : vector<8x1xf32>
    %397 = math.rsqrt %396 : vector<8x1xf32>
    %398 = vector.broadcast %397 : vector<8x1xf32> to vector<8x32xf32>
    %399 = arith.mulf %389, %398 : vector<8x32xf32>
    %400 = vector.broadcast %230 : vector<1x32xf32> to vector<8x32xf32>
    %401 = arith.mulf %399, %400 : vector<8x32xf32>
    %402 = vector.broadcast %231 : vector<1x32xf32> to vector<8x32xf32>
    %403 = arith.addf %401, %402 : vector<8x32xf32>
    %c1_155 = arith.constant 1 : index
    %c0_156 = arith.constant 0 : index
    %c0_157 = arith.constant 0 : index
    %404 = vector.load %arg8[%c1_155, %c0_156, %c0_157] : memref<2x32x128xf32, #tpu.memory_space<vmem>>, vector<1x32x128xf32>
    %405 = vector.shape_cast %404 : vector<1x32x128xf32> to vector<32x128xf32>
    %cst_158 = arith.constant dense<0.000000e+00> : vector<8x128xf32>
    %406 = tpu.matmul %403, %405, %cst_158 {dimension_numbers = #tpu.dot_dimension_numbers<[1], [0], [0], [1], [0, 0, 1, 1], [], []>} : vector<8x32xf32>, vector<32x128xf32>, vector<8x128xf32> -> vector<8x128xf32>
    %407 = vector.broadcast %232 : vector<1x128xf32> to vector<8x128xf32>
    %408 = arith.addf %406, %407 : vector<8x128xf32>
    %cst_159 = arith.constant 5.000000e-01 : f32
    %409 = vector.broadcast %cst_159 : f32 to vector<8x128xf32>
    %410 = arith.mulf %409, %408 : vector<8x128xf32>
    %cst_160 = arith.constant 4.471500e-02 : f32
    %411 = vector.broadcast %cst_160 : f32 to vector<8x128xf32>
    %412 = arith.mulf %411, %408 : vector<8x128xf32>
    %413 = arith.mulf %412, %408 : vector<8x128xf32>
    %414 = arith.mulf %413, %408 : vector<8x128xf32>
    %415 = arith.addf %408, %414 : vector<8x128xf32>
    %cst_161 = arith.constant 0.797884583 : f32
    %416 = vector.broadcast %cst_161 : f32 to vector<8x128xf32>
    %417 = arith.mulf %416, %415 : vector<8x128xf32>
    %418 = math.tanh %417 : vector<8x128xf32>
    %cst_162 = arith.constant 1.000000e+00 : f32
    %419 = vector.broadcast %cst_162 : f32 to vector<8x128xf32>
    %420 = arith.addf %419, %418 : vector<8x128xf32>
    %421 = arith.mulf %410, %420 : vector<8x128xf32>
    %c1_163 = arith.constant 1 : index
    %c0_164 = arith.constant 0 : index
    %c0_165 = arith.constant 0 : index
    %422 = vector.load %arg9[%c1_163, %c0_164, %c0_165] : memref<2x128x32xf32, #tpu.memory_space<vmem>>, vector<1x128x32xf32>
    %423 = vector.shape_cast %422 : vector<1x128x32xf32> to vector<128x32xf32>
    %cst_166 = arith.constant dense<0.000000e+00> : vector<8x32xf32>
    %424 = tpu.matmul %421, %423, %cst_166 {dimension_numbers = #tpu.dot_dimension_numbers<[1], [0], [0], [1], [0, 0, 1, 1], [], []>} : vector<8x128xf32>, vector<128x32xf32>, vector<8x32xf32> -> vector<8x32xf32>
    %425 = vector.broadcast %233 : vector<1x32xf32> to vector<8x32xf32>
    %426 = arith.addf %424, %425 : vector<8x32xf32>
    %427 = arith.addf %351, %426 : vector<8x32xf32>
    %428 = arith.addf %427, %383 : vector<8x32xf32>
    %429 = vector.shape_cast %428 : vector<8x32xf32> to vector<1x8x32xf32>
    %430 = vector.extract_strided_slice %429 {offsets = [0, 0, 0], sizes = [1, 1, 32], strides = [1, 1, 1]} : vector<1x8x32xf32> to vector<1x1x32xf32>
    %431 = vector.shape_cast %430 : vector<1x1x32xf32> to vector<1x32xf32>
    %c0_167 = arith.constant 0 : index
    %c0_168 = arith.constant 0 : index
    %432 = vector.load %arg11[%c0_167, %c0_168] : memref<8x128xf32, #tpu.memory_space<vmem>>, vector<8x128xf32>
    %433 = vector.extract_strided_slice %432 {offsets = [0, 0], sizes = [1, 32], strides = [1, 1]} : vector<8x128xf32> to vector<1x32xf32>
    %434 = vector.extract_strided_slice %432 {offsets = [1, 0], sizes = [1, 32], strides = [1, 1]} : vector<8x128xf32> to vector<1x32xf32>
    %cst_169 = arith.constant dense<0.000000e+00> : vector<1xf32>
    %435 = vector.multi_reduction <add>, %431, %cst_169 [1] : vector<1x32xf32> to vector<1xf32>
    %436 = vector.shape_cast %435 : vector<1xf32> to vector<1x1xf32>
    %cst_170 = arith.constant 3.200000e+01 : f32
    %437 = vector.broadcast %cst_170 : f32 to vector<1x1xf32>
    %438 = arith.divf %436, %437 : vector<1x1xf32>
    %439 = vector.broadcast %438 : vector<1x1xf32> to vector<1x32xf32>
    %440 = arith.subf %431, %439 : vector<1x32xf32>
    %441 = arith.mulf %440, %440 : vector<1x32xf32>
    %cst_171 = arith.constant dense<0.000000e+00> : vector<1xf32>
    %442 = vector.multi_reduction <add>, %441, %cst_171 [1] : vector<1x32xf32> to vector<1xf32>
    %443 = vector.shape_cast %442 : vector<1xf32> to vector<1x1xf32>
    %cst_172 = arith.constant 3.200000e+01 : f32
    %444 = vector.broadcast %cst_172 : f32 to vector<1x1xf32>
    %445 = arith.divf %443, %444 : vector<1x1xf32>
    %cst_173 = arith.constant 9.99999997E-7 : f32
    %446 = vector.broadcast %cst_173 : f32 to vector<1x1xf32>
    %447 = arith.addf %445, %446 : vector<1x1xf32>
    %448 = math.rsqrt %447 : vector<1x1xf32>
    %449 = vector.broadcast %448 : vector<1x1xf32> to vector<1x32xf32>
    %450 = arith.mulf %440, %449 : vector<1x32xf32>
    %451 = arith.mulf %450, %433 : vector<1x32xf32>
    %452 = arith.addf %451, %434 : vector<1x32xf32>
    %cst_174 = arith.constant 0.000000e+00 : f32
    %453 = vector.broadcast %cst_174 : f32 to vector<1x96xf32>
    %454 = tpu.concatenate %452, %453 in 1 : vector<1x32xf32>, vector<1x96xf32> -> vector<1x128xf32>
    %c0_175 = arith.constant 0 : index
    %c0_176 = arith.constant 0 : index
    %c0_177 = arith.constant 0 : index
    %455 = vector.load %arg12[%c0_175, %c0_176, %c0_177] : memref<1x1x128xf32, #tpu.memory_space<vmem>>, vector<1x1x128xf32>
    %456 = vector.shape_cast %455 : vector<1x1x128xf32> to vector<1x128xf32>
    %457 = vector.shape_cast %454 : vector<1x128xf32> to vector<1x1x128xf32>
    tpu.vector_store %arg12[%c0_175, %c0_176, %c0_177], %457 {strides = array<i32>} : memref<1x1x128xf32, #tpu.memory_space<vmem>>, vector<1x1x128xf32>,
    return
  }
  func.func @transform_0(%arg0: i32) -> (i32, i32) {
    %c0_i32 = arith.constant 0 : i32
    %c0_i32_0 = arith.constant 0 : i32
    return %arg0, %c0_i32 : i32, i32
  }
  func.func @transform_1(%arg0: i32) -> (i32, i32) {
    %c0_i32 = arith.constant 0 : i32
    %c0_i32_0 = arith.constant 0 : i32
    %c0_i32_1 = arith.constant 0 : i32
    return %c0_i32, %c0_i32_0 : i32, i32
  }
  func.func @transform_2(%arg0: i32) -> (i32, i32) {
    %c0_i32 = arith.constant 0 : i32
    %c0_i32_0 = arith.constant 0 : i32
    %c0_i32_1 = arith.constant 0 : i32
    return %c0_i32, %c0_i32_0 : i32, i32
  }
  func.func @transform_3(%arg0: i32) -> (i32, i32, i32) {
    %c0_i32 = arith.constant 0 : i32
    %c0_i32_0 = arith.constant 0 : i32
    %c0_i32_1 = arith.constant 0 : i32
    %c0_i32_2 = arith.constant 0 : i32
    return %c0_i32, %c0_i32_0, %c0_i32_1 : i32, i32, i32
  }
  func.func @transform_4(%arg0: i32) -> (i32, i32, i32) {
    %c0_i32 = arith.constant 0 : i32
    %c0_i32_0 = arith.constant 0 : i32
    %c0_i32_1 = arith.constant 0 : i32
    %c0_i32_2 = arith.constant 0 : i32
    return %c0_i32, %c0_i32_0, %c0_i32_1 : i32, i32, i32
  }
  func.func @transform_5(%arg0: i32) -> (i32, i32, i32) {
    %c0_i32 = arith.constant 0 : i32
    %c0_i32_0 = arith.constant 0 : i32
    %c0_i32_1 = arith.constant 0 : i32
    %c0_i32_2 = arith.constant 0 : i32
    return %c0_i32, %c0_i32_0, %c0_i32_1 : i32, i32, i32
  }
  func.func @transform_6(%arg0: i32) -> (i32, i32, i32) {
    %c0_i32 = arith.constant 0 : i32
    %c0_i32_0 = arith.constant 0 : i32
    %c0_i32_1 = arith.constant 0 : i32
    %c0_i32_2 = arith.constant 0 : i32
    return %c0_i32, %c0_i32_0, %c0_i32_1 : i32, i32, i32
  }
  func.func @transform_7(%arg0: i32) -> (i32, i32, i32) {
    %c0_i32 = arith.constant 0 : i32
    %c0_i32_0 = arith.constant 0 : i32
    %c0_i32_1 = arith.constant 0 : i32
    %c0_i32_2 = arith.constant 0 : i32
    return %c0_i32, %c0_i32_0, %c0_i32_1 : i32, i32, i32
  }
  func.func @transform_8(%arg0: i32) -> (i32, i32, i32) {
    %c0_i32 = arith.constant 0 : i32
    %c0_i32_0 = arith.constant 0 : i32
    %c0_i32_1 = arith.constant 0 : i32
    %c0_i32_2 = arith.constant 0 : i32
    return %c0_i32, %c0_i32_0, %c0_i32_1 : i32, i32, i32
  }
  func.func @transform_9(%arg0: i32) -> (i32, i32, i32) {
    %c0_i32 = arith.constant 0 : i32
    %c0_i32_0 = arith.constant 0 : i32
    %c0_i32_1 = arith.constant 0 : i32
    %c0_i32_2 = arith.constant 0 : i32
    return %c0_i32, %c0_i32_0, %c0_i32_1 : i32, i32, i32
  }
  func.func @transform_10(%arg0: i32) -> (i32, i32) {
    %c0_i32 = arith.constant 0 : i32
    %c0_i32_0 = arith.constant 0 : i32
    %c0_i32_1 = arith.constant 0 : i32
    return %c0_i32, %c0_i32_0 : i32, i32
  }
  func.func @transform_11(%arg0: i32) -> (i32, i32, i32) {
    %c0_i32 = arith.constant 0 : i32
    %c0_i32_0 = arith.constant 0 : i32
    %c0_i32_1 = arith.constant 0 : i32
    return %arg0, %c0_i32, %c0_i32_0 : i32, i32, i32
  }
}

</mosaic_0001>

<llo_original>
// kernel: vit_forward.1
$region0: #{vit_forward.1}
  #allocation0 [shape = 'u32[]', space=smem, size = 0x4, offset = 0x4, fixed_abs, tag = 'smem constant byte address 0x4 - core index']
  #allocation1 [shape = 'u32[144,128]{1,0:T(1,128)}', space=vmem, size = 0x12000, scoped, tag = 'internal scratch']
  #allocation2 [shape = 'f32[1,8,32]{2,1,0:T(8,128)}', space=vmem, size = 0x1000, scoped, tag = 'scratch operand']
  %s0 = inlined_call_operand.vmem [shape: f32[16,256], index: 0, kind: input, shape index: {}]
  %s1 = inlined_call_operand.vmem [shape: f32[8,32], index: 1, kind: input, shape index: {}]
  %s2 = inlined_call_operand.vmem [shape: f32[256,32], index: 2, kind: input, shape index: {}]
  %s3 = inlined_call_operand.vmem [shape: f32[2,32,96], index: 3, kind: input, shape index: {}]
  %s4 = inlined_call_operand.vmem [shape: f32[2,32,32], index: 4, kind: input, shape index: {}]
  %s5 = inlined_call_operand.vmem [shape: f32[2,32,8], index: 5, kind: input, shape index: {}]
  %s6 = inlined_call_operand.vmem [shape: f32[2,8,32], index: 6, kind: input, shape index: {}]
  %s7 = inlined_call_operand.vmem [shape: f32[2,32,128], index: 7, kind: input, shape index: {}]
  %s8 = inlined_call_operand.vmem [shape: f32[2,128,32], index: 8, kind: input, shape index: {}]
  %s9 = inlined_call_operand.vmem [shape: f32[2,16,128], index: 9, kind: input, shape index: {}]
  %s10 = inlined_call_operand.vmem [shape: f32[8,128], index: 10, kind: input, shape index: {}]
  %s11 = inlined_call_operand.hbm [shape: f32[2,1,128], index: 11, kind: output, shape index: {}]
  %s12 = sld [smem:[#allocation0]]
  $region77: #{vit_forward.1} parent=0
    _
  %s14 = ssub.s32 1, %s12
  %s15 = scalar_select 0, %s14, %s12
  $region1: #{vit_forward.1} parent=0
    #allocation3 [shape = 'u8[1024]{0}', space=vmem, size = 0x400, scoped, tag = 'output window, operand 0']
    #allocation4 [shape = 's32[2]{0}', space=sflag, size = 0x8, scoped, tag = 'scoped memory for vit_forward.1']
    %16 = vsyncpa [#allocation4], 0
    %s17 = scalar_lea.sflag [#allocation4], 1
    %18 = vsyncpa %s17, 0
    loop: start=0, step=1, limit=4
    $region2: #{vit_forward.1} parent=1 // loop_pre_header
      _
    $region3: #{vit_forward.1} parent=1 // loop_header
      %s20 = sphi 0, %s24
      %p21 = scmp.ge.s32.totalorder %s20, 4
      %s30 = sphi 0, %s32
      %s33 = sphi 0, %s30
      %s34 = sphi 0, %s33
      %s50 = sphi 0, %s34
      %s54 = sphi 0, %s54
      %s56 = sphi 0, %s54
      %s57 = sphi 0, %s56
      %s71 = sphi 0, %s57
      %s75 = sphi 0, %s75
      %s77 = sphi 0, %s75
      %s78 = sphi 0, %s77
      %s92 = sphi 0, %s78
      %s96 = sphi 0, %s96
      %s98 = sphi 0, %s96
      %s99 = sphi 0, %s98
      %s113 = sphi 0, %s99
      %s117 = sphi 0, %s117
      %s119 = sphi 0, %s117
      %s120 = sphi 0, %s119
      %s134 = sphi 0, %s120
      %s138 = sphi 0, %s138
      %s140 = sphi 0, %s138
      %s141 = sphi 0, %s140
      %s155 = sphi 0, %s141
      %s159 = sphi 0, %s159
      %s161 = sphi 0, %s159
      %s162 = sphi 0, %s161
      %s176 = sphi 0, %s162
      %s180 = sphi 0, %s180
      %s182 = sphi 0, %s180
      %s183 = sphi 0, %s182
      %s197 = sphi 0, %s183
      %s201 = sphi 0, %s201
      %s203 = sphi 0, %s201
      %s204 = sphi 0, %s203
      %s218 = sphi 0, %s204
      %s222 = sphi 0, %s222
      %s224 = sphi 0, %s222
      %s225 = sphi 0, %s224
      %s239 = sphi 0, %s225
      %s243 = sphi 0, %s243
      %s245 = sphi 0, %s243
      %s246 = sphi 0, %s245
      %s260 = sphi 0, %s246
      %s266 = sphi 0, %s268
      %s269 = sphi 0, %s266
      %s270 = sphi 0, %s269
      %s286 = sphi 0, %s270
    $region4: #{vit_forward.1} parent=1 // loop_header_branch
      %23 = sbr.rel (%p21) target = $region8
    $region5: #{vit_forward.1} parent=1 // loop_body
      %s25 = ssub.s32 %s20, 1
      %s26 = ssub.s32 %s20, 2
      %s27 = sadd.s32 %s20, 1
      %s28 = ssub.s32 %s20, %s27
      %p29 = scmp.eq.s32.totalorder %s28, 0
      %s31 = sadd.s32 %s30, 1
      %s32 = scalar_select %p29, %s30, %s31
      %p35 = pneg %p29
      %p36 = scmp.eq.s32.totalorder %s20, 1
      %p37 = por %p35, %p36
      %p38 = scmp.ne.s32.totalorder %s30, %s33
      %p39 = scmp.eq.s32.totalorder %s20, 0
      %p40 = por %p38, %p39
      %p41 = scmp.ne.s32.totalorder %s30, %s33
      %p42 = scmp.eq.s32.totalorder %s25, 1
      %p43 = por %p41, %p42
      %p44 = scmp.ne.s32.totalorder %s33, %s34
      %p45 = scmp.eq.s32.totalorder %s25, 0
      %p46 = por %p44, %p45
      %p47 = scmp.ne.s32.totalorder %s33, %s34
      %p48 = scmp.eq.s32.totalorder %s26, 1
      %p49 = por %p47, %p48
      %p51 = scmp.ne.s32.totalorder %s34, %s50
      %p52 = scmp.eq.s32.totalorder %s26, 0
      %p53 = por %p51, %p52
      %s55 = sadd.s32 %s54, 1
      %p58 = scmp.eq.s32.totalorder %s20, 1
      %p59 = scmp.ne.s32.totalorder %s54, %s56
      %p60 = scmp.eq.s32.totalorder %s20, 0
      %p61 = por %p59, %p60
      %p62 = scmp.ne.s32.totalorder %s54, %s56
      %p63 = scmp.eq.s32.totalorder %s25, 1
      %p64 = por %p62, %p63
      %p65 = scmp.ne.s32.totalorder %s56, %s57
      %p66 = scmp.eq.s32.totalorder %s25, 0
      %p67 = por %p65, %p66
      %p68 = scmp.ne.s32.totalorder %s56, %s57
      %p69 = scmp.eq.s32.totalorder %s26, 1
      %p70 = por %p68, %p69
      %p72 = scmp.ne.s32.totalorder %s57, %s71
      %p73 = scmp.eq.s32.totalorder %s26, 0
      %p74 = por %p72, %p73
      %s76 = sadd.s32 %s75, 1
      %p79 = scmp.eq.s32.totalorder %s20, 1
      %p80 = scmp.ne.s32.totalorder %s75, %s77
      %p81 = scmp.eq.s32.totalorder %s20, 0
      %p82 = por %p80, %p81
      %p83 = scmp.ne.s32.totalorder %s75, %s77
      %p84 = scmp.eq.s32.totalorder %s25, 1
      %p85 = por %p83, %p84
      %p86 = scmp.ne.s32.totalorder %s77, %s78
      %p87 = scmp.eq.s32.totalorder %s25, 0
      %p88 = por %p86, %p87
      %p89 = scmp.ne.s32.totalorder %s77, %s78
      %p90 = scmp.eq.s32.totalorder %s26, 1
      %p91 = por %p89, %p90
      %p93 = scmp.ne.s32.totalorder %s78, %s92
      %p94 = scmp.eq.s32.totalorder %s26, 0
      %p95 = por %p93, %p94
      %s97 = sadd.s32 %s96, 1
      %p100 = scmp.eq.s32.totalorder %s20, 1
      %p101 = scmp.ne.s32.totalorder %s96, %s98
      %p102 = scmp.eq.s32.totalorder %s20, 0
      %p103 = por %p101, %p102
      %p104 = scmp.ne.s32.totalorder %s96, %s98
      %p105 = scmp.eq.s32.totalorder %s25, 1
      %p106 = por %p104, %p105
      %p107 = scmp.ne.s32.totalorder %s98, %s99
      %p108 = scmp.eq.s32.totalorder %s25, 0
      %p109 = por %p107, %p108
      %p110 = scmp.ne.s32.totalorder %s98, %s99
      %p111 = scmp.eq.s32.totalorder %s26, 1
      %p112 = por %p110, %p111
      %p114 = scmp.ne.s32.totalorder %s99, %s113
      %p115 = scmp.eq.s32.totalorder %s26, 0
      %p116 = por %p114, %p115
      %s118 = sadd.s32 %s117, 1
      %p121 = scmp.eq.s32.totalorder %s20, 1
      %p122 = scmp.ne.s32.totalorder %s117, %s119
      %p123 = scmp.eq.s32.totalorder %s20, 0
      %p124 = por %p122, %p123
      %p125 = scmp.ne.s32.totalorder %s117, %s119
      %p126 = scmp.eq.s32.totalorder %s25, 1
      %p127 = por %p125, %p126
      %p128 = scmp.ne.s32.totalorder %s119, %s120
      %p129 = scmp.eq.s32.totalorder %s25, 0
      %p130 = por %p128, %p129
      %p131 = scmp.ne.s32.totalorder %s119, %s120
      %p132 = scmp.eq.s32.totalorder %s26, 1
      %p133 = por %p131, %p132
      %p135 = scmp.ne.s32.totalorder %s120, %s134
      %p136 = scmp.eq.s32.totalorder %s26, 0
      %p137 = por %p135, %p136
      %s139 = sadd.s32 %s138, 1
      %p142 = scmp.eq.s32.totalorder %s20, 1
      %p143 = scmp.ne.s32.totalorder %s138, %s140
      %p144 = scmp.eq.s32.totalorder %s20, 0
      %p145 = por %p143, %p144
      %p146 = scmp.ne.s32.totalorder %s138, %s140
      %p147 = scmp.eq.s32.totalorder %s25, 1
      %p148 = por %p146, %p147
      %p149 = scmp.ne.s32.totalorder %s140, %s141
      %p150 = scmp.eq.s32.totalorder %s25, 0
      %p151 = por %p149, %p150
      %p152 = scmp.ne.s32.totalorder %s140, %s141
      %p153 = scmp.eq.s32.totalorder %s26, 1
      %p154 = por %p152, %p153
      %p156 = scmp.ne.s32.totalorder %s141, %s155
      %p157 = scmp.eq.s32.totalorder %s26, 0
      %p158 = por %p156, %p157
      %s160 = sadd.s32 %s159, 1
      %p163 = scmp.eq.s32.totalorder %s20, 1
      %p164 = scmp.ne.s32.totalorder %s159, %s161
      %p165 = scmp.eq.s32.totalorder %s20, 0
      %p166 = por %p164, %p165
      %p167 = scmp.ne.s32.totalorder %s159, %s161
      %p168 = scmp.eq.s32.totalorder %s25, 1
      %p169 = por %p167, %p168
      %p170 = scmp.ne.s32.totalorder %s161, %s162
      %p171 = scmp.eq.s32.totalorder %s25, 0
      %p172 = por %p170, %p171
      %p173 = scmp.ne.s32.totalorder %s161, %s162
      %p174 = scmp.eq.s32.totalorder %s26, 1
      %p175 = por %p173, %p174
      %p177 = scmp.ne.s32.totalorder %s162, %s176
      %p178 = scmp.eq.s32.totalorder %s26, 0
      %p179 = por %p177, %p178
      %s181 = sadd.s32 %s180, 1
      %p184 = scmp.eq.s32.totalorder %s20, 1
      %p185 = scmp.ne.s32.totalorder %s180, %s182
      %p186 = scmp.eq.s32.totalorder %s20, 0
      %p187 = por %p185, %p186
      %p188 = scmp.ne.s32.totalorder %s180, %s182
      %p189 = scmp.eq.s32.totalorder %s25, 1
      %p190 = por %p188, %p189
      %p191 = scmp.ne.s32.totalorder %s182, %s183
      %p192 = scmp.eq.s32.totalorder %s25, 0
      %p193 = por %p191, %p192
      %p194 = scmp.ne.s32.totalorder %s182, %s183
      %p195 = scmp.eq.s32.totalorder %s26, 1
      %p196 = por %p194, %p195
      %p198 = scmp.ne.s32.totalorder %s183, %s197
      %p199 = scmp.eq.s32.totalorder %s26, 0
      %p200 = por %p198, %p199
      %s202 = sadd.s32 %s201, 1
      %p205 = scmp.eq.s32.totalorder %s20, 1
      %p206 = scmp.ne.s32.totalorder %s201, %s203
      %p207 = scmp.eq.s32.totalorder %s20, 0
      %p208 = por %p206, %p207
      %p209 = scmp.ne.s32.totalorder %s201, %s203
      %p210 = scmp.eq.s32.totalorder %s25, 1
      %p211 = por %p209, %p210
      %p212 = scmp.ne.s32.totalorder %s203, %s204
      %p213 = scmp.eq.s32.totalorder %s25, 0
      %p214 = por %p212, %p213
      %p215 = scmp.ne.s32.totalorder %s203, %s204
      %p216 = scmp.eq.s32.totalorder %s26, 1
      %p217 = por %p215, %p216
      %p219 = scmp.ne.s32.totalorder %s204, %s218
      %p220 = scmp.eq.s32.totalorder %s26, 0
      %p221 = por %p219, %p220
      %s223 = sadd.s32 %s222, 1
      %p226 = scmp.eq.s32.totalorder %s20, 1
      %p227 = scmp.ne.s32.totalorder %s222, %s224
      %p228 = scmp.eq.s32.totalorder %s20, 0
      %p229 = por %p227, %p228
      %p230 = scmp.ne.s32.totalorder %s222, %s224
      %p231 = scmp.eq.s32.totalorder %s25, 1
      %p232 = por %p230, %p231
      %p233 = scmp.ne.s32.totalorder %s224, %s225
      %p234 = scmp.eq.s32.totalorder %s25, 0
      %p235 = por %p233, %p234
      %p236 = scmp.ne.s32.totalorder %s224, %s225
      %p237 = scmp.eq.s32.totalorder %s26, 1
      %p238 = por %p236, %p237
      %p240 = scmp.ne.s32.totalorder %s225, %s239
      %p241 = scmp.eq.s32.totalorder %s26, 0
      %p242 = por %p240, %p241
      %s244 = sadd.s32 %s243, 1
      %p247 = scmp.eq.s32.totalorder %s20, 1
      %p248 = scmp.ne.s32.totalorder %s243, %s245
      %p249 = scmp.eq.s32.totalorder %s20, 0
      %p250 = por %p248, %p249
      %p251 = scmp.ne.s32.totalorder %s243, %s245
      %p252 = scmp.eq.s32.totalorder %s25, 1
      %p253 = por %p251, %p252
      %p254 = scmp.ne.s32.totalorder %s245, %s246
      %p255 = scmp.eq.s32.totalorder %s25, 0
      %p256 = por %p254, %p255
      %p257 = scmp.ne.s32.totalorder %s245, %s246
      %p258 = scmp.eq.s32.totalorder %s26, 1
      %p259 = por %p257, %p258
      %p261 = scmp.ne.s32.totalorder %s246, %s260
      %p262 = scmp.eq.s32.totalorder %s26, 0
      %p263 = por %p261, %p262
      %s264 = ssub.s32 %s20, %s27
      %p265 = scmp.eq.s32.totalorder %s264, 0
      %s267 = sadd.s32 %s266, 1
      %s268 = scalar_select %p265, %s266, %s267
      %p271 = pneg %p265
      %p272 = scmp.eq.s32.totalorder %s20, 1
      %p273 = por %p271, %p272
      %p274 = scmp.ne.s32.totalorder %s266, %s269
      %p275 = scmp.eq.s32.totalorder %s20, 0
      %p276 = por %p274, %p275
      %p277 = scmp.ne.s32.totalorder %s266, %s269
      %p278 = scmp.eq.s32.totalorder %s25, 1
      %p279 = por %p277, %p278
      %p280 = scmp.ne.s32.totalorder %s269, %s270
      %p281 = scmp.eq.s32.totalorder %s25, 0
      %p282 = por %p280, %p281
      %p283 = scmp.ne.s32.totalorder %s269, %s270
      %p284 = scmp.eq.s32.totalorder %s26, 1
      %p285 = por %p283, %p284
      %p287 = scmp.ne.s32.totalorder %s270, %s286
      %p288 = scmp.eq.s32.totalorder %s26, 0
      %p289 = por %p287, %p288
      %p290 = scmp.le.s32.totalorder 1, %s20
      %p291 = scmp.lt.s32.totalorder %s20, 3
      %p292 = pnand %p290, %p291
      %p293 = pneg %p292
      // Predicated region
      $region9: #{vit_forward.1} parent=5 // pred_check
        _
      $region10: #{vit_forward.1} parent=5 // pred_check_branch
        %295 = sbr.rel (%p292) target = $region12
      $region11: #{vit_forward.1} parent=5 // pred_region
        %s296 = ssub.s32 %s20, 1
        // Predicated region
        $region13: #{vit_forward.1} parent=11 // pred_check
          %p297 = pneg %p67
        $region14: #{vit_forward.1} parent=11 // pred_check_branch
          %299 = sbr.rel (%p297) target = $region16
        $region15: #{vit_forward.1} parent=11 // pred_region
          _
        $region16: #{vit_forward.1} parent=11 // pred_fallthru
          _
        // Predicated region
        $region17: #{vit_forward.1} parent=11 // pred_check
          %p300 = pneg %p88
        $region18: #{vit_forward.1} parent=11 // pred_check_branch
          %302 = sbr.rel (%p300) target = $region20
        $region19: #{vit_forward.1} parent=11 // pred_region
          _
        $region20: #{vit_forward.1} parent=11 // pred_fallthru
          _
        // Predicated region
        $region21: #{vit_forward.1} parent=11 // pred_check
          %p303 = pneg %p109
        $region22: #{vit_forward.1} parent=11 // pred_check_branch
          %305 = sbr.rel (%p303) target = $region24
        $region23: #{vit_forward.1} parent=11 // pred_region
          _
        $region24: #{vit_forward.1} parent=11 // pred_fallthru
          _
        // Predicated region
        $region25: #{vit_forward.1} parent=11 // pred_check
          %p306 = pneg %p130
        $region26: #{vit_forward.1} parent=11 // pred_check_branch
          %308 = sbr.rel (%p306) target = $region28
        $region27: #{vit_forward.1} parent=11 // pred_region
          _
        $region28: #{vit_forward.1} parent=11 // pred_fallthru
          _
        // Predicated region
        $region29: #{vit_forward.1} parent=11 // pred_check
          %p309 = pneg %p151
        $region30: #{vit_forward.1} parent=11 // pred_check_branch
          %311 = sbr.rel (%p309) target = $region32
        $region31: #{vit_forward.1} parent=11 // pred_region
          _
        $region32: #{vit_forward.1} parent=11 // pred_fallthru
          _
        // Predicated region
        $region33: #{vit_forward.1} parent=11 // pred_check
          %p312 = pneg %p172
        $region34: #{vit_forward.1} parent=11 // pred_check_branch
          %314 = sbr.rel (%p312) target = $region36
        $region35: #{vit_forward.1} parent=11 // pred_region
          _
        $region36: #{vit_forward.1} parent=11 // pred_fallthru
          _
        // Predicated region
        $region37: #{vit_forward.1} parent=11 // pred_check
          %p315 = pneg %p193
        $region38: #{vit_forward.1} parent=11 // pred_check_branch
          %317 = sbr.rel (%p315) target = $region40
        $region39: #{vit_forward.1} parent=11 // pred_region
          _
        $region40: #{vit_forward.1} parent=11 // pred_fallthru
          _
        // Predicated region
        $region41: #{vit_forward.1} parent=11 // pred_check
          %p318 = pneg %p214
        $region42: #{vit_forward.1} parent=11 // pred_check_branch
          %320 = sbr.rel (%p318) target = $region44
        $region43: #{vit_forward.1} parent=11 // pred_region
          _
        $region44: #{vit_forward.1} parent=11 // pred_fallthru
          _
        // Predicated region
        $region45: #{vit_forward.1} parent=11 // pred_check
          %p321 = pneg %p235
        $region46: #{vit_forward.1} parent=11 // pred_check_branch
          %323 = sbr.rel (%p321) target = $region48
        $region47: #{vit_forward.1} parent=11 // pred_region
          _
        $region48: #{vit_forward.1} parent=11 // pred_fallthru
          _
        // Predicated region
        $region49: #{vit_forward.1} parent=11 // pred_check
          %p324 = pneg %p256
        $region50: #{vit_forward.1} parent=11 // pred_check_branch
          %326 = sbr.rel (%p324) target = $region52
        $region51: #{vit_forward.1} parent=11 // pred_region
          _
        $region52: #{vit_forward.1} parent=11 // pred_fallthru
          _
      $region12: #{vit_forward.1} parent=5 // pred_fallthru
        _
      %p327 = scmp.lt.s32.totalorder %s20, 2
      // Predicated region
      $region53: #{vit_forward.1} parent=5 // pred_check
        %p328 = pneg %p327
      $region54: #{vit_forward.1} parent=5 // pred_check_branch
        %330 = sbr.rel (%p328) target = $region56
      $region55: #{vit_forward.1} parent=5 // pred_region
        // Predicated region
        $region57: #{vit_forward.1} parent=55 // pred_check
          %p331 = pneg %p40
        $region58: #{vit_forward.1} parent=55 // pred_check_branch
          %333 = sbr.rel (%p331) target = $region60
        $region59: #{vit_forward.1} parent=55 // pred_region
          %p334 = scmp.lt.s32.totalorder %s20, 1
          %s335 = scalar_select %p334, %s20, 1
          %s336 = smul.addr %s335, 2
          %s337 = smul.addr %s336, 8
          %s338 = scalar_lea.vmem %s0, %s337
        $region60: #{vit_forward.1} parent=55 // pred_fallthru
          _
      $region56: #{vit_forward.1} parent=5 // pred_fallthru
        _
      %p339 = scmp.le.s32.totalorder 1, %s20
      %p340 = scmp.lt.s32.totalorder %s20, 3
      %p341 = pnand %p339, %p340
      %p342 = pneg %p341
      // Predicated region
      $region61: #{vit_forward.1} parent=5 // pred_check
        _
      $region62: #{vit_forward.1} parent=5 // pred_check_branch
        %344 = sbr.rel (%p341) target = $region64
      $region63: #{vit_forward.1} parent=5 // pred_region
        %s345 = ssub.s32 %s20, 1
        %p346 = scmp.lt.s32.totalorder %s25, 1
        %s347 = scalar_select %p346, %s25, 1
        %s348 = smul.addr %s347, 2
        %s349 = smul.addr %s348, 8
        %s350 = scalar_lea.vmem %s0, %s349
        %p351 = pneg %p46
        %p352 = pneg %p43
        %p353 = pneg %p67
        %p354 = pneg %p64
        %p355 = pneg %p88
        %p356 = pneg %p85
        %p357 = pneg %p109
        %p358 = pneg %p106
        %p359 = pneg %p130
        %p360 = pneg %p127
        %p361 = pneg %p151
        %p362 = pneg %p148
        %p363 = pneg %p172
        %p364 = pneg %p169
        %p365 = pneg %p193
        %p366 = pneg %p190
        %p367 = pneg %p214
        %p368 = pneg %p211
        %p369 = pneg %p235
        %p370 = pneg %p232
        %p371 = pneg %p256
        %p372 = pneg %p253
        %p373 = pneg %p282
        %p374 = pneg %p279
        %s375 = sand.u32 %s269, 1
        %s376 = scalar_lea.sflag [#allocation4], %s375
        %s377 = sand.u32 %s269, 1
        %s378 = scalar_lea.vmem [#allocation3], %s377
        %p379 = scmp.lt.s32.totalorder %s25, 1
        %s380 = scalar_select %p379, %s25, 1
        %s381 = smul.addr %s380, 2
        %s382 = smul.addr %s381, 8
        %s383 = scalar_lea.vmem %s0, %s382
        %v384 = vld [vmem:[%s383] sm:$0xff]
        %v385 = vld [vmem:[%s383 + $0x8] sm:$0xff]
        %v386 = vld [vmem:[%s2] sm:$0xff]
        %v387 = vld [vmem:[%s2 + $0x8] sm:$0xff]
        %v388 = vld [vmem:[%s2 + $0x10] sm:$0xff]
        %v389 = vld [vmem:[%s2 + $0x18] sm:$0xff]
        %v390 = vld [vmem:[%s2 + $0x20] sm:$0xff]
        %v391 = vld [vmem:[%s2 + $0x28] sm:$0xff]
        %v392 = vld [vmem:[%s2 + $0x30] sm:$0xff]
        %v393 = vld [vmem:[%s2 + $0x38] sm:$0xff]
        %v394 = vld [vmem:[%s2 + $0x40] sm:$0xff]
        %v395 = vld [vmem:[%s2 + $0x48] sm:$0xff]
        %v396 = vld [vmem:[%s2 + $0x50] sm:$0xff]
        %v397 = vld [vmem:[%s2 + $0x58] sm:$0xff]
        %v398 = vld [vmem:[%s2 + $0x60] sm:$0xff]
        %v399 = vld [vmem:[%s2 + $0x68] sm:$0xff]
        %v400 = vld [vmem:[%s2 + $0x70] sm:$0xff]
        %v401 = vld [vmem:[%s2 + $0x78] sm:$0xff]
        %v402 = vld [vmem:[%s2 + $0x80] sm:$0xff]
        %v403 = vld [vmem:[%s2 + $0x88] sm:$0xff]
        %v404 = vld [vmem:[%s2 + $0x90] sm:$0xff]
        %v405 = vld [vmem:[%s2 + $0x98] sm:$0xff]
        %v406 = vld [vmem:[%s2 + $0xa0] sm:$0xff]
        %v407 = vld [vmem:[%s2 + $0xa8] sm:$0xff]
        %v408 = vld [vmem:[%s2 + $0xb0] sm:$0xff]
        %v409 = vld [vmem:[%s2 + $0xb8] sm:$0xff]
        %v410 = vld [vmem:[%s2 + $0xc0] sm:$0xff]
        %v411 = vld [vmem:[%s2 + $0xc8] sm:$0xff]
        %v412 = vld [vmem:[%s2 + $0xd0] sm:$0xff]
        %v413 = vld [vmem:[%s2 + $0xd8] sm:$0xff]
        %v414 = vld [vmem:[%s2 + $0xe0] sm:$0xff]
        %v415 = vld [vmem:[%s2 + $0xe8] sm:$0xff]
        %v416 = vld [vmem:[%s2 + $0xf0] sm:$0xff]
        %v417 = vld [vmem:[%s2 + $0xf8] sm:$0xff]
        %v418 = vld [vmem:[%s1] sm:$0xff]
        %419 = vmatprep.subr.mxu0 0.0
        %420 = vmatpush1.msra.mxu0 %v386
        %421 = vmatprep.subr.mxu0 0.0
        %422 = vmatpush1.msra.mxu0 %v387
        %423 = vmatprep.subr.mxu0 0.0
        %424 = vmatpush1.msra.mxu0 %v388
        %425 = vmatprep.subr.mxu0 0.0
        %426 = vmatpush1.msra.mxu0 %v389
        %427 = vmatprep.subr.mxu0 0.0
        %428 = vmatpush1.msra.mxu0 %v390
        %429 = vmatprep.subr.mxu0 0.0
        %430 = vmatpush1.msra.mxu0 %v391
        %431 = vmatprep.subr.mxu0 0.0
        %432 = vmatpush1.msra.mxu0 %v392
        %433 = vmatprep.subr.mxu0 0.0
        %434 = vmatpush1.msra.mxu0 %v393
        %435 = vmatprep.subr.mxu0 0.0
        %436 = vmatpush1.msra.mxu0 %v394
        %437 = vmatprep.subr.mxu0 0.0
        %438 = vmatpush1.msra.mxu0 %v395
        %439 = vmatprep.subr.mxu0 0.0
        %440 = vmatpush1.msra.mxu0 %v396
        %441 = vmatprep.subr.mxu0 0.0
        %442 = vmatpush1.msra.mxu0 %v397
        %443 = vmatprep.subr.mxu0 0.0
        %444 = vmatpush1.msra.mxu0 %v398
        %445 = vmatprep.subr.mxu0 0.0
        %446 = vmatpush1.msra.mxu0 %v399
        %447 = vmatprep.subr.mxu0 0.0
        %448 = vmatpush1.msra.mxu0 %v400
        %449 = vmatprep.subr.mxu0 0.0
        %450 = vmatpush1.msra.mxu0 %v401
        %451 = vmatprep.subr.mxu0 0.0
        %452 = vmatpush1.msra.mxu0 %v402
        %453 = vmatprep.subr.mxu0 0.0
        %454 = vmatpush1.msra.mxu0 %v403
        %455 = vmatprep.subr.mxu0 0.0
        %456 = vmatpush1.msra.mxu0 %v404
        %457 = vmatprep.subr.mxu0 0.0
        %458 = vmatpush1.msra.mxu0 %v405
        %459 = vmatprep.subr.mxu0 0.0
        %460 = vmatpush1.msra.mxu0 %v406
        %461 = vmatprep.subr.mxu0 0.0
        %462 = vmatpush1.msra.mxu0 %v407
        %463 = vmatprep.subr.mxu0 0.0
        %464 = vmatpush1.msra.mxu0 %v408
        %465 = vmatprep.subr.mxu0 0.0
        %466 = vmatpush1.msra.mxu0 %v409
        %467 = vmatprep.subr.mxu0 0.0
        %468 = vmatpush1.msra.mxu0 %v410
        %469 = vmatprep.subr.mxu0 0.0
        %470 = vmatpush1.msra.mxu0 %v411
        %471 = vmatprep.subr.mxu0 0.0
        %472 = vmatpush1.msra.mxu0 %v412
        %473 = vmatprep.subr.mxu0 0.0
        %474 = vmatpush1.msra.mxu0 %v413
        %475 = vmatprep.subr.mxu0 0.0
        %476 = vmatpush1.msra.mxu0 %v414
        %477 = vmatprep.subr.mxu0 0.0
        %478 = vmatpush1.msra.mxu0 %v415
        %479 = vmatprep.subr.mxu0 0.0
        %480 = vmatpush1.msra.mxu0 %v416
        %481 = vmatprep.subr.mxu0 0.0
        %482 = vmatpush1.msra.mxu0 %v417
        %483 = vmatprep.mubr.f32.mxu0 %v385
        %484 = vmatmul.mubr.f32.gmra.mrb[0].mxu0 %v384
        %v485 = vpop.f32.mrb[0].mxu0
        %v486 = vadd.f32 %v418, %v485
        %v487 = vpop.f32.mrb[0].mxu0
        %488 = vdwg.mxu0
        %v489 = vlaneseq
        %v490 = vand.u32 %v489, 127
        %vm491 = vcmp.lt.s32.totalorder %v490, 5
        %v492 = vsel %vm491, 0.0, -1e+30
        %v493 = vld [vmem:[%s9] sm:$0xff]
        %v494 = vld [vmem:[%s9 + $0x8] sm:$0xff]
        %vm495 = vcmask 261120
        %v496 = vsel %vm495, %v486, 0.0
        %497 = vadd.xlane.f32.xlu0 %v496
        %v498 = vpop.xlane.xlu0 %497
        %v499 = vrcp.pop 32.0
        %v500 = vmul.f32 %v498, %v499
        %v501 = vsub.f32 %v486, %v500
        %v502 = vmul.f32 %v501, %v501
        %v503 = vsel %vm495, %v502, 0.0
        %504 = vadd.xlane.f32.xlu0 %v503
        %v505 = vpop.xlane.xlu0 %504
        %v506 = vmul.f32 %v505, %v499
        %v507 = vadd.f32 %v506, 1e-06
        %v508 = vrsqrt.pop %v507
        %v509 = vmul.f32 %v501, %v508
        %v510 = vlaneseq
        %v511 = vshrl.u32 %v510, 7
        %v512 = vsub.s32 0, %v511
        %v513 = vrot.slane %v493, %v512
        %v514 = vmul.f32 %v509, %v513
        %v515 = vlaneseq
        %v516 = vshrl.u32 %v515, 7
        %v517 = vsub.s32 1, %v516
        %v518 = vrot.slane %v493, %v517
        %v519 = vadd.f32 %v514, %v518
        %v520 = vld [vmem:[%s3] sm:$0xff]
        %v521 = vld [vmem:[%s3 + $0x8] sm:$0xff]
        %v522 = vld [vmem:[%s3 + $0x10] sm:$0xff]
        %v523 = vld [vmem:[%s3 + $0x18] sm:$0xff]
        %v524 = vlaneseq
        %v525 = vshrl.u32 %v524, 7
        %v526 = vsub.s32 2, %v525
        %v527 = vrot.slane %v493, %v526
        %v529 = vsel %vm495, %v519, 0
        %531 = vmatprep.subr.mxu0 0.0
        %532 = vmatpush1.msra.mxu0 %v520
        %533 = vmatprep.subr.mxu0 0.0
        %534 = vmatpush1.msra.mxu0 %v521
        %535 = vmatprep.subr.mxu0 0.0
        %536 = vmatpush1.msra.mxu0 %v522
        %537 = vmatprep.subr.mxu0 0.0
        %538 = vmatpush1.msra.mxu0 %v523
        %539 = vmatprep.subr.mxu0 0.0
        %540 = vmatpush1.msra.mxu0 0.0
        %541 = vmatprep.subr.mxu0 0.0
        %542 = vmatpush1.msra.mxu0 0.0
        %543 = vmatprep.subr.mxu0 0.0
        %544 = vmatpush1.msra.mxu0 0.0
        %545 = vmatprep.subr.mxu0 0.0
        %546 = vmatpush1.msra.mxu0 0.0
        %547 = vmatprep.subr.mxu0 0.0
        %548 = vmatpush1.msra.mxu0 0.0
        %549 = vmatprep.subr.mxu0 0.0
        %550 = vmatpush1.msra.mxu0 0.0
        %551 = vmatprep.subr.mxu0 0.0
        %552 = vmatpush1.msra.mxu0 0.0
        %553 = vmatprep.subr.mxu0 0.0
        %554 = vmatpush1.msra.mxu0 0.0
        %555 = vmatprep.subr.mxu0 0.0
        %556 = vmatpush1.msra.mxu0 0.0
        %557 = vmatprep.subr.mxu0 0.0
        %558 = vmatpush1.msra.mxu0 0.0
        %559 = vmatprep.subr.mxu0 0.0
        %560 = vmatpush1.msra.mxu0 0.0
        %561 = vmatprep.subr.mxu0 0.0
        %562 = vmatpush1.msra.mxu0 0.0
        %563 = vmatprep.subr.mxu0 0.0
        %564 = vmatpush1.msra.mxu0 0.0
        %565 = vmatprep.subr.mxu0 0.0
        %566 = vmatpush1.msra.mxu0 0.0
        %567 = vmatprep.subr.mxu0 0.0
        %568 = vmatpush1.msra.mxu0 0.0
        %569 = vmatprep.subr.mxu0 0.0
        %570 = vmatpush1.msra.mxu0 0.0
        %571 = vmatprep.subr.mxu0 0.0
        %572 = vmatpush1.msra.mxu0 0.0
        %573 = vmatprep.subr.mxu0 0.0
        %574 = vmatpush1.msra.mxu0 0.0
        %575 = vmatprep.subr.mxu0 0.0
        %576 = vmatpush1.msra.mxu0 0.0
        %577 = vmatprep.subr.mxu0 0.0
        %578 = vmatpush1.msra.mxu0 0.0
        %579 = vmatprep.subr.mxu0 0.0
        %580 = vmatpush1.msra.mxu0 0.0
        %581 = vmatprep.subr.mxu0 0.0
        %582 = vmatpush1.msra.mxu0 0.0
        %583 = vmatprep.subr.mxu0 0.0
        %584 = vmatpush1.msra.mxu0 0.0
        %585 = vmatprep.subr.mxu0 0.0
        %586 = vmatpush1.msra.mxu0 0.0
        %587 = vmatprep.subr.mxu0 0.0
        %588 = vmatpush1.msra.mxu0 0.0
        %589 = vmatprep.subr.mxu0 0.0
        %590 = vmatpush1.msra.mxu0 0.0
        %591 = vmatprep.subr.mxu0 0.0
        %592 = vmatpush1.msra.mxu0 0.0
        %593 = vmatprep.subr.mxu0 0.0
        %594 = vmatpush1.msra.mxu0 0.0
        %595 = vmatprep.mubr.f32.mxu0 0.0
        %596 = vmatmul.mubr.f32.gmra.mrb[0].mxu0 %v529
        %v597 = vpop.f32.mrb[0].mxu0
        %v598 = vadd.f32 %v527, %v597
        %v599 = vpop.f32.mrb[0].mxu0
        %600 = vdwg.mxu0
        %602 = vrot.lane.b32.xlu0 %v598, 96
        %v603 = vpop.permute.xlu0 %602
        %vm604 = vcmask 64512
        %v605 = vsel %vm604, %v598, 0
        %v607 = vsel %vm604, %v603, 0
        %609 = vmatprep.subr.mxu0 0.0
        %610 = vmatpush1.xpose.msra.mxu0 %v607
        %611 = vmatprep.subr.mxu0 0.0
        %612 = vmatpush1.xpose.msra.mxu0 0.0
        %613 = vmatprep.subr.mxu0 0.0
        %614 = vmatpush1.xpose.msra.mxu0 0.0
        %615 = vmatprep.subr.mxu0 0.0
        %616 = vmatpush1.xpose.msra.mxu0 0.0
        %617 = vmatprep.subr.mxu0 0.0
        %618 = vmatpush1.xpose.msra.mxu0 0.0
        %619 = vmatprep.subr.mxu0 0.0
        %620 = vmatpush1.xpose.msra.mxu0 0.0
        %621 = vmatprep.subr.mxu0 0.0
        %622 = vmatpush1.xpose.msra.mxu0 0.0
        %623 = vmatprep.subr.mxu0 0.0
        %624 = vmatpush1.xpose.msra.mxu0 0.0
        %625 = vmatprep.subr.mxu0 0.0
        %626 = vmatpush1.xpose.msra.mxu0 0.0
        %627 = vmatprep.subr.mxu0 0.0
        %628 = vmatpush1.xpose.msra.mxu0 0.0
        %629 = vmatprep.subr.mxu0 0.0
        %630 = vmatpush1.xpose.msra.mxu0 0.0
        %631 = vmatprep.subr.mxu0 0.0
        %632 = vmatpush1.xpose.msra.mxu0 0.0
        %633 = vmatprep.subr.mxu0 0.0
        %634 = vmatpush1.xpose.msra.mxu0 0.0
        %635 = vmatprep.subr.mxu0 0.0
        %636 = vmatpush1.xpose.msra.mxu0 0.0
        %637 = vmatprep.subr.mxu0 0.0
        %638 = vmatpush1.xpose.msra.mxu0 0.0
        %639 = vmatprep.subr.mxu0 0.0
        %640 = vmatpush1.xpose.msra.mxu0 0.0
        %641 = vmatprep.subr.mxu0 0.0
        %642 = vmatpush1.xpose.msra.mxu0 0.0
        %643 = vmatprep.subr.mxu0 0.0
        %644 = vmatpush1.xpose.msra.mxu0 0.0
        %645 = vmatprep.subr.mxu0 0.0
        %646 = vmatpush1.xpose.msra.mxu0 0.0
        %647 = vmatprep.subr.mxu0 0.0
        %648 = vmatpush1.xpose.msra.mxu0 0.0
        %649 = vmatprep.subr.mxu0 0.0
        %650 = vmatpush1.xpose.msra.mxu0 0.0
        %651 = vmatprep.subr.mxu0 0.0
        %652 = vmatpush1.xpose.msra.mxu0 0.0
        %653 = vmatprep.subr.mxu0 0.0
        %654 = vmatpush1.xpose.msra.mxu0 0.0
        %655 = vmatprep.subr.mxu0 0.0
        %656 = vmatpush1.xpose.msra.mxu0 0.0
        %657 = vmatprep.subr.mxu0 0.0
        %658 = vmatpush1.xpose.msra.mxu0 0.0
        %659 = vmatprep.subr.mxu0 0.0
        %660 = vmatpush1.xpose.msra.mxu0 0.0
        %661 = vmatprep.subr.mxu0 0.0
        %662 = vmatpush1.xpose.msra.mxu0 0.0
        %663 = vmatprep.subr.mxu0 0.0
        %664 = vmatpush1.xpose.msra.mxu0 0.0
        %665 = vmatprep.subr.mxu0 0.0
        %666 = vmatpush1.xpose.msra.mxu0 0.0
        %667 = vmatprep.subr.mxu0 0.0
        %668 = vmatpush1.xpose.msra.mxu0 0.0
        %669 = vmatprep.subr.mxu0 0.0
        %670 = vmatpush1.xpose.msra.mxu0 0.0
        %671 = vmatprep.subr.mxu0 0.0
        %672 = vmatpush1.xpose.msra.mxu0 0.0
        %673 = vmatprep.mubr.f32.mxu0 0.0
        %674 = vmatmul.mubr.f32.gmra.mrb[0].mxu0 %v605
        %v675 = vpop.f32.mrb[0].mxu0
        %v676 = vadd.f32 0.0, %v675
        %v677 = vpop.f32.mrb[0].mxu0
        %678 = vdwg.mxu0
        %v679 = vmul.f32 %v676, 0.35355338
        %v680 = vadd.f32 %v679, %v492
        %v681 = vsel %vm604, %v680, -inf
        %682 = vmax.xlane.f32.xlu0 %v681
        %v683 = vpop.xlane.xlu0 %682
        %v684 = vsub.f32 %v680, %v683
        %v685 = vmul.f32 %v684, 1.442695
        %v686 = vpow.pop %v685
        %v687 = vsel %vm604, %v686, 0.0
        %688 = vadd.xlane.f32.xlu0 %v687
        %v689 = vpop.xlane.xlu0 %688
        %v690 = vrcp.pop %v689
        %v691 = vmul.f32 %v686, %v690
        %692 = vrot.lane.b32.xlu0 %v598, 64
        %v693 = vpop.permute.xlu0 %692
        %v696 = vsel %vm604, %v691, 0
        %698 = vmatprep.subr.mxu0 0.0
        %699 = vmatpush1.msra.mxu0 %v693
        %700 = vmatprep.subr.mxu0 0.0
        %701 = vmatpush1.msra.mxu0 0.0
        %702 = vmatprep.subr.mxu0 0.0
        %703 = vmatpush1.msra.mxu0 0.0
        %704 = vmatprep.subr.mxu0 0.0
        %705 = vmatpush1.msra.mxu0 0.0
        %706 = vmatprep.subr.mxu0 0.0
        %707 = vmatpush1.msra.mxu0 0.0
        %708 = vmatprep.subr.mxu0 0.0
        %709 = vmatpush1.msra.mxu0 0.0
        %710 = vmatprep.subr.mxu0 0.0
        %711 = vmatpush1.msra.mxu0 0.0
        %712 = vmatprep.subr.mxu0 0.0
        %713 = vmatpush1.msra.mxu0 0.0
        %714 = vmatprep.subr.mxu0 0.0
        %715 = vmatpush1.msra.mxu0 0.0
        %716 = vmatprep.subr.mxu0 0.0
        %717 = vmatpush1.msra.mxu0 0.0
        %718 = vmatprep.subr.mxu0 0.0
        %719 = vmatpush1.msra.mxu0 0.0
        %720 = vmatprep.subr.mxu0 0.0
        %721 = vmatpush1.msra.mxu0 0.0
        %722 = vmatprep.subr.mxu0 0.0
        %723 = vmatpush1.msra.mxu0 0.0
        %724 = vmatprep.subr.mxu0 0.0
        %725 = vmatpush1.msra.mxu0 0.0
        %726 = vmatprep.subr.mxu0 0.0
        %727 = vmatpush1.msra.mxu0 0.0
        %728 = vmatprep.subr.mxu0 0.0
        %729 = vmatpush1.msra.mxu0 0.0
        %730 = vmatprep.subr.mxu0 0.0
        %731 = vmatpush1.msra.mxu0 0.0
        %732 = vmatprep.subr.mxu0 0.0
        %733 = vmatpush1.msra.mxu0 0.0
        %734 = vmatprep.subr.mxu0 0.0
        %735 = vmatpush1.msra.mxu0 0.0
        %736 = vmatprep.subr.mxu0 0.0
        %737 = vmatpush1.msra.mxu0 0.0
        %738 = vmatprep.subr.mxu0 0.0
        %739 = vmatpush1.msra.mxu0 0.0
        %740 = vmatprep.subr.mxu0 0.0
        %741 = vmatpush1.msra.mxu0 0.0
        %742 = vmatprep.subr.mxu0 0.0
        %743 = vmatpush1.msra.mxu0 0.0
        %744 = vmatprep.subr.mxu0 0.0
        %745 = vmatpush1.msra.mxu0 0.0
        %746 = vmatprep.subr.mxu0 0.0
        %747 = vmatpush1.msra.mxu0 0.0
        %748 = vmatprep.subr.mxu0 0.0
        %749 = vmatpush1.msra.mxu0 0.0
        %750 = vmatprep.subr.mxu0 0.0
        %751 = vmatpush1.msra.mxu0 0.0
        %752 = vmatprep.subr.mxu0 0.0
        %753 = vmatpush1.msra.mxu0 0.0
        %754 = vmatprep.subr.mxu0 0.0
        %755 = vmatpush1.msra.mxu0 0.0
        %756 = vmatprep.subr.mxu0 0.0
        %757 = vmatpush1.msra.mxu0 0.0
        %758 = vmatprep.subr.mxu0 0.0
        %759 = vmatpush1.msra.mxu0 0.0
        %760 = vmatprep.subr.mxu0 0.0
        %761 = vmatpush1.msra.mxu0 0.0
        %762 = vmatprep.mubr.f32.mxu0 0.0
        %763 = vmatmul.mubr.f32.gmra.mrb[0].mxu0 %v696
        %v764 = vpop.f32.mrb[0].mxu0
        %v765 = vadd.f32 0.0, %v764
        %v766 = vpop.f32.mrb[0].mxu0
        %767 = vdwg.mxu0
        %768 = vst.msk [vmem:[#allocation2] sm:$0xff] %vm604, %v765
        %769 = vrot.lane.b32.xlu0 %v598, 120
        %v770 = vpop.permute.xlu0 %769
        %771 = vrot.lane.b32.xlu0 %v598, 88
        %v772 = vpop.permute.xlu0 %771
        %v773 = vsel %vm604, %v770, 0
        %v775 = vsel %vm604, %v772, 0
        %777 = vmatprep.subr.mxu0 0.0
        %778 = vmatpush1.xpose.msra.mxu0 %v775
        %779 = vmatprep.subr.mxu0 0.0
        %780 = vmatpush1.xpose.msra.mxu0 0.0
        %781 = vmatprep.subr.mxu0 0.0
        %782 = vmatpush1.xpose.msra.mxu0 0.0
        %783 = vmatprep.subr.mxu0 0.0
        %784 = vmatpush1.xpose.msra.mxu0 0.0
        %785 = vmatprep.subr.mxu0 0.0
        %786 = vmatpush1.xpose.msra.mxu0 0.0
        %787 = vmatprep.subr.mxu0 0.0
        %788 = vmatpush1.xpose.msra.mxu0 0.0
        %789 = vmatprep.subr.mxu0 0.0
        %790 = vmatpush1.xpose.msra.mxu0 0.0
        %791 = vmatprep.subr.mxu0 0.0
        %792 = vmatpush1.xpose.msra.mxu0 0.0
        %793 = vmatprep.subr.mxu0 0.0
        %794 = vmatpush1.xpose.msra.mxu0 0.0
        %795 = vmatprep.subr.mxu0 0.0
        %796 = vmatpush1.xpose.msra.mxu0 0.0
        %797 = vmatprep.subr.mxu0 0.0
        %798 = vmatpush1.xpose.msra.mxu0 0.0
        %799 = vmatprep.subr.mxu0 0.0
        %800 = vmatpush1.xpose.msra.mxu0 0.0
        %801 = vmatprep.subr.mxu0 0.0
        %802 = vmatpush1.xpose.msra.mxu0 0.0
        %803 = vmatprep.subr.mxu0 0.0
        %804 = vmatpush1.xpose.msra.mxu0 0.0
        %805 = vmatprep.subr.mxu0 0.0
        %806 = vmatpush1.xpose.msra.mxu0 0.0
        %807 = vmatprep.subr.mxu0 0.0
        %808 = vmatpush1.xpose.msra.mxu0 0.0
        %809 = vmatprep.subr.mxu0 0.0
        %810 = vmatpush1.xpose.msra.mxu0 0.0
        %811 = vmatprep.subr.mxu0 0.0
        %812 = vmatpush1.xpose.msra.mxu0 0.0
        %813 = vmatprep.subr.mxu0 0.0
        %814 = vmatpush1.xpose.msra.mxu0 0.0
        %815 = vmatprep.subr.mxu0 0.0
        %816 = vmatpush1.xpose.msra.mxu0 0.0
        %817 = vmatprep.subr.mxu0 0.0
        %818 = vmatpush1.xpose.msra.mxu0 0.0
        %819 = vmatprep.subr.mxu0 0.0
        %820 = vmatpush1.xpose.msra.mxu0 0.0
        %821 = vmatprep.subr.mxu0 0.0
        %822 = vmatpush1.xpose.msra.mxu0 0.0
        %823 = vmatprep.subr.mxu0 0.0
        %824 = vmatpush1.xpose.msra.mxu0 0.0
        %825 = vmatprep.subr.mxu0 0.0
        %826 = vmatpush1.xpose.msra.mxu0 0.0
        %827 = vmatprep.subr.mxu0 0.0
        %828 = vmatpush1.xpose.msra.mxu0 0.0
        %829 = vmatprep.subr.mxu0 0.0
        %830 = vmatpush1.xpose.msra.mxu0 0.0
        %831 = vmatprep.subr.mxu0 0.0
        %832 = vmatpush1.xpose.msra.mxu0 0.0
        %833 = vmatprep.subr.mxu0 0.0
        %834 = vmatpush1.xpose.msra.mxu0 0.0
        %835 = vmatprep.subr.mxu0 0.0
        %836 = vmatpush1.xpose.msra.mxu0 0.0
        %837 = vmatprep.subr.mxu0 0.0
        %838 = vmatpush1.xpose.msra.mxu0 0.0
        %839 = vmatprep.subr.mxu0 0.0
        %840 = vmatpush1.xpose.msra.mxu0 0.0
        %841 = vmatprep.mubr.f32.mxu0 0.0
        %842 = vmatmul.mubr.f32.gmra.mrb[0].mxu0 %v773
        %v843 = vpop.f32.mrb[0].mxu0
        %v844 = vadd.f32 0.0, %v843
        %v845 = vpop.f32.mrb[0].mxu0
        %846 = vdwg.mxu0
        %v847 = vmul.f32 %v844, 0.35355338
        %v848 = vadd.f32 %v847, %v492
        %v849 = vsel %vm604, %v848, -inf
        %850 = vmax.xlane.f32.xlu0 %v849
        %v851 = vpop.xlane.xlu0 %850
        %v852 = vsub.f32 %v848, %v851
        %v853 = vmul.f32 %v852, 1.442695
        %v854 = vpow.pop %v853
        %v855 = vsel %vm604, %v854, 0.0
        %856 = vadd.xlane.f32.xlu0 %v855
        %v857 = vpop.xlane.xlu0 %856
        %v858 = vrcp.pop %v857
        %v859 = vmul.f32 %v854, %v858
        %860 = vrot.lane.b32.xlu0 %v598, 56
        %v861 = vpop.permute.xlu0 %860
        %v864 = vsel %vm604, %v859, 0
        %866 = vmatprep.subr.mxu0 0.0
        %867 = vmatpush1.msra.mxu0 %v861
        %868 = vmatprep.subr.mxu0 0.0
        %869 = vmatpush1.msra.mxu0 0.0
        %870 = vmatprep.subr.mxu0 0.0
        %871 = vmatpush1.msra.mxu0 0.0
        %872 = vmatprep.subr.mxu0 0.0
        %873 = vmatpush1.msra.mxu0 0.0
        %874 = vmatprep.subr.mxu0 0.0
        %875 = vmatpush1.msra.mxu0 0.0
        %876 = vmatprep.subr.mxu0 0.0
        %877 = vmatpush1.msra.mxu0 0.0
        %878 = vmatprep.subr.mxu0 0.0
        %879 = vmatpush1.msra.mxu0 0.0
        %880 = vmatprep.subr.mxu0 0.0
        %881 = vmatpush1.msra.mxu0 0.0
        %882 = vmatprep.subr.mxu0 0.0
        %883 = vmatpush1.msra.mxu0 0.0
        %884 = vmatprep.subr.mxu0 0.0
        %885 = vmatpush1.msra.mxu0 0.0
        %886 = vmatprep.subr.mxu0 0.0
        %887 = vmatpush1.msra.mxu0 0.0
        %888 = vmatprep.subr.mxu0 0.0
        %889 = vmatpush1.msra.mxu0 0.0
        %890 = vmatprep.subr.mxu0 0.0
        %891 = vmatpush1.msra.mxu0 0.0
        %892 = vmatprep.subr.mxu0 0.0
        %893 = vmatpush1.msra.mxu0 0.0
        %894 = vmatprep.subr.mxu0 0.0
        %895 = vmatpush1.msra.mxu0 0.0
        %896 = vmatprep.subr.mxu0 0.0
        %897 = vmatpush1.msra.mxu0 0.0
        %898 = vmatprep.subr.mxu0 0.0
        %899 = vmatpush1.msra.mxu0 0.0
        %900 = vmatprep.subr.mxu0 0.0
        %901 = vmatpush1.msra.mxu0 0.0
        %902 = vmatprep.subr.mxu0 0.0
        %903 = vmatpush1.msra.mxu0 0.0
        %904 = vmatprep.subr.mxu0 0.0
        %905 = vmatpush1.msra.mxu0 0.0
        %906 = vmatprep.subr.mxu0 0.0
        %907 = vmatpush1.msra.mxu0 0.0
        %908 = vmatprep.subr.mxu0 0.0
        %909 = vmatpush1.msra.mxu0 0.0
        %910 = vmatprep.subr.mxu0 0.0
        %911 = vmatpush1.msra.mxu0 0.0
        %912 = vmatprep.subr.mxu0 0.0
        %913 = vmatpush1.msra.mxu0 0.0
        %914 = vmatprep.subr.mxu0 0.0
        %915 = vmatpush1.msra.mxu0 0.0
        %916 = vmatprep.subr.mxu0 0.0
        %917 = vmatpush1.msra.mxu0 0.0
        %918 = vmatprep.subr.mxu0 0.0
        %919 = vmatpush1.msra.mxu0 0.0
        %920 = vmatprep.subr.mxu0 0.0
        %921 = vmatpush1.msra.mxu0 0.0
        %922 = vmatprep.subr.mxu0 0.0
        %923 = vmatpush1.msra.mxu0 0.0
        %924 = vmatprep.subr.mxu0 0.0
        %925 = vmatpush1.msra.mxu0 0.0
        %926 = vmatprep.subr.mxu0 0.0
        %927 = vmatpush1.msra.mxu0 0.0
        %928 = vmatprep.subr.mxu0 0.0
        %929 = vmatpush1.msra.mxu0 0.0
        %930 = vmatprep.mubr.f32.mxu0 0.0
        %931 = vmatmul.mubr.f32.gmra.mrb[0].mxu0 %v864
        %v932 = vpop.f32.mrb[0].mxu0
        %v933 = vadd.f32 0.0, %v932
        %v934 = vpop.f32.mrb[0].mxu0
        %935 = vdwg.mxu0
        %937 = vrot.lane.b32.xlu0 %v933, 8
        %v938 = vpop.permute.xlu0 %937
        %vm940 = vcmask 130112
        %941 = vst.msk [vmem:[#allocation2] sm:$0xff] %vm940, %v938
        %942 = vrot.lane.b32.xlu0 %v598, 112
        %v943 = vpop.permute.xlu0 %942
        %944 = vrot.lane.b32.xlu0 %v598, 80
        %v945 = vpop.permute.xlu0 %944
        %v946 = vsel %vm604, %v943, 0
        %v948 = vsel %vm604, %v945, 0
        %950 = vmatprep.subr.mxu0 0.0
        %951 = vmatpush1.xpose.msra.mxu0 %v948
        %952 = vmatprep.subr.mxu0 0.0
        %953 = vmatpush1.xpose.msra.mxu0 0.0
        %954 = vmatprep.subr.mxu0 0.0
        %955 = vmatpush1.xpose.msra.mxu0 0.0
        %956 = vmatprep.subr.mxu0 0.0
        %957 = vmatpush1.xpose.msra.mxu0 0.0
        %958 = vmatprep.subr.mxu0 0.0
        %959 = vmatpush1.xpose.msra.mxu0 0.0
        %960 = vmatprep.subr.mxu0 0.0
        %961 = vmatpush1.xpose.msra.mxu0 0.0
        %962 = vmatprep.subr.mxu0 0.0
        %963 = vmatpush1.xpose.msra.mxu0 0.0
        %964 = vmatprep.subr.mxu0 0.0
        %965 = vmatpush1.xpose.msra.mxu0 0.0
        %966 = vmatprep.subr.mxu0 0.0
        %967 = vmatpush1.xpose.msra.mxu0 0.0
        %968 = vmatprep.subr.mxu0 0.0
        %969 = vmatpush1.xpose.msra.mxu0 0.0
        %970 = vmatprep.subr.mxu0 0.0
        %971 = vmatpush1.xpose.msra.mxu0 0.0
        %972 = vmatprep.subr.mxu0 0.0
        %973 = vmatpush1.xpose.msra.mxu0 0.0
        %974 = vmatprep.subr.mxu0 0.0
        %975 = vmatpush1.xpose.msra.mxu0 0.0
        %976 = vmatprep.subr.mxu0 0.0
        %977 = vmatpush1.xpose.msra.mxu0 0.0
        %978 = vmatprep.subr.mxu0 0.0
        %979 = vmatpush1.xpose.msra.mxu0 0.0
        %980 = vmatprep.subr.mxu0 0.0
        %981 = vmatpush1.xpose.msra.mxu0 0.0
        %982 = vmatprep.subr.mxu0 0.0
        %983 = vmatpush1.xpose.msra.mxu0 0.0
        %984 = vmatprep.subr.mxu0 0.0
        %985 = vmatpush1.xpose.msra.mxu0 0.0
        %986 = vmatprep.subr.mxu0 0.0
        %987 = vmatpush1.xpose.msra.mxu0 0.0
        %988 = vmatprep.subr.mxu0 0.0
        %989 = vmatpush1.xpose.msra.mxu0 0.0
        %990 = vmatprep.subr.mxu0 0.0
        %991 = vmatpush1.xpose.msra.mxu0 0.0
        %992 = vmatprep.subr.mxu0 0.0
        %993 = vmatpush1.xpose.msra.mxu0 0.0
        %994 = vmatprep.subr.mxu0 0.0
        %995 = vmatpush1.xpose.msra.mxu0 0.0
        %996 = vmatprep.subr.mxu0 0.0
        %997 = vmatpush1.xpose.msra.mxu0 0.0
        %998 = vmatprep.subr.mxu0 0.0
        %999 = vmatpush1.xpose.msra.mxu0 0.0
        %1000 = vmatprep.subr.mxu0 0.0
        %1001 = vmatpush1.xpose.msra.mxu0 0.0
        %1002 = vmatprep.subr.mxu0 0.0
        %1003 = vmatpush1.xpose.msra.mxu0 0.0
        %1004 = vmatprep.subr.mxu0 0.0
        %1005 = vmatpush1.xpose.msra.mxu0 0.0
        %1006 = vmatprep.subr.mxu0 0.0
        %1007 = vmatpush1.xpose.msra.mxu0 0.0
        %1008 = vmatprep.subr.mxu0 0.0
        %1009 = vmatpush1.xpose.msra.mxu0 0.0
        %1010 = vmatprep.subr.mxu0 0.0
        %1011 = vmatpush1.xpose.msra.mxu0 0.0
        %1012 = vmatprep.subr.mxu0 0.0
        %1013 = vmatpush1.xpose.msra.mxu0 0.0
        %1014 = vmatprep.mubr.f32.mxu0 0.0
        %1015 = vmatmul.mubr.f32.gmra.mrb[0].mxu0 %v946
        %v1016 = vpop.f32.mrb[0].mxu0
        %v1017 = vadd.f32 0.0, %v1016
        %v1018 = vpop.f32.mrb[0].mxu0
        %1019 = vdwg.mxu0
        %v1020 = vmul.f32 %v1017, 0.35355338
        %v1021 = vadd.f32 %v1020, %v492
        %v1022 = vsel %vm604, %v1021, -inf
        %1023 = vmax.xlane.f32.xlu0 %v1022
        %v1024 = vpop.xlane.xlu0 %1023
        %v1025 = vsub.f32 %v1021, %v1024
        %v1026 = vmul.f32 %v1025, 1.442695
        %v1027 = vpow.pop %v1026
        %v1028 = vsel %vm604, %v1027, 0.0
        %1029 = vadd.xlane.f32.xlu0 %v1028
        %v1030 = vpop.xlane.xlu0 %1029
        %v1031 = vrcp.pop %v1030
        %v1032 = vmul.f32 %v1027, %v1031
        %1033 = vrot.lane.b32.xlu0 %v598, 48
        %v1034 = vpop.permute.xlu0 %1033
        %v1037 = vsel %vm604, %v1032, 0
        %1039 = vmatprep.subr.mxu0 0.0
        %1040 = vmatpush1.msra.mxu0 %v1034
        %1041 = vmatprep.subr.mxu0 0.0
        %1042 = vmatpush1.msra.mxu0 0.0
        %1043 = vmatprep.subr.mxu0 0.0
        %1044 = vmatpush1.msra.mxu0 0.0
        %1045 = vmatprep.subr.mxu0 0.0
        %1046 = vmatpush1.msra.mxu0 0.0
        %1047 = vmatprep.subr.mxu0 0.0
        %1048 = vmatpush1.msra.mxu0 0.0
        %1049 = vmatprep.subr.mxu0 0.0
        %1050 = vmatpush1.msra.mxu0 0.0
        %1051 = vmatprep.subr.mxu0 0.0
        %1052 = vmatpush1.msra.mxu0 0.0
        %1053 = vmatprep.subr.mxu0 0.0
        %1054 = vmatpush1.msra.mxu0 0.0
        %1055 = vmatprep.subr.mxu0 0.0
        %1056 = vmatpush1.msra.mxu0 0.0
        %1057 = vmatprep.subr.mxu0 0.0
        %1058 = vmatpush1.msra.mxu0 0.0
        %1059 = vmatprep.subr.mxu0 0.0
        %1060 = vmatpush1.msra.mxu0 0.0
        %1061 = vmatprep.subr.mxu0 0.0
        %1062 = vmatpush1.msra.mxu0 0.0
        %1063 = vmatprep.subr.mxu0 0.0
        %1064 = vmatpush1.msra.mxu0 0.0
        %1065 = vmatprep.subr.mxu0 0.0
        %1066 = vmatpush1.msra.mxu0 0.0
        %1067 = vmatprep.subr.mxu0 0.0
        %1068 = vmatpush1.msra.mxu0 0.0
        %1069 = vmatprep.subr.mxu0 0.0
        %1070 = vmatpush1.msra.mxu0 0.0
        %1071 = vmatprep.subr.mxu0 0.0
        %1072 = vmatpush1.msra.mxu0 0.0
        %1073 = vmatprep.subr.mxu0 0.0
        %1074 = vmatpush1.msra.mxu0 0.0
        %1075 = vmatprep.subr.mxu0 0.0
        %1076 = vmatpush1.msra.mxu0 0.0
        %1077 = vmatprep.subr.mxu0 0.0
        %1078 = vmatpush1.msra.mxu0 0.0
        %1079 = vmatprep.subr.mxu0 0.0
        %1080 = vmatpush1.msra.mxu0 0.0
        %1081 = vmatprep.subr.mxu0 0.0
        %1082 = vmatpush1.msra.mxu0 0.0
        %1083 = vmatprep.subr.mxu0 0.0
        %1084 = vmatpush1.msra.mxu0 0.0
        %1085 = vmatprep.subr.mxu0 0.0
        %1086 = vmatpush1.msra.mxu0 0.0
        %1087 = vmatprep.subr.mxu0 0.0
        %1088 = vmatpush1.msra.mxu0 0.0
        %1089 = vmatprep.subr.mxu0 0.0
        %1090 = vmatpush1.msra.mxu0 0.0
        %1091 = vmatprep.subr.mxu0 0.0
        %1092 = vmatpush1.msra.mxu0 0.0
        %1093 = vmatprep.subr.mxu0 0.0
        %1094 = vmatpush1.msra.mxu0 0.0
        %1095 = vmatprep.subr.mxu0 0.0
        %1096 = vmatpush1.msra.mxu0 0.0
        %1097 = vmatprep.subr.mxu0 0.0
        %1098 = vmatpush1.msra.mxu0 0.0
        %1099 = vmatprep.subr.mxu0 0.0
        %1100 = vmatpush1.msra.mxu0 0.0
        %1101 = vmatprep.subr.mxu0 0.0
        %1102 = vmatpush1.msra.mxu0 0.0
        %1103 = vmatprep.mubr.f32.mxu0 0.0
        %1104 = vmatmul.mubr.f32.gmra.mrb[0].mxu0 %v1037
        %v1105 = vpop.f32.mrb[0].mxu0
        %v1106 = vadd.f32 0.0, %v1105
        %v1107 = vpop.f32.mrb[0].mxu0
        %1108 = vdwg.mxu0
        %1110 = vrot.lane.b32.xlu0 %v1106, 16
        %v1111 = vpop.permute.xlu0 %1110
        %vm1113 = vcmask 195712
        %1114 = vst.msk [vmem:[#allocation2] sm:$0xff] %vm1113, %v1111
        %1115 = vrot.lane.b32.xlu0 %v598, 104
        %v1116 = vpop.permute.xlu0 %1115
        %1117 = vrot.lane.b32.xlu0 %v598, 72
        %v1118 = vpop.permute.xlu0 %1117
        %v1119 = vsel %vm604, %v1116, 0
        %v1121 = vsel %vm604, %v1118, 0
        %1123 = vmatprep.subr.mxu0 0.0
        %1124 = vmatpush1.xpose.msra.mxu0 %v1121
        %1125 = vmatprep.subr.mxu0 0.0
        %1126 = vmatpush1.xpose.msra.mxu0 0.0
        %1127 = vmatprep.subr.mxu0 0.0
        %1128 = vmatpush1.xpose.msra.mxu0 0.0
        %1129 = vmatprep.subr.mxu0 0.0
        %1130 = vmatpush1.xpose.msra.mxu0 0.0
        %1131 = vmatprep.subr.mxu0 0.0
        %1132 = vmatpush1.xpose.msra.mxu0 0.0
        %1133 = vmatprep.subr.mxu0 0.0
        %1134 = vmatpush1.xpose.msra.mxu0 0.0
        %1135 = vmatprep.subr.mxu0 0.0
        %1136 = vmatpush1.xpose.msra.mxu0 0.0
        %1137 = vmatprep.subr.mxu0 0.0
        %1138 = vmatpush1.xpose.msra.mxu0 0.0
        %1139 = vmatprep.subr.mxu0 0.0
        %1140 = vmatpush1.xpose.msra.mxu0 0.0
        %1141 = vmatprep.subr.mxu0 0.0
        %1142 = vmatpush1.xpose.msra.mxu0 0.0
        %1143 = vmatprep.subr.mxu0 0.0
        %1144 = vmatpush1.xpose.msra.mxu0 0.0
        %1145 = vmatprep.subr.mxu0 0.0
        %1146 = vmatpush1.xpose.msra.mxu0 0.0
        %1147 = vmatprep.subr.mxu0 0.0
        %1148 = vmatpush1.xpose.msra.mxu0 0.0
        %1149 = vmatprep.subr.mxu0 0.0
        %1150 = vmatpush1.xpose.msra.mxu0 0.0
        %1151 = vmatprep.subr.mxu0 0.0
        %1152 = vmatpush1.xpose.msra.mxu0 0.0
        %1153 = vmatprep.subr.mxu0 0.0
        %1154 = vmatpush1.xpose.msra.mxu0 0.0
        %1155 = vmatprep.subr.mxu0 0.0
        %1156 = vmatpush1.xpose.msra.mxu0 0.0
        %1157 = vmatprep.subr.mxu0 0.0
        %1158 = vmatpush1.xpose.msra.mxu0 0.0
        %1159 = vmatprep.subr.mxu0 0.0
        %1160 = vmatpush1.xpose.msra.mxu0 0.0
        %1161 = vmatprep.subr.mxu0 0.0
        %1162 = vmatpush1.xpose.msra.mxu0 0.0
        %1163 = vmatprep.subr.mxu0 0.0
        %1164 = vmatpush1.xpose.msra.mxu0 0.0
        %1165 = vmatprep.subr.mxu0 0.0
        %1166 = vmatpush1.xpose.msra.mxu0 0.0
        %1167 = vmatprep.subr.mxu0 0.0
        %1168 = vmatpush1.xpose.msra.mxu0 0.0
        %1169 = vmatprep.subr.mxu0 0.0
        %1170 = vmatpush1.xpose.msra.mxu0 0.0
        %1171 = vmatprep.subr.mxu0 0.0
        %1172 = vmatpush1.xpose.msra.mxu0 0.0
        %1173 = vmatprep.subr.mxu0 0.0
        %1174 = vmatpush1.xpose.msra.mxu0 0.0
        %1175 = vmatprep.subr.mxu0 0.0
        %1176 = vmatpush1.xpose.msra.mxu0 0.0
        %1177 = vmatprep.subr.mxu0 0.0
        %1178 = vmatpush1.xpose.msra.mxu0 0.0
        %1179 = vmatprep.subr.mxu0 0.0
        %1180 = vmatpush1.xpose.msra.mxu0 0.0
        %1181 = vmatprep.subr.mxu0 0.0
        %1182 = vmatpush1.xpose.msra.mxu0 0.0
        %1183 = vmatprep.subr.mxu0 0.0
        %1184 = vmatpush1.xpose.msra.mxu0 0.0
        %1185 = vmatprep.subr.mxu0 0.0
        %1186 = vmatpush1.xpose.msra.mxu0 0.0
        %1187 = vmatprep.mubr.f32.mxu0 0.0
        %1188 = vmatmul.mubr.f32.gmra.mrb[0].mxu0 %v1119
        %v1189 = vpop.f32.mrb[0].mxu0
        %v1190 = vadd.f32 0.0, %v1189
        %v1191 = vpop.f32.mrb[0].mxu0
        %1192 = vdwg.mxu0
        %v1193 = vmul.f32 %v1190, 0.35355338
        %v1194 = vadd.f32 %v1193, %v492
        %v1195 = vsel %vm604, %v1194, -inf
        %1196 = vmax.xlane.f32.xlu0 %v1195
        %v1197 = vpop.xlane.xlu0 %1196
        %v1198 = vsub.f32 %v1194, %v1197
        %v1199 = vmul.f32 %v1198, 1.442695
        %v1200 = vpow.pop %v1199
        %v1201 = vsel %vm604, %v1200, 0.0
        %1202 = vadd.xlane.f32.xlu0 %v1201
        %v1203 = vpop.xlane.xlu0 %1202
        %v1204 = vrcp.pop %v1203
        %v1205 = vmul.f32 %v1200, %v1204
        %1206 = vrot.lane.b32.xlu0 %v598, 40
        %v1207 = vpop.permute.xlu0 %1206
        %v1210 = vsel %vm604, %v1205, 0
        %1212 = vmatprep.subr.mxu0 0.0
        %1213 = vmatpush1.msra.mxu0 %v1207
        %1214 = vmatprep.subr.mxu0 0.0
        %1215 = vmatpush1.msra.mxu0 0.0
        %1216 = vmatprep.subr.mxu0 0.0
        %1217 = vmatpush1.msra.mxu0 0.0
        %1218 = vmatprep.subr.mxu0 0.0
        %1219 = vmatpush1.msra.mxu0 0.0
        %1220 = vmatprep.subr.mxu0 0.0
        %1221 = vmatpush1.msra.mxu0 0.0
        %1222 = vmatprep.subr.mxu0 0.0
        %1223 = vmatpush1.msra.mxu0 0.0
        %1224 = vmatprep.subr.mxu0 0.0
        %1225 = vmatpush1.msra.mxu0 0.0
        %1226 = vmatprep.subr.mxu0 0.0
        %1227 = vmatpush1.msra.mxu0 0.0
        %1228 = vmatprep.subr.mxu0 0.0
        %1229 = vmatpush1.msra.mxu0 0.0
        %1230 = vmatprep.subr.mxu0 0.0
        %1231 = vmatpush1.msra.mxu0 0.0
        %1232 = vmatprep.subr.mxu0 0.0
        %1233 = vmatpush1.msra.mxu0 0.0
        %1234 = vmatprep.subr.mxu0 0.0
        %1235 = vmatpush1.msra.mxu0 0.0
        %1236 = vmatprep.subr.mxu0 0.0
        %1237 = vmatpush1.msra.mxu0 0.0
        %1238 = vmatprep.subr.mxu0 0.0
        %1239 = vmatpush1.msra.mxu0 0.0
        %1240 = vmatprep.subr.mxu0 0.0
        %1241 = vmatpush1.msra.mxu0 0.0
        %1242 = vmatprep.subr.mxu0 0.0
        %1243 = vmatpush1.msra.mxu0 0.0
        %1244 = vmatprep.subr.mxu0 0.0
        %1245 = vmatpush1.msra.mxu0 0.0
        %1246 = vmatprep.subr.mxu0 0.0
        %1247 = vmatpush1.msra.mxu0 0.0
        %1248 = vmatprep.subr.mxu0 0.0
        %1249 = vmatpush1.msra.mxu0 0.0
        %1250 = vmatprep.subr.mxu0 0.0
        %1251 = vmatpush1.msra.mxu0 0.0
        %1252 = vmatprep.subr.mxu0 0.0
        %1253 = vmatpush1.msra.mxu0 0.0
        %1254 = vmatprep.subr.mxu0 0.0
        %1255 = vmatpush1.msra.mxu0 0.0
        %1256 = vmatprep.subr.mxu0 0.0
        %1257 = vmatpush1.msra.mxu0 0.0
        %1258 = vmatprep.subr.mxu0 0.0
        %1259 = vmatpush1.msra.mxu0 0.0
        %1260 = vmatprep.subr.mxu0 0.0
        %1261 = vmatpush1.msra.mxu0 0.0
        %1262 = vmatprep.subr.mxu0 0.0
        %1263 = vmatpush1.msra.mxu0 0.0
        %1264 = vmatprep.subr.mxu0 0.0
        %1265 = vmatpush1.msra.mxu0 0.0
        %1266 = vmatprep.subr.mxu0 0.0
        %1267 = vmatpush1.msra.mxu0 0.0
        %1268 = vmatprep.subr.mxu0 0.0
        %1269 = vmatpush1.msra.mxu0 0.0
        %1270 = vmatprep.subr.mxu0 0.0
        %1271 = vmatpush1.msra.mxu0 0.0
        %1272 = vmatprep.subr.mxu0 0.0
        %1273 = vmatpush1.msra.mxu0 0.0
        %1274 = vmatprep.subr.mxu0 0.0
        %1275 = vmatpush1.msra.mxu0 0.0
        %1276 = vmatprep.mubr.f32.mxu0 0.0
        %1277 = vmatmul.mubr.f32.gmra.mrb[0].mxu0 %v1210
        %v1278 = vpop.f32.mrb[0].mxu0
        %v1279 = vadd.f32 0.0, %v1278
        %v1280 = vpop.f32.mrb[0].mxu0
        %1281 = vdwg.mxu0
        %1283 = vrot.lane.b32.xlu0 %v1279, 24
        %v1284 = vpop.permute.xlu0 %1283
        %vm1286 = vcmask 261312
        %1287 = vst.msk [vmem:[#allocation2] sm:$0xff] %vm1286, %v1284
        %v1288 = vld [vmem:[#allocation2] sm:$0xff]
        %v1289 = vld [vmem:[%s4] sm:$0xff]
        %v1290 = vld [vmem:[%s4 + $0x8] sm:$0xff]
        %v1291 = vld [vmem:[%s4 + $0x10] sm:$0xff]
        %v1292 = vld [vmem:[%s4 + $0x18] sm:$0xff]
        %v1294 = vsel %vm495, %v1288, 0
        %1296 = vmatprep.subr.mxu0 0.0
        %1297 = vmatpush1.msra.mxu0 %v1289
        %1298 = vmatprep.subr.mxu0 0.0
        %1299 = vmatpush1.msra.mxu0 %v1290
        %1300 = vmatprep.subr.mxu0 0.0
        %1301 = vmatpush1.msra.mxu0 %v1291
        %1302 = vmatprep.subr.mxu0 0.0
        %1303 = vmatpush1.msra.mxu0 %v1292
        %1304 = vmatprep.subr.mxu0 0.0
        %1305 = vmatpush1.msra.mxu0 0.0
        %1306 = vmatprep.subr.mxu0 0.0
        %1307 = vmatpush1.msra.mxu0 0.0
        %1308 = vmatprep.subr.mxu0 0.0
        %1309 = vmatpush1.msra.mxu0 0.0
        %1310 = vmatprep.subr.mxu0 0.0
        %1311 = vmatpush1.msra.mxu0 0.0
        %1312 = vmatprep.subr.mxu0 0.0
        %1313 = vmatpush1.msra.mxu0 0.0
        %1314 = vmatprep.subr.mxu0 0.0
        %1315 = vmatpush1.msra.mxu0 0.0
        %1316 = vmatprep.subr.mxu0 0.0
        %1317 = vmatpush1.msra.mxu0 0.0
        %1318 = vmatprep.subr.mxu0 0.0
        %1319 = vmatpush1.msra.mxu0 0.0
        %1320 = vmatprep.subr.mxu0 0.0
        %1321 = vmatpush1.msra.mxu0 0.0
        %1322 = vmatprep.subr.mxu0 0.0
        %1323 = vmatpush1.msra.mxu0 0.0
        %1324 = vmatprep.subr.mxu0 0.0
        %1325 = vmatpush1.msra.mxu0 0.0
        %1326 = vmatprep.subr.mxu0 0.0
        %1327 = vmatpush1.msra.mxu0 0.0
        %1328 = vmatprep.subr.mxu0 0.0
        %1329 = vmatpush1.msra.mxu0 0.0
        %1330 = vmatprep.subr.mxu0 0.0
        %1331 = vmatpush1.msra.mxu0 0.0
        %1332 = vmatprep.subr.mxu0 0.0
        %1333 = vmatpush1.msra.mxu0 0.0
        %1334 = vmatprep.subr.mxu0 0.0
        %1335 = vmatpush1.msra.mxu0 0.0
        %1336 = vmatprep.subr.mxu0 0.0
        %1337 = vmatpush1.msra.mxu0 0.0
        %1338 = vmatprep.subr.mxu0 0.0
        %1339 = vmatpush1.msra.mxu0 0.0
        %1340 = vmatprep.subr.mxu0 0.0
        %1341 = vmatpush1.msra.mxu0 0.0
        %1342 = vmatprep.subr.mxu0 0.0
        %1343 = vmatpush1.msra.mxu0 0.0
        %1344 = vmatprep.subr.mxu0 0.0
        %1345 = vmatpush1.msra.mxu0 0.0
        %1346 = vmatprep.subr.mxu0 0.0
        %1347 = vmatpush1.msra.mxu0 0.0
        %1348 = vmatprep.subr.mxu0 0.0
        %1349 = vmatpush1.msra.mxu0 0.0
        %1350 = vmatprep.subr.mxu0 0.0
        %1351 = vmatpush1.msra.mxu0 0.0
        %1352 = vmatprep.subr.mxu0 0.0
        %1353 = vmatpush1.msra.mxu0 0.0
        %1354 = vmatprep.subr.mxu0 0.0
        %1355 = vmatpush1.msra.mxu0 0.0
        %1356 = vmatprep.subr.mxu0 0.0
        %1357 = vmatpush1.msra.mxu0 0.0
        %1358 = vmatprep.subr.mxu0 0.0
        %1359 = vmatpush1.msra.mxu0 0.0
        %1360 = vmatprep.mubr.f32.mxu0 0.0
        %1361 = vmatmul.mubr.f32.gmra.mrb[0].mxu0 %v1294
        %v1362 = vpop.f32.mrb[0].mxu0
        %v1363 = vadd.f32 0.0, %v1362
        %v1364 = vpop.f32.mrb[0].mxu0
        %1365 = vdwg.mxu0
        %v1366 = vadd.f32 %v486, %v1363
        %v1367 = vlaneseq
        %v1368 = vshrl.u32 %v1367, 7
        %v1369 = vsub.s32 3, %v1368
        %v1370 = vrot.slane %v493, %v1369
        %v1371 = vadd.f32 %v1366, %v1370
        %v1372 = vsel %vm495, %v1371, 0.0
        %1373 = vadd.xlane.f32.xlu0 %v1372
        %v1374 = vpop.xlane.xlu0 %1373
        %v1375 = vmul.f32 %v1374, %v499
        %v1376 = vsub.f32 %v1371, %v1375
        %v1377 = vmul.f32 %v1376, %v1376
        %v1378 = vsel %vm495, %v1377, 0.0
        %1379 = vadd.xlane.f32.xlu0 %v1378
        %v1380 = vpop.xlane.xlu0 %1379
        %v1381 = vmul.f32 %v1380, %v499
        %v1382 = vadd.f32 %v1381, 1e-05
        %v1383 = vrsqrt.pop %v1382
        %v1384 = vmul.f32 %v1376, %v1383
        %v1385 = vlaneseq
        %v1386 = vshrl.u32 %v1385, 7
        %v1387 = vsub.s32 4, %v1386
        %v1388 = vrot.slane %v493, %v1387
        %v1389 = vmul.f32 %v1384, %v1388
        %v1390 = vlaneseq
        %v1391 = vshrl.u32 %v1390, 7
        %v1392 = vsub.s32 5, %v1391
        %v1393 = vrot.slane %v493, %v1392
        %v1394 = vadd.f32 %v1389, %v1393
        %v1395 = vld [vmem:[%s5] sm:$0xff]
        %v1396 = vld [vmem:[%s5 + $0x8] sm:$0xff]
        %v1397 = vld [vmem:[%s5 + $0x10] sm:$0xff]
        %v1398 = vld [vmem:[%s5 + $0x18] sm:$0xff]
        %v1399 = vlaneseq
        %v1400 = vshrl.u32 %v1399, 7
        %v1401 = vsub.s32 6, %v1400
        %v1402 = vrot.slane %v493, %v1401
        %v1404 = vsel %vm495, %v1394, 0
        %1406 = vmatprep.subr.mxu0 0.0
        %1407 = vmatpush1.msra.mxu0 %v1395
        %1408 = vmatprep.subr.mxu0 0.0
        %1409 = vmatpush1.msra.mxu0 %v1396
        %1410 = vmatprep.subr.mxu0 0.0
        %1411 = vmatpush1.msra.mxu0 %v1397
        %1412 = vmatprep.subr.mxu0 0.0
        %1413 = vmatpush1.msra.mxu0 %v1398
        %1414 = vmatprep.subr.mxu0 0.0
        %1415 = vmatpush1.msra.mxu0 0.0
        %1416 = vmatprep.subr.mxu0 0.0
        %1417 = vmatpush1.msra.mxu0 0.0
        %1418 = vmatprep.subr.mxu0 0.0
        %1419 = vmatpush1.msra.mxu0 0.0
        %1420 = vmatprep.subr.mxu0 0.0
        %1421 = vmatpush1.msra.mxu0 0.0
        %1422 = vmatprep.subr.mxu0 0.0
        %1423 = vmatpush1.msra.mxu0 0.0
        %1424 = vmatprep.subr.mxu0 0.0
        %1425 = vmatpush1.msra.mxu0 0.0
        %1426 = vmatprep.subr.mxu0 0.0
        %1427 = vmatpush1.msra.mxu0 0.0
        %1428 = vmatprep.subr.mxu0 0.0
        %1429 = vmatpush1.msra.mxu0 0.0
        %1430 = vmatprep.subr.mxu0 0.0
        %1431 = vmatpush1.msra.mxu0 0.0
        %1432 = vmatprep.subr.mxu0 0.0
        %1433 = vmatpush1.msra.mxu0 0.0
        %1434 = vmatprep.subr.mxu0 0.0
        %1435 = vmatpush1.msra.mxu0 0.0
        %1436 = vmatprep.subr.mxu0 0.0
        %1437 = vmatpush1.msra.mxu0 0.0
        %1438 = vmatprep.subr.mxu0 0.0
        %1439 = vmatpush1.msra.mxu0 0.0
        %1440 = vmatprep.subr.mxu0 0.0
        %1441 = vmatpush1.msra.mxu0 0.0
        %1442 = vmatprep.subr.mxu0 0.0
        %1443 = vmatpush1.msra.mxu0 0.0
        %1444 = vmatprep.subr.mxu0 0.0
        %1445 = vmatpush1.msra.mxu0 0.0
        %1446 = vmatprep.subr.mxu0 0.0
        %1447 = vmatpush1.msra.mxu0 0.0
        %1448 = vmatprep.subr.mxu0 0.0
        %1449 = vmatpush1.msra.mxu0 0.0
        %1450 = vmatprep.subr.mxu0 0.0
        %1451 = vmatpush1.msra.mxu0 0.0
        %1452 = vmatprep.subr.mxu0 0.0
        %1453 = vmatpush1.msra.mxu0 0.0
        %1454 = vmatprep.subr.mxu0 0.0
        %1455 = vmatpush1.msra.mxu0 0.0
        %1456 = vmatprep.subr.mxu0 0.0
        %1457 = vmatpush1.msra.mxu0 0.0
        %1458 = vmatprep.subr.mxu0 0.0
        %1459 = vmatpush1.msra.mxu0 0.0
        %1460 = vmatprep.subr.mxu0 0.0
        %1461 = vmatpush1.msra.mxu0 0.0
        %1462 = vmatprep.subr.mxu0 0.0
        %1463 = vmatpush1.msra.mxu0 0.0
        %1464 = vmatprep.subr.mxu0 0.0
        %1465 = vmatpush1.msra.mxu0 0.0
        %1466 = vmatprep.subr.mxu0 0.0
        %1467 = vmatpush1.msra.mxu0 0.0
        %1468 = vmatprep.subr.mxu0 0.0
        %1469 = vmatpush1.msra.mxu0 0.0
        %1470 = vmatprep.mubr.f32.mxu0 0.0
        %1471 = vmatmul.mubr.f32.gmra.mrb[0].mxu0 %v1404
        %v1472 = vpop.f32.mrb[0].mxu0
        %v1473 = vadd.f32 %v1402, %v1472
        %v1474 = vpop.f32.mrb[0].mxu0
        %1475 = vdwg.mxu0
        %v1476 = vmax.f32 %v1473, 0.0
        %v1477 = vld [vmem:[%s6] sm:$0xff]
        %v1478 = vlaneseq
        %v1479 = vshrl.u32 %v1478, 7
        %v1480 = vsub.s32 7, %v1479
        %v1481 = vrot.slane %v493, %v1480
        %v1483 = vsel %vm604, %v1476, 0
        %1485 = vmatprep.subr.mxu0 0.0
        %1486 = vmatpush1.msra.mxu0 %v1477
        %1487 = vmatprep.subr.mxu0 0.0
        %1488 = vmatpush1.msra.mxu0 0.0
        %1489 = vmatprep.subr.mxu0 0.0
        %1490 = vmatpush1.msra.mxu0 0.0
        %1491 = vmatprep.subr.mxu0 0.0
        %1492 = vmatpush1.msra.mxu0 0.0
        %1493 = vmatprep.subr.mxu0 0.0
        %1494 = vmatpush1.msra.mxu0 0.0
        %1495 = vmatprep.subr.mxu0 0.0
        %1496 = vmatpush1.msra.mxu0 0.0
        %1497 = vmatprep.subr.mxu0 0.0
        %1498 = vmatpush1.msra.mxu0 0.0
        %1499 = vmatprep.subr.mxu0 0.0
        %1500 = vmatpush1.msra.mxu0 0.0
        %1501 = vmatprep.subr.mxu0 0.0
        %1502 = vmatpush1.msra.mxu0 0.0
        %1503 = vmatprep.subr.mxu0 0.0
        %1504 = vmatpush1.msra.mxu0 0.0
        %1505 = vmatprep.subr.mxu0 0.0
        %1506 = vmatpush1.msra.mxu0 0.0
        %1507 = vmatprep.subr.mxu0 0.0
        %1508 = vmatpush1.msra.mxu0 0.0
        %1509 = vmatprep.subr.mxu0 0.0
        %1510 = vmatpush1.msra.mxu0 0.0
        %1511 = vmatprep.subr.mxu0 0.0
        %1512 = vmatpush1.msra.mxu0 0.0
        %1513 = vmatprep.subr.mxu0 0.0
        %1514 = vmatpush1.msra.mxu0 0.0
        %1515 = vmatprep.subr.mxu0 0.0
        %1516 = vmatpush1.msra.mxu0 0.0
        %1517 = vmatprep.subr.mxu0 0.0
        %1518 = vmatpush1.msra.mxu0 0.0
        %1519 = vmatprep.subr.mxu0 0.0
        %1520 = vmatpush1.msra.mxu0 0.0
        %1521 = vmatprep.subr.mxu0 0.0
        %1522 = vmatpush1.msra.mxu0 0.0
        %1523 = vmatprep.subr.mxu0 0.0
        %1524 = vmatpush1.msra.mxu0 0.0
        %1525 = vmatprep.subr.mxu0 0.0
        %1526 = vmatpush1.msra.mxu0 0.0
        %1527 = vmatprep.subr.mxu0 0.0
        %1528 = vmatpush1.msra.mxu0 0.0
        %1529 = vmatprep.subr.mxu0 0.0
        %1530 = vmatpush1.msra.mxu0 0.0
        %1531 = vmatprep.subr.mxu0 0.0
        %1532 = vmatpush1.msra.mxu0 0.0
        %1533 = vmatprep.subr.mxu0 0.0
        %1534 = vmatpush1.msra.mxu0 0.0
        %1535 = vmatprep.subr.mxu0 0.0
        %1536 = vmatpush1.msra.mxu0 0.0
        %1537 = vmatprep.subr.mxu0 0.0
        %1538 = vmatpush1.msra.mxu0 0.0
        %1539 = vmatprep.subr.mxu0 0.0
        %1540 = vmatpush1.msra.mxu0 0.0
        %1541 = vmatprep.subr.mxu0 0.0
        %1542 = vmatpush1.msra.mxu0 0.0
        %1543 = vmatprep.subr.mxu0 0.0
        %1544 = vmatpush1.msra.mxu0 0.0
        %1545 = vmatprep.subr.mxu0 0.0
        %1546 = vmatpush1.msra.mxu0 0.0
        %1547 = vmatprep.subr.mxu0 0.0
        %1548 = vmatpush1.msra.mxu0 0.0
        %1549 = vmatprep.mubr.f32.mxu0 0.0
        %1550 = vmatmul.mubr.f32.gmra.mrb[0].mxu0 %v1483
        %v1551 = vpop.f32.mrb[0].mxu0
        %v1552 = vadd.f32 %v1481, %v1551
        %v1553 = vpop.f32.mrb[0].mxu0
        %1554 = vdwg.mxu0
        %v1555 = vadd.f32 %v1381, 1e-06
        %v1556 = vrsqrt.pop %v1555
        %v1557 = vmul.f32 %v1376, %v1556
        %v1558 = vlaneseq
        %v1559 = vshrl.u32 %v1558, 7
        %v1560 = vsub.s32 0, %v1559
        %v1561 = vrot.slane %v494, %v1560
        %v1562 = vmul.f32 %v1557, %v1561
        %v1563 = vlaneseq
        %v1564 = vshrl.u32 %v1563, 7
        %v1565 = vsub.s32 1, %v1564
        %v1566 = vrot.slane %v494, %v1565
        %v1567 = vadd.f32 %v1562, %v1566
        %v1568 = vld [vmem:[%s7] sm:$0xff]
        %v1569 = vld [vmem:[%s7 + $0x8] sm:$0xff]
        %v1570 = vld [vmem:[%s7 + $0x10] sm:$0xff]
        %v1571 = vld [vmem:[%s7 + $0x18] sm:$0xff]
        %v1572 = vlaneseq
        %v1573 = vshrl.u32 %v1572, 7
        %v1574 = vsub.s32 2, %v1573
        %v1575 = vrot.slane %v494, %v1574
        %v1577 = vsel %vm495, %v1567, 0
        %1579 = vmatprep.subr.mxu0 0.0
        %1580 = vmatpush1.msra.mxu0 %v1568
        %1581 = vmatprep.subr.mxu0 0.0
        %1582 = vmatpush1.msra.mxu0 %v1569
        %1583 = vmatprep.subr.mxu0 0.0
        %1584 = vmatpush1.msra.mxu0 %v1570
        %1585 = vmatprep.subr.mxu0 0.0
        %1586 = vmatpush1.msra.mxu0 %v1571
        %1587 = vmatprep.subr.mxu0 0.0
        %1588 = vmatpush1.msra.mxu0 0.0
        %1589 = vmatprep.subr.mxu0 0.0
        %1590 = vmatpush1.msra.mxu0 0.0
        %1591 = vmatprep.subr.mxu0 0.0
        %1592 = vmatpush1.msra.mxu0 0.0
        %1593 = vmatprep.subr.mxu0 0.0
        %1594 = vmatpush1.msra.mxu0 0.0
        %1595 = vmatprep.subr.mxu0 0.0
        %1596 = vmatpush1.msra.mxu0 0.0
        %1597 = vmatprep.subr.mxu0 0.0
        %1598 = vmatpush1.msra.mxu0 0.0
        %1599 = vmatprep.subr.mxu0 0.0
        %1600 = vmatpush1.msra.mxu0 0.0
        %1601 = vmatprep.subr.mxu0 0.0
        %1602 = vmatpush1.msra.mxu0 0.0
        %1603 = vmatprep.subr.mxu0 0.0
        %1604 = vmatpush1.msra.mxu0 0.0
        %1605 = vmatprep.subr.mxu0 0.0
        %1606 = vmatpush1.msra.mxu0 0.0
        %1607 = vmatprep.subr.mxu0 0.0
        %1608 = vmatpush1.msra.mxu0 0.0
        %1609 = vmatprep.subr.mxu0 0.0
        %1610 = vmatpush1.msra.mxu0 0.0
        %1611 = vmatprep.subr.mxu0 0.0
        %1612 = vmatpush1.msra.mxu0 0.0
        %1613 = vmatprep.subr.mxu0 0.0
        %1614 = vmatpush1.msra.mxu0 0.0
        %1615 = vmatprep.subr.mxu0 0.0
        %1616 = vmatpush1.msra.mxu0 0.0
        %1617 = vmatprep.subr.mxu0 0.0
        %1618 = vmatpush1.msra.mxu0 0.0
        %1619 = vmatprep.subr.mxu0 0.0
        %1620 = vmatpush1.msra.mxu0 0.0
        %1621 = vmatprep.subr.mxu0 0.0
        %1622 = vmatpush1.msra.mxu0 0.0
        %1623 = vmatprep.subr.mxu0 0.0
        %1624 = vmatpush1.msra.mxu0 0.0
        %1625 = vmatprep.subr.mxu0 0.0
        %1626 = vmatpush1.msra.mxu0 0.0
        %1627 = vmatprep.subr.mxu0 0.0
        %1628 = vmatpush1.msra.mxu0 0.0
        %1629 = vmatprep.subr.mxu0 0.0
        %1630 = vmatpush1.msra.mxu0 0.0
        %1631 = vmatprep.subr.mxu0 0.0
        %1632 = vmatpush1.msra.mxu0 0.0
        %1633 = vmatprep.subr.mxu0 0.0
        %1634 = vmatpush1.msra.mxu0 0.0
        %1635 = vmatprep.subr.mxu0 0.0
        %1636 = vmatpush1.msra.mxu0 0.0
        %1637 = vmatprep.subr.mxu0 0.0
        %1638 = vmatpush1.msra.mxu0 0.0
        %1639 = vmatprep.subr.mxu0 0.0
        %1640 = vmatpush1.msra.mxu0 0.0
        %1641 = vmatprep.subr.mxu0 0.0
        %1642 = vmatpush1.msra.mxu0 0.0
        %1643 = vmatprep.mubr.f32.mxu0 0.0
        %1644 = vmatmul.mubr.f32.gmra.mrb[0].mxu0 %v1577
        %v1645 = vpop.f32.mrb[0].mxu0
        %v1646 = vadd.f32 %v1575, %v1645
        %v1647 = vpop.f32.mrb[0].mxu0
        %1648 = vdwg.mxu0
        %v1649 = vmul.f32 %v1646, 0.5
        %v1650 = vmul.f32 %v1646, 0.044715
        %v1651 = vmul.f32 %v1650, %v1646
        %v1652 = vmul.f32 %v1651, %v1646
        %v1653 = vadd.f32 %v1646, %v1652
        %v1654 = vmul.f32 %v1653, 0.7978846
        %v1655 = vtanh.pop %v1654
        %v1656 = vadd.f32 %v1655, 1.0
        %v1657 = vmul.f32 %v1649, %v1656
        %v1658 = vld [vmem:[%s8] sm:$0xff]
        %v1659 = vld [vmem:[%s8 + $0x8] sm:$0xff]
        %v1660 = vld [vmem:[%s8 + $0x10] sm:$0xff]
        %v1661 = vld [vmem:[%s8 + $0x18] sm:$0xff]
        %v1662 = vld [vmem:[%s8 + $0x20] sm:$0xff]
        %v1663 = vld [vmem:[%s8 + $0x28] sm:$0xff]
        %v1664 = vld [vmem:[%s8 + $0x30] sm:$0xff]
        %v1665 = vld [vmem:[%s8 + $0x38] sm:$0xff]
        %v1666 = vld [vmem:[%s8 + $0x40] sm:$0xff]
        %v1667 = vld [vmem:[%s8 + $0x48] sm:$0xff]
        %v1668 = vld [vmem:[%s8 + $0x50] sm:$0xff]
        %v1669 = vld [vmem:[%s8 + $0x58] sm:$0xff]
        %v1670 = vld [vmem:[%s8 + $0x60] sm:$0xff]
        %v1671 = vld [vmem:[%s8 + $0x68] sm:$0xff]
        %v1672 = vld [vmem:[%s8 + $0x70] sm:$0xff]
        %v1673 = vld [vmem:[%s8 + $0x78] sm:$0xff]
        %v1674 = vlaneseq
        %v1675 = vshrl.u32 %v1674, 7
        %v1676 = vsub.s32 3, %v1675
        %v1677 = vrot.slane %v494, %v1676
        %1678 = vmatprep.subr.mxu0 0.0
        %1679 = vmatpush1.msra.mxu0 %v1658
        %1680 = vmatprep.subr.mxu0 0.0
        %1681 = vmatpush1.msra.mxu0 %v1659
        %1682 = vmatprep.subr.mxu0 0.0
        %1683 = vmatpush1.msra.mxu0 %v1660
        %1684 = vmatprep.subr.mxu0 0.0
        %1685 = vmatpush1.msra.mxu0 %v1661
        %1686 = vmatprep.subr.mxu0 0.0
        %1687 = vmatpush1.msra.mxu0 %v1662
        %1688 = vmatprep.subr.mxu0 0.0
        %1689 = vmatpush1.msra.mxu0 %v1663
        %1690 = vmatprep.subr.mxu0 0.0
        %1691 = vmatpush1.msra.mxu0 %v1664
        %1692 = vmatprep.subr.mxu0 0.0
        %1693 = vmatpush1.msra.mxu0 %v1665
        %1694 = vmatprep.subr.mxu0 0.0
        %1695 = vmatpush1.msra.mxu0 %v1666
        %1696 = vmatprep.subr.mxu0 0.0
        %1697 = vmatpush1.msra.mxu0 %v1667
        %1698 = vmatprep.subr.mxu0 0.0
        %1699 = vmatpush1.msra.mxu0 %v1668
        %1700 = vmatprep.subr.mxu0 0.0
        %1701 = vmatpush1.msra.mxu0 %v1669
        %1702 = vmatprep.subr.mxu0 0.0
        %1703 = vmatpush1.msra.mxu0 %v1670
        %1704 = vmatprep.subr.mxu0 0.0
        %1705 = vmatpush1.msra.mxu0 %v1671
        %1706 = vmatprep.subr.mxu0 0.0
        %1707 = vmatpush1.msra.mxu0 %v1672
        %1708 = vmatprep.subr.mxu0 0.0
        %1709 = vmatpush1.msra.mxu0 %v1673
        %1710 = vmatprep.subr.mxu0 0.0
        %1711 = vmatpush1.msra.mxu0 0.0
        %1712 = vmatprep.subr.mxu0 0.0
        %1713 = vmatpush1.msra.mxu0 0.0
        %1714 = vmatprep.subr.mxu0 0.0
        %1715 = vmatpush1.msra.mxu0 0.0
        %1716 = vmatprep.subr.mxu0 0.0
        %1717 = vmatpush1.msra.mxu0 0.0
        %1718 = vmatprep.subr.mxu0 0.0
        %1719 = vmatpush1.msra.mxu0 0.0
        %1720 = vmatprep.subr.mxu0 0.0
        %1721 = vmatpush1.msra.mxu0 0.0
        %1722 = vmatprep.subr.mxu0 0.0
        %1723 = vmatpush1.msra.mxu0 0.0
        %1724 = vmatprep.subr.mxu0 0.0
        %1725 = vmatpush1.msra.mxu0 0.0
        %1726 = vmatprep.subr.mxu0 0.0
        %1727 = vmatpush1.msra.mxu0 0.0
        %1728 = vmatprep.subr.mxu0 0.0
        %1729 = vmatpush1.msra.mxu0 0.0
        %1730 = vmatprep.subr.mxu0 0.0
        %1731 = vmatpush1.msra.mxu0 0.0
        %1732 = vmatprep.subr.mxu0 0.0
        %1733 = vmatpush1.msra.mxu0 0.0
        %1734 = vmatprep.subr.mxu0 0.0
        %1735 = vmatpush1.msra.mxu0 0.0
        %1736 = vmatprep.subr.mxu0 0.0
        %1737 = vmatpush1.msra.mxu0 0.0
        %1738 = vmatprep.subr.mxu0 0.0
        %1739 = vmatpush1.msra.mxu0 0.0
        %1740 = vmatprep.subr.mxu0 0.0
        %1741 = vmatpush1.msra.mxu0 0.0
        %1742 = vmatprep.mubr.f32.mxu0 0.0
        %1743 = vmatmul.mubr.f32.gmra.mrb[0].mxu0 %v1657
        %v1744 = vpop.f32.mrb[0].mxu0
        %v1745 = vadd.f32 %v1677, %v1744
        %v1746 = vpop.f32.mrb[0].mxu0
        %1747 = vdwg.mxu0
        %v1748 = vadd.f32 %v1371, %v1745
        %v1749 = vadd.f32 %v1748, %v1552
        %s1750 = scalar_lea.vmem %s9, 16
        %v1751 = vld [vmem:[%s1750] sm:$0xff]
        %v1752 = vld [vmem:[%s1750 + $0x8] sm:$0xff]
        %v1753 = vsel %vm495, %v1749, 0.0
        %1754 = vadd.xlane.f32.xlu0 %v1753
        %v1755 = vpop.xlane.xlu0 %1754
        %v1756 = vmul.f32 %v1755, %v499
        %v1757 = vsub.f32 %v1749, %v1756
        %v1758 = vmul.f32 %v1757, %v1757
        %v1759 = vsel %vm495, %v1758, 0.0
        %1760 = vadd.xlane.f32.xlu0 %v1759
        %v1761 = vpop.xlane.xlu0 %1760
        %v1762 = vmul.f32 %v1761, %v499
        %v1763 = vadd.f32 %v1762, 1e-06
        %v1764 = vrsqrt.pop %v1763
        %v1765 = vmul.f32 %v1757, %v1764
        %v1766 = vlaneseq
        %v1767 = vshrl.u32 %v1766, 7
        %v1768 = vsub.s32 0, %v1767
        %v1769 = vrot.slane %v1751, %v1768
        %v1770 = vmul.f32 %v1765, %v1769
        %v1771 = vlaneseq
        %v1772 = vshrl.u32 %v1771, 7
        %v1773 = vsub.s32 1, %v1772
        %v1774 = vrot.slane %v1751, %v1773
        %v1775 = vadd.f32 %v1770, %v1774
        %s1776 = scalar_lea.vmem %s3, 32
        %v1777 = vld [vmem:[%s1776] sm:$0xff]
        %v1778 = vld [vmem:[%s1776 + $0x8] sm:$0xff]
        %v1779 = vld [vmem:[%s1776 + $0x10] sm:$0xff]
        %v1780 = vld [vmem:[%s1776 + $0x18] sm:$0xff]
        %v1781 = vlaneseq
        %v1782 = vshrl.u32 %v1781, 7
        %v1783 = vsub.s32 2, %v1782
        %v1784 = vrot.slane %v1751, %v1783
        %v1786 = vsel %vm495, %v1775, 0
        %1788 = vmatprep.subr.mxu0 0.0
        %1789 = vmatpush1.msra.mxu0 %v1777
        %1790 = vmatprep.subr.mxu0 0.0
        %1791 = vmatpush1.msra.mxu0 %v1778
        %1792 = vmatprep.subr.mxu0 0.0
        %1793 = vmatpush1.msra.mxu0 %v1779
        %1794 = vmatprep.subr.mxu0 0.0
        %1795 = vmatpush1.msra.mxu0 %v1780
        %1796 = vmatprep.subr.mxu0 0.0
        %1797 = vmatpush1.msra.mxu0 0.0
        %1798 = vmatprep.subr.mxu0 0.0
        %1799 = vmatpush1.msra.mxu0 0.0
        %1800 = vmatprep.subr.mxu0 0.0
        %1801 = vmatpush1.msra.mxu0 0.0
        %1802 = vmatprep.subr.mxu0 0.0
        %1803 = vmatpush1.msra.mxu0 0.0
        %1804 = vmatprep.subr.mxu0 0.0
        %1805 = vmatpush1.msra.mxu0 0.0
        %1806 = vmatprep.subr.mxu0 0.0
        %1807 = vmatpush1.msra.mxu0 0.0
        %1808 = vmatprep.subr.mxu0 0.0
        %1809 = vmatpush1.msra.mxu0 0.0
        %1810 = vmatprep.subr.mxu0 0.0
        %1811 = vmatpush1.msra.mxu0 0.0
        %1812 = vmatprep.subr.mxu0 0.0
        %1813 = vmatpush1.msra.mxu0 0.0
        %1814 = vmatprep.subr.mxu0 0.0
        %1815 = vmatpush1.msra.mxu0 0.0
        %1816 = vmatprep.subr.mxu0 0.0
        %1817 = vmatpush1.msra.mxu0 0.0
        %1818 = vmatprep.subr.mxu0 0.0
        %1819 = vmatpush1.msra.mxu0 0.0
        %1820 = vmatprep.subr.mxu0 0.0
        %1821 = vmatpush1.msra.mxu0 0.0
        %1822 = vmatprep.subr.mxu0 0.0
        %1823 = vmatpush1.msra.mxu0 0.0
        %1824 = vmatprep.subr.mxu0 0.0
        %1825 = vmatpush1.msra.mxu0 0.0
        %1826 = vmatprep.subr.mxu0 0.0
        %1827 = vmatpush1.msra.mxu0 0.0
        %1828 = vmatprep.subr.mxu0 0.0
        %1829 = vmatpush1.msra.mxu0 0.0
        %1830 = vmatprep.subr.mxu0 0.0
        %1831 = vmatpush1.msra.mxu0 0.0
        %1832 = vmatprep.subr.mxu0 0.0
        %1833 = vmatpush1.msra.mxu0 0.0
        %1834 = vmatprep.subr.mxu0 0.0
        %1835 = vmatpush1.msra.mxu0 0.0
        %1836 = vmatprep.subr.mxu0 0.0
        %1837 = vmatpush1.msra.mxu0 0.0
        %1838 = vmatprep.subr.mxu0 0.0
        %1839 = vmatpush1.msra.mxu0 0.0
        %1840 = vmatprep.subr.mxu0 0.0
        %1841 = vmatpush1.msra.mxu0 0.0
        %1842 = vmatprep.subr.mxu0 0.0
        %1843 = vmatpush1.msra.mxu0 0.0
        %1844 = vmatprep.subr.mxu0 0.0
        %1845 = vmatpush1.msra.mxu0 0.0
        %1846 = vmatprep.subr.mxu0 0.0
        %1847 = vmatpush1.msra.mxu0 0.0
        %1848 = vmatprep.subr.mxu0 0.0
        %1849 = vmatpush1.msra.mxu0 0.0
        %1850 = vmatprep.subr.mxu0 0.0
        %1851 = vmatpush1.msra.mxu0 0.0
        %1852 = vmatprep.mubr.f32.mxu0 0.0
        %1853 = vmatmul.mubr.f32.gmra.mrb[0].mxu0 %v1786
        %v1854 = vpop.f32.mrb[0].mxu0
        %v1855 = vadd.f32 %v1784, %v1854
        %v1856 = vpop.f32.mrb[0].mxu0
        %1857 = vdwg.mxu0
        %1859 = vrot.lane.b32.xlu0 %v1855, 96
        %v1860 = vpop.permute.xlu0 %1859
        %v1861 = vsel %vm604, %v1855, 0
        %v1863 = vsel %vm604, %v1860, 0
        %1865 = vmatprep.subr.mxu0 0.0
        %1866 = vmatpush1.xpose.msra.mxu0 %v1863
        %1867 = vmatprep.subr.mxu0 0.0
        %1868 = vmatpush1.xpose.msra.mxu0 0.0
        %1869 = vmatprep.subr.mxu0 0.0
        %1870 = vmatpush1.xpose.msra.mxu0 0.0
        %1871 = vmatprep.subr.mxu0 0.0
        %1872 = vmatpush1.xpose.msra.mxu0 0.0
        %1873 = vmatprep.subr.mxu0 0.0
        %1874 = vmatpush1.xpose.msra.mxu0 0.0
        %1875 = vmatprep.subr.mxu0 0.0
        %1876 = vmatpush1.xpose.msra.mxu0 0.0
        %1877 = vmatprep.subr.mxu0 0.0
        %1878 = vmatpush1.xpose.msra.mxu0 0.0
        %1879 = vmatprep.subr.mxu0 0.0
        %1880 = vmatpush1.xpose.msra.mxu0 0.0
        %1881 = vmatprep.subr.mxu0 0.0
        %1882 = vmatpush1.xpose.msra.mxu0 0.0
        %1883 = vmatprep.subr.mxu0 0.0
        %1884 = vmatpush1.xpose.msra.mxu0 0.0
        %1885 = vmatprep.subr.mxu0 0.0
        %1886 = vmatpush1.xpose.msra.mxu0 0.0
        %1887 = vmatprep.subr.mxu0 0.0
        %1888 = vmatpush1.xpose.msra.mxu0 0.0
        %1889 = vmatprep.subr.mxu0 0.0
        %1890 = vmatpush1.xpose.msra.mxu0 0.0
        %1891 = vmatprep.subr.mxu0 0.0
        %1892 = vmatpush1.xpose.msra.mxu0 0.0
        %1893 = vmatprep.subr.mxu0 0.0
        %1894 = vmatpush1.xpose.msra.mxu0 0.0
        %1895 = vmatprep.subr.mxu0 0.0
        %1896 = vmatpush1.xpose.msra.mxu0 0.0
        %1897 = vmatprep.subr.mxu0 0.0
        %1898 = vmatpush1.xpose.msra.mxu0 0.0
        %1899 = vmatprep.subr.mxu0 0.0
        %1900 = vmatpush1.xpose.msra.mxu0 0.0
        %1901 = vmatprep.subr.mxu0 0.0
        %1902 = vmatpush1.xpose.msra.mxu0 0.0
        %1903 = vmatprep.subr.mxu0 0.0
        %1904 = vmatpush1.xpose.msra.mxu0 0.0
        %1905 = vmatprep.subr.mxu0 0.0
        %1906 = vmatpush1.xpose.msra.mxu0 0.0
        %1907 = vmatprep.subr.mxu0 0.0
        %1908 = vmatpush1.xpose.msra.mxu0 0.0
        %1909 = vmatprep.subr.mxu0 0.0
        %1910 = vmatpush1.xpose.msra.mxu0 0.0
        %1911 = vmatprep.subr.mxu0 0.0
        %1912 = vmatpush1.xpose.msra.mxu0 0.0
        %1913 = vmatprep.subr.mxu0 0.0
        %1914 = vmatpush1.xpose.msra.mxu0 0.0
        %1915 = vmatprep.subr.mxu0 0.0
        %1916 = vmatpush1.xpose.msra.mxu0 0.0
        %1917 = vmatprep.subr.mxu0 0.0
        %1918 = vmatpush1.xpose.msra.mxu0 0.0
        %1919 = vmatprep.subr.mxu0 0.0
        %1920 = vmatpush1.xpose.msra.mxu0 0.0
        %1921 = vmatprep.subr.mxu0 0.0
        %1922 = vmatpush1.xpose.msra.mxu0 0.0
        %1923 = vmatprep.subr.mxu0 0.0
        %1924 = vmatpush1.xpose.msra.mxu0 0.0
        %1925 = vmatprep.subr.mxu0 0.0
        %1926 = vmatpush1.xpose.msra.mxu0 0.0
        %1927 = vmatprep.subr.mxu0 0.0
        %1928 = vmatpush1.xpose.msra.mxu0 0.0
        %1929 = vmatprep.mubr.f32.mxu0 0.0
        %1930 = vmatmul.mubr.f32.gmra.mrb[0].mxu0 %v1861
        %v1931 = vpop.f32.mrb[0].mxu0
        %v1932 = vadd.f32 0.0, %v1931
        %v1933 = vpop.f32.mrb[0].mxu0
        %1934 = vdwg.mxu0
        %v1935 = vmul.f32 %v1932, 0.35355338
        %v1936 = vadd.f32 %v1935, %v492
        %v1937 = vsel %vm604, %v1936, -inf
        %1938 = vmax.xlane.f32.xlu0 %v1937
        %v1939 = vpop.xlane.xlu0 %1938
        %v1940 = vsub.f32 %v1936, %v1939
        %v1941 = vmul.f32 %v1940, 1.442695
        %v1942 = vpow.pop %v1941
        %v1943 = vsel %vm604, %v1942, 0.0
        %1944 = vadd.xlane.f32.xlu0 %v1943
        %v1945 = vpop.xlane.xlu0 %1944
        %v1946 = vrcp.pop %v1945
        %v1947 = vmul.f32 %v1942, %v1946
        %1948 = vrot.lane.b32.xlu0 %v1855, 64
        %v1949 = vpop.permute.xlu0 %1948
        %v1952 = vsel %vm604, %v1947, 0
        %1954 = vmatprep.subr.mxu0 0.0
        %1955 = vmatpush1.msra.mxu0 %v1949
        %1956 = vmatprep.subr.mxu0 0.0
        %1957 = vmatpush1.msra.mxu0 0.0
        %1958 = vmatprep.subr.mxu0 0.0
        %1959 = vmatpush1.msra.mxu0 0.0
        %1960 = vmatprep.subr.mxu0 0.0
        %1961 = vmatpush1.msra.mxu0 0.0
        %1962 = vmatprep.subr.mxu0 0.0
        %1963 = vmatpush1.msra.mxu0 0.0
        %1964 = vmatprep.subr.mxu0 0.0
        %1965 = vmatpush1.msra.mxu0 0.0
        %1966 = vmatprep.subr.mxu0 0.0
        %1967 = vmatpush1.msra.mxu0 0.0
        %1968 = vmatprep.subr.mxu0 0.0
        %1969 = vmatpush1.msra.mxu0 0.0
        %1970 = vmatprep.subr.mxu0 0.0
        %1971 = vmatpush1.msra.mxu0 0.0
        %1972 = vmatprep.subr.mxu0 0.0
        %1973 = vmatpush1.msra.mxu0 0.0
        %1974 = vmatprep.subr.mxu0 0.0
        %1975 = vmatpush1.msra.mxu0 0.0
        %1976 = vmatprep.subr.mxu0 0.0
        %1977 = vmatpush1.msra.mxu0 0.0
        %1978 = vmatprep.subr.mxu0 0.0
        %1979 = vmatpush1.msra.mxu0 0.0
        %1980 = vmatprep.subr.mxu0 0.0
        %1981 = vmatpush1.msra.mxu0 0.0
        %1982 = vmatprep.subr.mxu0 0.0
        %1983 = vmatpush1.msra.mxu0 0.0
        %1984 = vmatprep.subr.mxu0 0.0
        %1985 = vmatpush1.msra.mxu0 0.0
        %1986 = vmatprep.subr.mxu0 0.0
        %1987 = vmatpush1.msra.mxu0 0.0
        %1988 = vmatprep.subr.mxu0 0.0
        %1989 = vmatpush1.msra.mxu0 0.0
        %1990 = vmatprep.subr.mxu0 0.0
        %1991 = vmatpush1.msra.mxu0 0.0
        %1992 = vmatprep.subr.mxu0 0.0
        %1993 = vmatpush1.msra.mxu0 0.0
        %1994 = vmatprep.subr.mxu0 0.0
        %1995 = vmatpush1.msra.mxu0 0.0
        %1996 = vmatprep.subr.mxu0 0.0
        %1997 = vmatpush1.msra.mxu0 0.0
        %1998 = vmatprep.subr.mxu0 0.0
        %1999 = vmatpush1.msra.mxu0 0.0
        %2000 = vmatprep.subr.mxu0 0.0
        %2001 = vmatpush1.msra.mxu0 0.0
        %2002 = vmatprep.subr.mxu0 0.0
        %2003 = vmatpush1.msra.mxu0 0.0
        %2004 = vmatprep.subr.mxu0 0.0
        %2005 = vmatpush1.msra.mxu0 0.0
        %2006 = vmatprep.subr.mxu0 0.0
        %2007 = vmatpush1.msra.mxu0 0.0
        %2008 = vmatprep.subr.mxu0 0.0
        %2009 = vmatpush1.msra.mxu0 0.0
        %2010 = vmatprep.subr.mxu0 0.0
        %2011 = vmatpush1.msra.mxu0 0.0
        %2012 = vmatprep.subr.mxu0 0.0
        %2013 = vmatpush1.msra.mxu0 0.0
        %2014 = vmatprep.subr.mxu0 0.0
        %2015 = vmatpush1.msra.mxu0 0.0
        %2016 = vmatprep.subr.mxu0 0.0
        %2017 = vmatpush1.msra.mxu0 0.0
        %2018 = vmatprep.mubr.f32.mxu0 0.0
        %2019 = vmatmul.mubr.f32.gmra.mrb[0].mxu0 %v1952
        %v2020 = vpop.f32.mrb[0].mxu0
        %v2021 = vadd.f32 0.0, %v2020
        %v2022 = vpop.f32.mrb[0].mxu0
        %2023 = vdwg.mxu0
        %2024 = vst.msk [vmem:[#allocation2] sm:$0xff] %vm604, %v2021
        %2025 = vrot.lane.b32.xlu0 %v1855, 120
        %v2026 = vpop.permute.xlu0 %2025
        %2027 = vrot.lane.b32.xlu0 %v1855, 88
        %v2028 = vpop.permute.xlu0 %2027
        %v2029 = vsel %vm604, %v2026, 0
        %v2031 = vsel %vm604, %v2028, 0
        %2033 = vmatprep.subr.mxu0 0.0
        %2034 = vmatpush1.xpose.msra.mxu0 %v2031
        %2035 = vmatprep.subr.mxu0 0.0
        %2036 = vmatpush1.xpose.msra.mxu0 0.0
        %2037 = vmatprep.subr.mxu0 0.0
        %2038 = vmatpush1.xpose.msra.mxu0 0.0
        %2039 = vmatprep.subr.mxu0 0.0
        %2040 = vmatpush1.xpose.msra.mxu0 0.0
        %2041 = vmatprep.subr.mxu0 0.0
        %2042 = vmatpush1.xpose.msra.mxu0 0.0
        %2043 = vmatprep.subr.mxu0 0.0
        %2044 = vmatpush1.xpose.msra.mxu0 0.0
        %2045 = vmatprep.subr.mxu0 0.0
        %2046 = vmatpush1.xpose.msra.mxu0 0.0
        %2047 = vmatprep.subr.mxu0 0.0
        %2048 = vmatpush1.xpose.msra.mxu0 0.0
        %2049 = vmatprep.subr.mxu0 0.0
        %2050 = vmatpush1.xpose.msra.mxu0 0.0
        %2051 = vmatprep.subr.mxu0 0.0
        %2052 = vmatpush1.xpose.msra.mxu0 0.0
        %2053 = vmatprep.subr.mxu0 0.0
        %2054 = vmatpush1.xpose.msra.mxu0 0.0
        %2055 = vmatprep.subr.mxu0 0.0
        %2056 = vmatpush1.xpose.msra.mxu0 0.0
        %2057 = vmatprep.subr.mxu0 0.0
        %2058 = vmatpush1.xpose.msra.mxu0 0.0
        %2059 = vmatprep.subr.mxu0 0.0
        %2060 = vmatpush1.xpose.msra.mxu0 0.0
        %2061 = vmatprep.subr.mxu0 0.0
        %2062 = vmatpush1.xpose.msra.mxu0 0.0
        %2063 = vmatprep.subr.mxu0 0.0
        %2064 = vmatpush1.xpose.msra.mxu0 0.0
        %2065 = vmatprep.subr.mxu0 0.0
        %2066 = vmatpush1.xpose.msra.mxu0 0.0
        %2067 = vmatprep.subr.mxu0 0.0
        %2068 = vmatpush1.xpose.msra.mxu0 0.0
        %2069 = vmatprep.subr.mxu0 0.0
        %2070 = vmatpush1.xpose.msra.mxu0 0.0
        %2071 = vmatprep.subr.mxu0 0.0
        %2072 = vmatpush1.xpose.msra.mxu0 0.0
        %2073 = vmatprep.subr.mxu0 0.0
        %2074 = vmatpush1.xpose.msra.mxu0 0.0
        %2075 = vmatprep.subr.mxu0 0.0
        %2076 = vmatpush1.xpose.msra.mxu0 0.0
        %2077 = vmatprep.subr.mxu0 0.0
        %2078 = vmatpush1.xpose.msra.mxu0 0.0
        %2079 = vmatprep.subr.mxu0 0.0
        %2080 = vmatpush1.xpose.msra.mxu0 0.0
        %2081 = vmatprep.subr.mxu0 0.0
        %2082 = vmatpush1.xpose.msra.mxu0 0.0
        %2083 = vmatprep.subr.mxu0 0.0
        %2084 = vmatpush1.xpose.msra.mxu0 0.0
        %2085 = vmatprep.subr.mxu0 0.0
        %2086 = vmatpush1.xpose.msra.mxu0 0.0
        %2087 = vmatprep.subr.mxu0 0.0
        %2088 = vmatpush1.xpose.msra.mxu0 0.0
        %2089 = vmatprep.subr.mxu0 0.0
        %2090 = vmatpush1.xpose.msra.mxu0 0.0
        %2091 = vmatprep.subr.mxu0 0.0
        %2092 = vmatpush1.xpose.msra.mxu0 0.0
        %2093 = vmatprep.subr.mxu0 0.0
        %2094 = vmatpush1.xpose.msra.mxu0 0.0
        %2095 = vmatprep.subr.mxu0 0.0
        %2096 = vmatpush1.xpose.msra.mxu0 0.0
        %2097 = vmatprep.mubr.f32.mxu0 0.0
        %2098 = vmatmul.mubr.f32.gmra.mrb[0].mxu0 %v2029
        %v2099 = vpop.f32.mrb[0].mxu0
        %v2100 = vadd.f32 0.0, %v2099
        %v2101 = vpop.f32.mrb[0].mxu0
        %2102 = vdwg.mxu0
        %v2103 = vmul.f32 %v2100, 0.35355338
        %v2104 = vadd.f32 %v2103, %v492
        %v2105 = vsel %vm604, %v2104, -inf
        %2106 = vmax.xlane.f32.xlu0 %v2105
        %v2107 = vpop.xlane.xlu0 %2106
        %v2108 = vsub.f32 %v2104, %v2107
        %v2109 = vmul.f32 %v2108, 1.442695
        %v2110 = vpow.pop %v2109
        %v2111 = vsel %vm604, %v2110, 0.0
        %2112 = vadd.xlane.f32.xlu0 %v2111
        %v2113 = vpop.xlane.xlu0 %2112
        %v2114 = vrcp.pop %v2113
        %v2115 = vmul.f32 %v2110, %v2114
        %2116 = vrot.lane.b32.xlu0 %v1855, 56
        %v2117 = vpop.permute.xlu0 %2116
        %v2120 = vsel %vm604, %v2115, 0
        %2122 = vmatprep.subr.mxu0 0.0
        %2123 = vmatpush1.msra.mxu0 %v2117
        %2124 = vmatprep.subr.mxu0 0.0
        %2125 = vmatpush1.msra.mxu0 0.0
        %2126 = vmatprep.subr.mxu0 0.0
        %2127 = vmatpush1.msra.mxu0 0.0
        %2128 = vmatprep.subr.mxu0 0.0
        %2129 = vmatpush1.msra.mxu0 0.0
        %2130 = vmatprep.subr.mxu0 0.0
        %2131 = vmatpush1.msra.mxu0 0.0
        %2132 = vmatprep.subr.mxu0 0.0
        %2133 = vmatpush1.msra.mxu0 0.0
        %2134 = vmatprep.subr.mxu0 0.0
        %2135 = vmatpush1.msra.mxu0 0.0
        %2136 = vmatprep.subr.mxu0 0.0
        %2137 = vmatpush1.msra.mxu0 0.0
        %2138 = vmatprep.subr.mxu0 0.0
        %2139 = vmatpush1.msra.mxu0 0.0
        %2140 = vmatprep.subr.mxu0 0.0
        %2141 = vmatpush1.msra.mxu0 0.0
        %2142 = vmatprep.subr.mxu0 0.0
        %2143 = vmatpush1.msra.mxu0 0.0
        %2144 = vmatprep.subr.mxu0 0.0
        %2145 = vmatpush1.msra.mxu0 0.0
        %2146 = vmatprep.subr.mxu0 0.0
        %2147 = vmatpush1.msra.mxu0 0.0
        %2148 = vmatprep.subr.mxu0 0.0
        %2149 = vmatpush1.msra.mxu0 0.0
        %2150 = vmatprep.subr.mxu0 0.0
        %2151 = vmatpush1.msra.mxu0 0.0
        %2152 = vmatprep.subr.mxu0 0.0
        %2153 = vmatpush1.msra.mxu0 0.0
        %2154 = vmatprep.subr.mxu0 0.0
        %2155 = vmatpush1.msra.mxu0 0.0
        %2156 = vmatprep.subr.mxu0 0.0
        %2157 = vmatpush1.msra.mxu0 0.0
        %2158 = vmatprep.subr.mxu0 0.0
        %2159 = vmatpush1.msra.mxu0 0.0
        %2160 = vmatprep.subr.mxu0 0.0
        %2161 = vmatpush1.msra.mxu0 0.0
        %2162 = vmatprep.subr.mxu0 0.0
        %2163 = vmatpush1.msra.mxu0 0.0
        %2164 = vmatprep.subr.mxu0 0.0
        %2165 = vmatpush1.msra.mxu0 0.0
        %2166 = vmatprep.subr.mxu0 0.0
        %2167 = vmatpush1.msra.mxu0 0.0
        %2168 = vmatprep.subr.mxu0 0.0
        %2169 = vmatpush1.msra.mxu0 0.0
        %2170 = vmatprep.subr.mxu0 0.0
        %2171 = vmatpush1.msra.mxu0 0.0
        %2172 = vmatprep.subr.mxu0 0.0
        %2173 = vmatpush1.msra.mxu0 0.0
        %2174 = vmatprep.subr.mxu0 0.0
        %2175 = vmatpush1.msra.mxu0 0.0
        %2176 = vmatprep.subr.mxu0 0.0
        %2177 = vmatpush1.msra.mxu0 0.0
        %2178 = vmatprep.subr.mxu0 0.0
        %2179 = vmatpush1.msra.mxu0 0.0
        %2180 = vmatprep.subr.mxu0 0.0
        %2181 = vmatpush1.msra.mxu0 0.0
        %2182 = vmatprep.subr.mxu0 0.0
        %2183 = vmatpush1.msra.mxu0 0.0
        %2184 = vmatprep.subr.mxu0 0.0
        %2185 = vmatpush1.msra.mxu0 0.0
        %2186 = vmatprep.mubr.f32.mxu0 0.0
        %2187 = vmatmul.mubr.f32.gmra.mrb[0].mxu0 %v2120
        %v2188 = vpop.f32.mrb[0].mxu0
        %v2189 = vadd.f32 0.0, %v2188
        %v2190 = vpop.f32.mrb[0].mxu0
        %2191 = vdwg.mxu0
        %2193 = vrot.lane.b32.xlu0 %v2189, 8
        %v2194 = vpop.permute.xlu0 %2193
        %2196 = vst.msk [vmem:[#allocation2] sm:$0xff] %vm940, %v2194
        %2197 = vrot.lane.b32.xlu0 %v1855, 112
        %v2198 = vpop.permute.xlu0 %2197
        %2199 = vrot.lane.b32.xlu0 %v1855, 80
        %v2200 = vpop.permute.xlu0 %2199
        %v2201 = vsel %vm604, %v2198, 0
        %v2203 = vsel %vm604, %v2200, 0
        %2205 = vmatprep.subr.mxu0 0.0
        %2206 = vmatpush1.xpose.msra.mxu0 %v2203
        %2207 = vmatprep.subr.mxu0 0.0
        %2208 = vmatpush1.xpose.msra.mxu0 0.0
        %2209 = vmatprep.subr.mxu0 0.0
        %2210 = vmatpush1.xpose.msra.mxu0 0.0
        %2211 = vmatprep.subr.mxu0 0.0
        %2212 = vmatpush1.xpose.msra.mxu0 0.0
        %2213 = vmatprep.subr.mxu0 0.0
        %2214 = vmatpush1.xpose.msra.mxu0 0.0
        %2215 = vmatprep.subr.mxu0 0.0
        %2216 = vmatpush1.xpose.msra.mxu0 0.0
        %2217 = vmatprep.subr.mxu0 0.0
        %2218 = vmatpush1.xpose.msra.mxu0 0.0
        %2219 = vmatprep.subr.mxu0 0.0
        %2220 = vmatpush1.xpose.msra.mxu0 0.0
        %2221 = vmatprep.subr.mxu0 0.0
        %2222 = vmatpush1.xpose.msra.mxu0 0.0
        %2223 = vmatprep.subr.mxu0 0.0
        %2224 = vmatpush1.xpose.msra.mxu0 0.0
        %2225 = vmatprep.subr.mxu0 0.0
        %2226 = vmatpush1.xpose.msra.mxu0 0.0
        %2227 = vmatprep.subr.mxu0 0.0
        %2228 = vmatpush1.xpose.msra.mxu0 0.0
        %2229 = vmatprep.subr.mxu0 0.0
        %2230 = vmatpush1.xpose.msra.mxu0 0.0
        %2231 = vmatprep.subr.mxu0 0.0
        %2232 = vmatpush1.xpose.msra.mxu0 0.0
        %2233 = vmatprep.subr.mxu0 0.0
        %2234 = vmatpush1.xpose.msra.mxu0 0.0
        %2235 = vmatprep.subr.mxu0 0.0
        %2236 = vmatpush1.xpose.msra.mxu0 0.0
        %2237 = vmatprep.subr.mxu0 0.0
        %2238 = vmatpush1.xpose.msra.mxu0 0.0
        %2239 = vmatprep.subr.mxu0 0.0
        %2240 = vmatpush1.xpose.msra.mxu0 0.0
        %2241 = vmatprep.subr.mxu0 0.0
        %2242 = vmatpush1.xpose.msra.mxu0 0.0
        %2243 = vmatprep.subr.mxu0 0.0
        %2244 = vmatpush1.xpose.msra.mxu0 0.0
        %2245 = vmatprep.subr.mxu0 0.0
        %2246 = vmatpush1.xpose.msra.mxu0 0.0
        %2247 = vmatprep.subr.mxu0 0.0
        %2248 = vmatpush1.xpose.msra.mxu0 0.0
        %2249 = vmatprep.subr.mxu0 0.0
        %2250 = vmatpush1.xpose.msra.mxu0 0.0
        %2251 = vmatprep.subr.mxu0 0.0
        %2252 = vmatpush1.xpose.msra.mxu0 0.0
        %2253 = vmatprep.subr.mxu0 0.0
        %2254 = vmatpush1.xpose.msra.mxu0 0.0
        %2255 = vmatprep.subr.mxu0 0.0
        %2256 = vmatpush1.xpose.msra.mxu0 0.0
        %2257 = vmatprep.subr.mxu0 0.0
        %2258 = vmatpush1.xpose.msra.mxu0 0.0
        %2259 = vmatprep.subr.mxu0 0.0
        %2260 = vmatpush1.xpose.msra.mxu0 0.0
        %2261 = vmatprep.subr.mxu0 0.0
        %2262 = vmatpush1.xpose.msra.mxu0 0.0
        %2263 = vmatprep.subr.mxu0 0.0
        %2264 = vmatpush1.xpose.msra.mxu0 0.0
        %2265 = vmatprep.subr.mxu0 0.0
        %2266 = vmatpush1.xpose.msra.mxu0 0.0
        %2267 = vmatprep.subr.mxu0 0.0
        %2268 = vmatpush1.xpose.msra.mxu0 0.0
        %2269 = vmatprep.mubr.f32.mxu0 0.0
        %2270 = vmatmul.mubr.f32.gmra.mrb[0].mxu0 %v2201
        %v2271 = vpop.f32.mrb[0].mxu0
        %v2272 = vadd.f32 0.0, %v2271
        %v2273 = vpop.f32.mrb[0].mxu0
        %2274 = vdwg.mxu0
        %v2275 = vmul.f32 %v2272, 0.35355338
        %v2276 = vadd.f32 %v2275, %v492
        %v2277 = vsel %vm604, %v2276, -inf
        %2278 = vmax.xlane.f32.xlu0 %v2277
        %v2279 = vpop.xlane.xlu0 %2278
        %v2280 = vsub.f32 %v2276, %v2279
        %v2281 = vmul.f32 %v2280, 1.442695
        %v2282 = vpow.pop %v2281
        %v2283 = vsel %vm604, %v2282, 0.0
        %2284 = vadd.xlane.f32.xlu0 %v2283
        %v2285 = vpop.xlane.xlu0 %2284
        %v2286 = vrcp.pop %v2285
        %v2287 = vmul.f32 %v2282, %v2286
        %2288 = vrot.lane.b32.xlu0 %v1855, 48
        %v2289 = vpop.permute.xlu0 %2288
        %v2292 = vsel %vm604, %v2287, 0
        %2294 = vmatprep.subr.mxu0 0.0
        %2295 = vmatpush1.msra.mxu0 %v2289
        %2296 = vmatprep.subr.mxu0 0.0
        %2297 = vmatpush1.msra.mxu0 0.0
        %2298 = vmatprep.subr.mxu0 0.0
        %2299 = vmatpush1.msra.mxu0 0.0
        %2300 = vmatprep.subr.mxu0 0.0
        %2301 = vmatpush1.msra.mxu0 0.0
        %2302 = vmatprep.subr.mxu0 0.0
        %2303 = vmatpush1.msra.mxu0 0.0
        %2304 = vmatprep.subr.mxu0 0.0
        %2305 = vmatpush1.msra.mxu0 0.0
        %2306 = vmatprep.subr.mxu0 0.0
        %2307 = vmatpush1.msra.mxu0 0.0
        %2308 = vmatprep.subr.mxu0 0.0
        %2309 = vmatpush1.msra.mxu0 0.0
        %2310 = vmatprep.subr.mxu0 0.0
        %2311 = vmatpush1.msra.mxu0 0.0
        %2312 = vmatprep.subr.mxu0 0.0
        %2313 = vmatpush1.msra.mxu0 0.0
        %2314 = vmatprep.subr.mxu0 0.0
        %2315 = vmatpush1.msra.mxu0 0.0
        %2316 = vmatprep.subr.mxu0 0.0
        %2317 = vmatpush1.msra.mxu0 0.0
        %2318 = vmatprep.subr.mxu0 0.0
        %2319 = vmatpush1.msra.mxu0 0.0
        %2320 = vmatprep.subr.mxu0 0.0
        %2321 = vmatpush1.msra.mxu0 0.0
        %2322 = vmatprep.subr.mxu0 0.0
        %2323 = vmatpush1.msra.mxu0 0.0
        %2324 = vmatprep.subr.mxu0 0.0
        %2325 = vmatpush1.msra.mxu0 0.0
        %2326 = vmatprep.subr.mxu0 0.0
        %2327 = vmatpush1.msra.mxu0 0.0
        %2328 = vmatprep.subr.mxu0 0.0
        %2329 = vmatpush1.msra.mxu0 0.0
        %2330 = vmatprep.subr.mxu0 0.0
        %2331 = vmatpush1.msra.mxu0 0.0
        %2332 = vmatprep.subr.mxu0 0.0
        %2333 = vmatpush1.msra.mxu0 0.0
        %2334 = vmatprep.subr.mxu0 0.0
        %2335 = vmatpush1.msra.mxu0 0.0
        %2336 = vmatprep.subr.mxu0 0.0
        %2337 = vmatpush1.msra.mxu0 0.0
        %2338 = vmatprep.subr.mxu0 0.0
        %2339 = vmatpush1.msra.mxu0 0.0
        %2340 = vmatprep.subr.mxu0 0.0
        %2341 = vmatpush1.msra.mxu0 0.0
        %2342 = vmatprep.subr.mxu0 0.0
        %2343 = vmatpush1.msra.mxu0 0.0
        %2344 = vmatprep.subr.mxu0 0.0
        %2345 = vmatpush1.msra.mxu0 0.0
        %2346 = vmatprep.subr.mxu0 0.0
        %2347 = vmatpush1.msra.mxu0 0.0
        %2348 = vmatprep.subr.mxu0 0.0
        %2349 = vmatpush1.msra.mxu0 0.0
        %2350 = vmatprep.subr.mxu0 0.0
        %2351 = vmatpush1.msra.mxu0 0.0
        %2352 = vmatprep.subr.mxu0 0.0
        %2353 = vmatpush1.msra.mxu0 0.0
        %2354 = vmatprep.subr.mxu0 0.0
        %2355 = vmatpush1.msra.mxu0 0.0
        %2356 = vmatprep.subr.mxu0 0.0
        %2357 = vmatpush1.msra.mxu0 0.0
        %2358 = vmatprep.mubr.f32.mxu0 0.0
        %2359 = vmatmul.mubr.f32.gmra.mrb[0].mxu0 %v2292
        %v2360 = vpop.f32.mrb[0].mxu0
        %v2361 = vadd.f32 0.0, %v2360
        %v2362 = vpop.f32.mrb[0].mxu0
        %2363 = vdwg.mxu0
        %2365 = vrot.lane.b32.xlu0 %v2361, 16
        %v2366 = vpop.permute.xlu0 %2365
        %2368 = vst.msk [vmem:[#allocation2] sm:$0xff] %vm1113, %v2366
        %2369 = vrot.lane.b32.xlu0 %v1855, 104
        %v2370 = vpop.permute.xlu0 %2369
        %2371 = vrot.lane.b32.xlu0 %v1855, 72
        %v2372 = vpop.permute.xlu0 %2371
        %v2373 = vsel %vm604, %v2370, 0
        %v2375 = vsel %vm604, %v2372, 0
        %2377 = vmatprep.subr.mxu0 0.0
        %2378 = vmatpush1.xpose.msra.mxu0 %v2375
        %2379 = vmatprep.subr.mxu0 0.0
        %2380 = vmatpush1.xpose.msra.mxu0 0.0
        %2381 = vmatprep.subr.mxu0 0.0
        %2382 = vmatpush1.xpose.msra.mxu0 0.0
        %2383 = vmatprep.subr.mxu0 0.0
        %2384 = vmatpush1.xpose.msra.mxu0 0.0
        %2385 = vmatprep.subr.mxu0 0.0
        %2386 = vmatpush1.xpose.msra.mxu0 0.0
        %2387 = vmatprep.subr.mxu0 0.0
        %2388 = vmatpush1.xpose.msra.mxu0 0.0
        %2389 = vmatprep.subr.mxu0 0.0
        %2390 = vmatpush1.xpose.msra.mxu0 0.0
        %2391 = vmatprep.subr.mxu0 0.0
        %2392 = vmatpush1.xpose.msra.mxu0 0.0
        %2393 = vmatprep.subr.mxu0 0.0
        %2394 = vmatpush1.xpose.msra.mxu0 0.0
        %2395 = vmatprep.subr.mxu0 0.0
        %2396 = vmatpush1.xpose.msra.mxu0 0.0
        %2397 = vmatprep.subr.mxu0 0.0
        %2398 = vmatpush1.xpose.msra.mxu0 0.0
        %2399 = vmatprep.subr.mxu0 0.0
        %2400 = vmatpush1.xpose.msra.mxu0 0.0
        %2401 = vmatprep.subr.mxu0 0.0
        %2402 = vmatpush1.xpose.msra.mxu0 0.0
        %2403 = vmatprep.subr.mxu0 0.0
        %2404 = vmatpush1.xpose.msra.mxu0 0.0
        %2405 = vmatprep.subr.mxu0 0.0
        %2406 = vmatpush1.xpose.msra.mxu0 0.0
        %2407 = vmatprep.subr.mxu0 0.0
        %2408 = vmatpush1.xpose.msra.mxu0 0.0
        %2409 = vmatprep.subr.mxu0 0.0
        %2410 = vmatpush1.xpose.msra.mxu0 0.0
        %2411 = vmatprep.subr.mxu0 0.0
        %2412 = vmatpush1.xpose.msra.mxu0 0.0
        %2413 = vmatprep.subr.mxu0 0.0
        %2414 = vmatpush1.xpose.msra.mxu0 0.0
        %2415 = vmatprep.subr.mxu0 0.0
        %2416 = vmatpush1.xpose.msra.mxu0 0.0
        %2417 = vmatprep.subr.mxu0 0.0
        %2418 = vmatpush1.xpose.msra.mxu0 0.0
        %2419 = vmatprep.subr.mxu0 0.0
        %2420 = vmatpush1.xpose.msra.mxu0 0.0
        %2421 = vmatprep.subr.mxu0 0.0
        %2422 = vmatpush1.xpose.msra.mxu0 0.0
        %2423 = vmatprep.subr.mxu0 0.0
        %2424 = vmatpush1.xpose.msra.mxu0 0.0
        %2425 = vmatprep.subr.mxu0 0.0
        %2426 = vmatpush1.xpose.msra.mxu0 0.0
        %2427 = vmatprep.subr.mxu0 0.0
        %2428 = vmatpush1.xpose.msra.mxu0 0.0
        %2429 = vmatprep.subr.mxu0 0.0
        %2430 = vmatpush1.xpose.msra.mxu0 0.0
        %2431 = vmatprep.subr.mxu0 0.0
        %2432 = vmatpush1.xpose.msra.mxu0 0.0
        %2433 = vmatprep.subr.mxu0 0.0
        %2434 = vmatpush1.xpose.msra.mxu0 0.0
        %2435 = vmatprep.subr.mxu0 0.0
        %2436 = vmatpush1.xpose.msra.mxu0 0.0
        %2437 = vmatprep.subr.mxu0 0.0
        %2438 = vmatpush1.xpose.msra.mxu0 0.0
        %2439 = vmatprep.subr.mxu0 0.0
        %2440 = vmatpush1.xpose.msra.mxu0 0.0
        %2441 = vmatprep.mubr.f32.mxu0 0.0
        %2442 = vmatmul.mubr.f32.gmra.mrb[0].mxu0 %v2373
        %v2443 = vpop.f32.mrb[0].mxu0
        %v2444 = vadd.f32 0.0, %v2443
        %v2445 = vpop.f32.mrb[0].mxu0
        %2446 = vdwg.mxu0
        %v2447 = vmul.f32 %v2444, 0.35355338
        %v2448 = vadd.f32 %v2447, %v492
        %v2449 = vsel %vm604, %v2448, -inf
        %2450 = vmax.xlane.f32.xlu0 %v2449
        %v2451 = vpop.xlane.xlu0 %2450
        %v2452 = vsub.f32 %v2448, %v2451
        %v2453 = vmul.f32 %v2452, 1.442695
        %v2454 = vpow.pop %v2453
        %v2455 = vsel %vm604, %v2454, 0.0
        %2456 = vadd.xlane.f32.xlu0 %v2455
        %v2457 = vpop.xlane.xlu0 %2456
        %v2458 = vrcp.pop %v2457
        %v2459 = vmul.f32 %v2454, %v2458
        %2460 = vrot.lane.b32.xlu0 %v1855, 40
        %v2461 = vpop.permute.xlu0 %2460
        %v2464 = vsel %vm604, %v2459, 0
        %2466 = vmatprep.subr.mxu0 0.0
        %2467 = vmatpush1.msra.mxu0 %v2461
        %2468 = vmatprep.subr.mxu0 0.0
        %2469 = vmatpush1.msra.mxu0 0.0
        %2470 = vmatprep.subr.mxu0 0.0
        %2471 = vmatpush1.msra.mxu0 0.0
        %2472 = vmatprep.subr.mxu0 0.0
        %2473 = vmatpush1.msra.mxu0 0.0
        %2474 = vmatprep.subr.mxu0 0.0
        %2475 = vmatpush1.msra.mxu0 0.0
        %2476 = vmatprep.subr.mxu0 0.0
        %2477 = vmatpush1.msra.mxu0 0.0
        %2478 = vmatprep.subr.mxu0 0.0
        %2479 = vmatpush1.msra.mxu0 0.0
        %2480 = vmatprep.subr.mxu0 0.0
        %2481 = vmatpush1.msra.mxu0 0.0
        %2482 = vmatprep.subr.mxu0 0.0
        %2483 = vmatpush1.msra.mxu0 0.0
        %2484 = vmatprep.subr.mxu0 0.0
        %2485 = vmatpush1.msra.mxu0 0.0
        %2486 = vmatprep.subr.mxu0 0.0
        %2487 = vmatpush1.msra.mxu0 0.0
        %2488 = vmatprep.subr.mxu0 0.0
        %2489 = vmatpush1.msra.mxu0 0.0
        %2490 = vmatprep.subr.mxu0 0.0
        %2491 = vmatpush1.msra.mxu0 0.0
        %2492 = vmatprep.subr.mxu0 0.0
        %2493 = vmatpush1.msra.mxu0 0.0
        %2494 = vmatprep.subr.mxu0 0.0
        %2495 = vmatpush1.msra.mxu0 0.0
        %2496 = vmatprep.subr.mxu0 0.0
        %2497 = vmatpush1.msra.mxu0 0.0
        %2498 = vmatprep.subr.mxu0 0.0
        %2499 = vmatpush1.msra.mxu0 0.0
        %2500 = vmatprep.subr.mxu0 0.0
        %2501 = vmatpush1.msra.mxu0 0.0
        %2502 = vmatprep.subr.mxu0 0.0
        %2503 = vmatpush1.msra.mxu0 0.0
        %2504 = vmatprep.subr.mxu0 0.0
        %2505 = vmatpush1.msra.mxu0 0.0
        %2506 = vmatprep.subr.mxu0 0.0
        %2507 = vmatpush1.msra.mxu0 0.0
        %2508 = vmatprep.subr.mxu0 0.0
        %2509 = vmatpush1.msra.mxu0 0.0
        %2510 = vmatprep.subr.mxu0 0.0
        %2511 = vmatpush1.msra.mxu0 0.0
        %2512 = vmatprep.subr.mxu0 0.0
        %2513 = vmatpush1.msra.mxu0 0.0
        %2514 = vmatprep.subr.mxu0 0.0
        %2515 = vmatpush1.msra.mxu0 0.0
        %2516 = vmatprep.subr.mxu0 0.0
        %2517 = vmatpush1.msra.mxu0 0.0
        %2518 = vmatprep.subr.mxu0 0.0
        %2519 = vmatpush1.msra.mxu0 0.0
        %2520 = vmatprep.subr.mxu0 0.0
        %2521 = vmatpush1.msra.mxu0 0.0
        %2522 = vmatprep.subr.mxu0 0.0
        %2523 = vmatpush1.msra.mxu0 0.0
        %2524 = vmatprep.subr.mxu0 0.0
        %2525 = vmatpush1.msra.mxu0 0.0
        %2526 = vmatprep.subr.mxu0 0.0
        %2527 = vmatpush1.msra.mxu0 0.0
        %2528 = vmatprep.subr.mxu0 0.0
        %2529 = vmatpush1.msra.mxu0 0.0
        %2530 = vmatprep.mubr.f32.mxu0 0.0
        %2531 = vmatmul.mubr.f32.gmra.mrb[0].mxu0 %v2464
        %v2532 = vpop.f32.mrb[0].mxu0
        %v2533 = vadd.f32 0.0, %v2532
        %v2534 = vpop.f32.mrb[0].mxu0
        %2535 = vdwg.mxu0
        %2537 = vrot.lane.b32.xlu0 %v2533, 24
        %v2538 = vpop.permute.xlu0 %2537
        %2540 = vst.msk [vmem:[#allocation2] sm:$0xff] %vm1286, %v2538
        %v2541 = vld [vmem:[#allocation2] sm:$0xff]
        %s2542 = scalar_lea.vmem %s4, 32
        %v2543 = vld [vmem:[%s2542] sm:$0xff]
        %v2544 = vld [vmem:[%s2542 + $0x8] sm:$0xff]
        %v2545 = vld [vmem:[%s2542 + $0x10] sm:$0xff]
        %v2546 = vld [vmem:[%s2542 + $0x18] sm:$0xff]
        %v2548 = vsel %vm495, %v2541, 0
        %2550 = vmatprep.subr.mxu0 0.0
        %2551 = vmatpush1.msra.mxu0 %v2543
        %2552 = vmatprep.subr.mxu0 0.0
        %2553 = vmatpush1.msra.mxu0 %v2544
        %2554 = vmatprep.subr.mxu0 0.0
        %2555 = vmatpush1.msra.mxu0 %v2545
        %2556 = vmatprep.subr.mxu0 0.0
        %2557 = vmatpush1.msra.mxu0 %v2546
        %2558 = vmatprep.subr.mxu0 0.0
        %2559 = vmatpush1.msra.mxu0 0.0
        %2560 = vmatprep.subr.mxu0 0.0
        %2561 = vmatpush1.msra.mxu0 0.0
        %2562 = vmatprep.subr.mxu0 0.0
        %2563 = vmatpush1.msra.mxu0 0.0
        %2564 = vmatprep.subr.mxu0 0.0
        %2565 = vmatpush1.msra.mxu0 0.0
        %2566 = vmatprep.subr.mxu0 0.0
        %2567 = vmatpush1.msra.mxu0 0.0
        %2568 = vmatprep.subr.mxu0 0.0
        %2569 = vmatpush1.msra.mxu0 0.0
        %2570 = vmatprep.subr.mxu0 0.0
        %2571 = vmatpush1.msra.mxu0 0.0
        %2572 = vmatprep.subr.mxu0 0.0
        %2573 = vmatpush1.msra.mxu0 0.0
        %2574 = vmatprep.subr.mxu0 0.0
        %2575 = vmatpush1.msra.mxu0 0.0
        %2576 = vmatprep.subr.mxu0 0.0
        %2577 = vmatpush1.msra.mxu0 0.0
        %2578 = vmatprep.subr.mxu0 0.0
        %2579 = vmatpush1.msra.mxu0 0.0
        %2580 = vmatprep.subr.mxu0 0.0
        %2581 = vmatpush1.msra.mxu0 0.0
        %2582 = vmatprep.subr.mxu0 0.0
        %2583 = vmatpush1.msra.mxu0 0.0
        %2584 = vmatprep.subr.mxu0 0.0
        %2585 = vmatpush1.msra.mxu0 0.0
        %2586 = vmatprep.subr.mxu0 0.0
        %2587 = vmatpush1.msra.mxu0 0.0
        %2588 = vmatprep.subr.mxu0 0.0
        %2589 = vmatpush1.msra.mxu0 0.0
        %2590 = vmatprep.subr.mxu0 0.0
        %2591 = vmatpush1.msra.mxu0 0.0
        %2592 = vmatprep.subr.mxu0 0.0
        %2593 = vmatpush1.msra.mxu0 0.0
        %2594 = vmatprep.subr.mxu0 0.0
        %2595 = vmatpush1.msra.mxu0 0.0
        %2596 = vmatprep.subr.mxu0 0.0
        %2597 = vmatpush1.msra.mxu0 0.0
        %2598 = vmatprep.subr.mxu0 0.0
        %2599 = vmatpush1.msra.mxu0 0.0
        %2600 = vmatprep.subr.mxu0 0.0
        %2601 = vmatpush1.msra.mxu0 0.0
        %2602 = vmatprep.subr.mxu0 0.0
        %2603 = vmatpush1.msra.mxu0 0.0
        %2604 = vmatprep.subr.mxu0 0.0
        %2605 = vmatpush1.msra.mxu0 0.0
        %2606 = vmatprep.subr.mxu0 0.0
        %2607 = vmatpush1.msra.mxu0 0.0
        %2608 = vmatprep.subr.mxu0 0.0
        %2609 = vmatpush1.msra.mxu0 0.0
        %2610 = vmatprep.subr.mxu0 0.0
        %2611 = vmatpush1.msra.mxu0 0.0
        %2612 = vmatprep.subr.mxu0 0.0
        %2613 = vmatpush1.msra.mxu0 0.0
        %2614 = vmatprep.mubr.f32.mxu0 0.0
        %2615 = vmatmul.mubr.f32.gmra.mrb[0].mxu0 %v2548
        %v2616 = vpop.f32.mrb[0].mxu0
        %v2617 = vadd.f32 0.0, %v2616
        %v2618 = vpop.f32.mrb[0].mxu0
        %2619 = vdwg.mxu0
        %v2620 = vadd.f32 %v1749, %v2617
        %v2621 = vlaneseq
        %v2622 = vshrl.u32 %v2621, 7
        %v2623 = vsub.s32 3, %v2622
        %v2624 = vrot.slane %v1751, %v2623
        %v2625 = vadd.f32 %v2620, %v2624
        %v2626 = vsel %vm495, %v2625, 0.0
        %2627 = vadd.xlane.f32.xlu0 %v2626
        %v2628 = vpop.xlane.xlu0 %2627
        %v2629 = vmul.f32 %v2628, %v499
        %v2630 = vsub.f32 %v2625, %v2629
        %v2631 = vmul.f32 %v2630, %v2630
        %v2632 = vsel %vm495, %v2631, 0.0
        %2633 = vadd.xlane.f32.xlu0 %v2632
        %v2634 = vpop.xlane.xlu0 %2633
        %v2635 = vmul.f32 %v2634, %v499
        %v2636 = vadd.f32 %v2635, 1e-05
        %v2637 = vrsqrt.pop %v2636
        %v2638 = vmul.f32 %v2630, %v2637
        %v2639 = vlaneseq
        %v2640 = vshrl.u32 %v2639, 7
        %v2641 = vsub.s32 4, %v2640
        %v2642 = vrot.slane %v1751, %v2641
        %v2643 = vmul.f32 %v2638, %v2642
        %v2644 = vlaneseq
        %v2645 = vshrl.u32 %v2644, 7
        %v2646 = vsub.s32 5, %v2645
        %v2647 = vrot.slane %v1751, %v2646
        %v2648 = vadd.f32 %v2643, %v2647
        %s2649 = scalar_lea.vmem %s5, 32
        %v2650 = vld [vmem:[%s2649] sm:$0xff]
        %v2651 = vld [vmem:[%s2649 + $0x8] sm:$0xff]
        %v2652 = vld [vmem:[%s2649 + $0x10] sm:$0xff]
        %v2653 = vld [vmem:[%s2649 + $0x18] sm:$0xff]
        %v2654 = vlaneseq
        %v2655 = vshrl.u32 %v2654, 7
        %v2656 = vsub.s32 6, %v2655
        %v2657 = vrot.slane %v1751, %v2656
        %v2659 = vsel %vm495, %v2648, 0
        %2661 = vmatprep.subr.mxu0 0.0
        %2662 = vmatpush1.msra.mxu0 %v2650
        %2663 = vmatprep.subr.mxu0 0.0
        %2664 = vmatpush1.msra.mxu0 %v2651
        %2665 = vmatprep.subr.mxu0 0.0
        %2666 = vmatpush1.msra.mxu0 %v2652
        %2667 = vmatprep.subr.mxu0 0.0
        %2668 = vmatpush1.msra.mxu0 %v2653
        %2669 = vmatprep.subr.mxu0 0.0
        %2670 = vmatpush1.msra.mxu0 0.0
        %2671 = vmatprep.subr.mxu0 0.0
        %2672 = vmatpush1.msra.mxu0 0.0
        %2673 = vmatprep.subr.mxu0 0.0
        %2674 = vmatpush1.msra.mxu0 0.0
        %2675 = vmatprep.subr.mxu0 0.0
        %2676 = vmatpush1.msra.mxu0 0.0
        %2677 = vmatprep.subr.mxu0 0.0
        %2678 = vmatpush1.msra.mxu0 0.0
        %2679 = vmatprep.subr.mxu0 0.0
        %2680 = vmatpush1.msra.mxu0 0.0
        %2681 = vmatprep.subr.mxu0 0.0
        %2682 = vmatpush1.msra.mxu0 0.0
        %2683 = vmatprep.subr.mxu0 0.0
        %2684 = vmatpush1.msra.mxu0 0.0
        %2685 = vmatprep.subr.mxu0 0.0
        %2686 = vmatpush1.msra.mxu0 0.0
        %2687 = vmatprep.subr.mxu0 0.0
        %2688 = vmatpush1.msra.mxu0 0.0
        %2689 = vmatprep.subr.mxu0 0.0
        %2690 = vmatpush1.msra.mxu0 0.0
        %2691 = vmatprep.subr.mxu0 0.0
        %2692 = vmatpush1.msra.mxu0 0.0
        %2693 = vmatprep.subr.mxu0 0.0
        %2694 = vmatpush1.msra.mxu0 0.0
        %2695 = vmatprep.subr.mxu0 0.0
        %2696 = vmatpush1.msra.mxu0 0.0
        %2697 = vmatprep.subr.mxu0 0.0
        %2698 = vmatpush1.msra.mxu0 0.0
        %2699 = vmatprep.subr.mxu0 0.0
        %2700 = vmatpush1.msra.mxu0 0.0
        %2701 = vmatprep.subr.mxu0 0.0
        %2702 = vmatpush1.msra.mxu0 0.0
        %2703 = vmatprep.subr.mxu0 0.0
        %2704 = vmatpush1.msra.mxu0 0.0
        %2705 = vmatprep.subr.mxu0 0.0
        %2706 = vmatpush1.msra.mxu0 0.0
        %2707 = vmatprep.subr.mxu0 0.0
        %2708 = vmatpush1.msra.mxu0 0.0
        %2709 = vmatprep.subr.mxu0 0.0
        %2710 = vmatpush1.msra.mxu0 0.0
        %2711 = vmatprep.subr.mxu0 0.0
        %2712 = vmatpush1.msra.mxu0 0.0
        %2713 = vmatprep.subr.mxu0 0.0
        %2714 = vmatpush1.msra.mxu0 0.0
        %2715 = vmatprep.subr.mxu0 0.0
        %2716 = vmatpush1.msra.mxu0 0.0
        %2717 = vmatprep.subr.mxu0 0.0
        %2718 = vmatpush1.msra.mxu0 0.0
        %2719 = vmatprep.subr.mxu0 0.0
        %2720 = vmatpush1.msra.mxu0 0.0
        %2721 = vmatprep.subr.mxu0 0.0
        %2722 = vmatpush1.msra.mxu0 0.0
        %2723 = vmatprep.subr.mxu0 0.0
        %2724 = vmatpush1.msra.mxu0 0.0
        %2725 = vmatprep.mubr.f32.mxu0 0.0
        %2726 = vmatmul.mubr.f32.gmra.mrb[0].mxu0 %v2659
        %v2727 = vpop.f32.mrb[0].mxu0
        %v2728 = vadd.f32 %v2657, %v2727
        %v2729 = vpop.f32.mrb[0].mxu0
        %2730 = vdwg.mxu0
        %v2731 = vmax.f32 %v2728, 0.0
        %s2732 = scalar_lea.vmem %s6, 8
        %v2733 = vld [vmem:[%s2732] sm:$0xff]
        %v2734 = vlaneseq
        %v2735 = vshrl.u32 %v2734, 7
        %v2736 = vsub.s32 7, %v2735
        %v2737 = vrot.slane %v1751, %v2736
        %v2739 = vsel %vm604, %v2731, 0
        %2741 = vmatprep.subr.mxu0 0.0
        %2742 = vmatpush1.msra.mxu0 %v2733
        %2743 = vmatprep.subr.mxu0 0.0
        %2744 = vmatpush1.msra.mxu0 0.0
        %2745 = vmatprep.subr.mxu0 0.0
        %2746 = vmatpush1.msra.mxu0 0.0
        %2747 = vmatprep.subr.mxu0 0.0
        %2748 = vmatpush1.msra.mxu0 0.0
        %2749 = vmatprep.subr.mxu0 0.0
        %2750 = vmatpush1.msra.mxu0 0.0
        %2751 = vmatprep.subr.mxu0 0.0
        %2752 = vmatpush1.msra.mxu0 0.0
        %2753 = vmatprep.subr.mxu0 0.0
        %2754 = vmatpush1.msra.mxu0 0.0
        %2755 = vmatprep.subr.mxu0 0.0
        %2756 = vmatpush1.msra.mxu0 0.0
        %2757 = vmatprep.subr.mxu0 0.0
        %2758 = vmatpush1.msra.mxu0 0.0
        %2759 = vmatprep.subr.mxu0 0.0
        %2760 = vmatpush1.msra.mxu0 0.0
        %2761 = vmatprep.subr.mxu0 0.0
        %2762 = vmatpush1.msra.mxu0 0.0
        %2763 = vmatprep.subr.mxu0 0.0
        %2764 = vmatpush1.msra.mxu0 0.0
        %2765 = vmatprep.subr.mxu0 0.0
        %2766 = vmatpush1.msra.mxu0 0.0
        %2767 = vmatprep.subr.mxu0 0.0
        %2768 = vmatpush1.msra.mxu0 0.0
        %2769 = vmatprep.subr.mxu0 0.0
        %2770 = vmatpush1.msra.mxu0 0.0
        %2771 = vmatprep.subr.mxu0 0.0
        %2772 = vmatpush1.msra.mxu0 0.0
        %2773 = vmatprep.subr.mxu0 0.0
        %2774 = vmatpush1.msra.mxu0 0.0
        %2775 = vmatprep.subr.mxu0 0.0
        %2776 = vmatpush1.msra.mxu0 0.0
        %2777 = vmatprep.subr.mxu0 0.0
        %2778 = vmatpush1.msra.mxu0 0.0
        %2779 = vmatprep.subr.mxu0 0.0
        %2780 = vmatpush1.msra.mxu0 0.0
        %2781 = vmatprep.subr.mxu0 0.0
        %2782 = vmatpush1.msra.mxu0 0.0
        %2783 = vmatprep.subr.mxu0 0.0
        %2784 = vmatpush1.msra.mxu0 0.0
        %2785 = vmatprep.subr.mxu0 0.0
        %2786 = vmatpush1.msra.mxu0 0.0
        %2787 = vmatprep.subr.mxu0 0.0
        %2788 = vmatpush1.msra.mxu0 0.0
        %2789 = vmatprep.subr.mxu0 0.0
        %2790 = vmatpush1.msra.mxu0 0.0
        %2791 = vmatprep.subr.mxu0 0.0
        %2792 = vmatpush1.msra.mxu0 0.0
        %2793 = vmatprep.subr.mxu0 0.0
        %2794 = vmatpush1.msra.mxu0 0.0
        %2795 = vmatprep.subr.mxu0 0.0
        %2796 = vmatpush1.msra.mxu0 0.0
        %2797 = vmatprep.subr.mxu0 0.0
        %2798 = vmatpush1.msra.mxu0 0.0
        %2799 = vmatprep.subr.mxu0 0.0
        %2800 = vmatpush1.msra.mxu0 0.0
        %2801 = vmatprep.subr.mxu0 0.0
        %2802 = vmatpush1.msra.mxu0 0.0
        %2803 = vmatprep.subr.mxu0 0.0
        %2804 = vmatpush1.msra.mxu0 0.0
        %2805 = vmatprep.mubr.f32.mxu0 0.0
        %2806 = vmatmul.mubr.f32.gmra.mrb[0].mxu0 %v2739
        %v2807 = vpop.f32.mrb[0].mxu0
        %v2808 = vadd.f32 %v2737, %v2807
        %v2809 = vpop.f32.mrb[0].mxu0
        %2810 = vdwg.mxu0
        %v2811 = vadd.f32 %v2635, 1e-06
        %v2812 = vrsqrt.pop %v2811
        %v2813 = vmul.f32 %v2630, %v2812
        %v2814 = vlaneseq
        %v2815 = vshrl.u32 %v2814, 7
        %v2816 = vsub.s32 0, %v2815
        %v2817 = vrot.slane %v1752, %v2816
        %v2818 = vmul.f32 %v2813, %v2817
        %v2819 = vlaneseq
        %v2820 = vshrl.u32 %v2819, 7
        %v2821 = vsub.s32 1, %v2820
        %v2822 = vrot.slane %v1752, %v2821
        %v2823 = vadd.f32 %v2818, %v2822
        %s2824 = scalar_lea.vmem %s7, 32
        %v2825 = vld [vmem:[%s2824] sm:$0xff]
        %v2826 = vld [vmem:[%s2824 + $0x8] sm:$0xff]
        %v2827 = vld [vmem:[%s2824 + $0x10] sm:$0xff]
        %v2828 = vld [vmem:[%s2824 + $0x18] sm:$0xff]
        %v2829 = vlaneseq
        %v2830 = vshrl.u32 %v2829, 7
        %v2831 = vsub.s32 2, %v2830
        %v2832 = vrot.slane %v1752, %v2831
        %v2834 = vsel %vm495, %v2823, 0
        %2836 = vmatprep.subr.mxu0 0.0
        %2837 = vmatpush1.msra.mxu0 %v2825
        %2838 = vmatprep.subr.mxu0 0.0
        %2839 = vmatpush1.msra.mxu0 %v2826
        %2840 = vmatprep.subr.mxu0 0.0
        %2841 = vmatpush1.msra.mxu0 %v2827
        %2842 = vmatprep.subr.mxu0 0.0
        %2843 = vmatpush1.msra.mxu0 %v2828
        %2844 = vmatprep.subr.mxu0 0.0
        %2845 = vmatpush1.msra.mxu0 0.0
        %2846 = vmatprep.subr.mxu0 0.0
        %2847 = vmatpush1.msra.mxu0 0.0
        %2848 = vmatprep.subr.mxu0 0.0
        %2849 = vmatpush1.msra.mxu0 0.0
        %2850 = vmatprep.subr.mxu0 0.0
        %2851 = vmatpush1.msra.mxu0 0.0
        %2852 = vmatprep.subr.mxu0 0.0
        %2853 = vmatpush1.msra.mxu0 0.0
        %2854 = vmatprep.subr.mxu0 0.0
        %2855 = vmatpush1.msra.mxu0 0.0
        %2856 = vmatprep.subr.mxu0 0.0
        %2857 = vmatpush1.msra.mxu0 0.0
        %2858 = vmatprep.subr.mxu0 0.0
        %2859 = vmatpush1.msra.mxu0 0.0
        %2860 = vmatprep.subr.mxu0 0.0
        %2861 = vmatpush1.msra.mxu0 0.0
        %2862 = vmatprep.subr.mxu0 0.0
        %2863 = vmatpush1.msra.mxu0 0.0
        %2864 = vmatprep.subr.mxu0 0.0
        %2865 = vmatpush1.msra.mxu0 0.0
        %2866 = vmatprep.subr.mxu0 0.0
        %2867 = vmatpush1.msra.mxu0 0.0
        %2868 = vmatprep.subr.mxu0 0.0
        %2869 = vmatpush1.msra.mxu0 0.0
        %2870 = vmatprep.subr.mxu0 0.0
        %2871 = vmatpush1.msra.mxu0 0.0
        %2872 = vmatprep.subr.mxu0 0.0
        %2873 = vmatpush1.msra.mxu0 0.0
        %2874 = vmatprep.subr.mxu0 0.0
        %2875 = vmatpush1.msra.mxu0 0.0
        %2876 = vmatprep.subr.mxu0 0.0
        %2877 = vmatpush1.msra.mxu0 0.0
        %2878 = vmatprep.subr.mxu0 0.0
        %2879 = vmatpush1.msra.mxu0 0.0
        %2880 = vmatprep.subr.mxu0 0.0
        %2881 = vmatpush1.msra.mxu0 0.0
        %2882 = vmatprep.subr.mxu0 0.0
        %2883 = vmatpush1.msra.mxu0 0.0
        %2884 = vmatprep.subr.mxu0 0.0
        %2885 = vmatpush1.msra.mxu0 0.0
        %2886 = vmatprep.subr.mxu0 0.0
        %2887 = vmatpush1.msra.mxu0 0.0
        %2888 = vmatprep.subr.mxu0 0.0
        %2889 = vmatpush1.msra.mxu0 0.0
        %2890 = vmatprep.subr.mxu0 0.0
        %2891 = vmatpush1.msra.mxu0 0.0
        %2892 = vmatprep.subr.mxu0 0.0
        %2893 = vmatpush1.msra.mxu0 0.0
        %2894 = vmatprep.subr.mxu0 0.0
        %2895 = vmatpush1.msra.mxu0 0.0
        %2896 = vmatprep.subr.mxu0 0.0
        %2897 = vmatpush1.msra.mxu0 0.0
        %2898 = vmatprep.subr.mxu0 0.0
        %2899 = vmatpush1.msra.mxu0 0.0
        %2900 = vmatprep.mubr.f32.mxu0 0.0
        %2901 = vmatmul.mubr.f32.gmra.mrb[0].mxu0 %v2834
        %v2902 = vpop.f32.mrb[0].mxu0
        %v2903 = vadd.f32 %v2832, %v2902
        %v2904 = vpop.f32.mrb[0].mxu0
        %2905 = vdwg.mxu0
        %v2906 = vmul.f32 %v2903, 0.5
        %v2907 = vmul.f32 %v2903, 0.044715
        %v2908 = vmul.f32 %v2907, %v2903
        %v2909 = vmul.f32 %v2908, %v2903
        %v2910 = vadd.f32 %v2903, %v2909
        %v2911 = vmul.f32 %v2910, 0.7978846
        %v2912 = vtanh.pop %v2911
        %v2913 = vadd.f32 %v2912, 1.0
        %v2914 = vmul.f32 %v2906, %v2913
        %s2915 = scalar_lea.vmem %s8, 128
        %v2916 = vld [vmem:[%s2915] sm:$0xff]
        %v2917 = vld [vmem:[%s2915 + $0x8] sm:$0xff]
        %v2918 = vld [vmem:[%s2915 + $0x10] sm:$0xff]
        %v2919 = vld [vmem:[%s2915 + $0x18] sm:$0xff]
        %v2920 = vld [vmem:[%s2915 + $0x20] sm:$0xff]
        %v2921 = vld [vmem:[%s2915 + $0x28] sm:$0xff]
        %v2922 = vld [vmem:[%s2915 + $0x30] sm:$0xff]
        %v2923 = vld [vmem:[%s2915 + $0x38] sm:$0xff]
        %v2924 = vld [vmem:[%s2915 + $0x40] sm:$0xff]
        %v2925 = vld [vmem:[%s2915 + $0x48] sm:$0xff]
        %v2926 = vld [vmem:[%s2915 + $0x50] sm:$0xff]
        %v2927 = vld [vmem:[%s2915 + $0x58] sm:$0xff]
        %v2928 = vld [vmem:[%s2915 + $0x60] sm:$0xff]
        %v2929 = vld [vmem:[%s2915 + $0x68] sm:$0xff]
        %v2930 = vld [vmem:[%s2915 + $0x70] sm:$0xff]
        %v2931 = vld [vmem:[%s2915 + $0x78] sm:$0xff]
        %v2932 = vlaneseq
        %v2933 = vshrl.u32 %v2932, 7
        %v2934 = vsub.s32 3, %v2933
        %v2935 = vrot.slane %v1752, %v2934
        %2936 = vmatprep.subr.mxu0 0.0
        %2937 = vmatpush1.msra.mxu0 %v2916
        %2938 = vmatprep.subr.mxu0 0.0
        %2939 = vmatpush1.msra.mxu0 %v2917
        %2940 = vmatprep.subr.mxu0 0.0
        %2941 = vmatpush1.msra.mxu0 %v2918
        %2942 = vmatprep.subr.mxu0 0.0
        %2943 = vmatpush1.msra.mxu0 %v2919
        %2944 = vmatprep.subr.mxu0 0.0
        %2945 = vmatpush1.msra.mxu0 %v2920
        %2946 = vmatprep.subr.mxu0 0.0
        %2947 = vmatpush1.msra.mxu0 %v2921
        %2948 = vmatprep.subr.mxu0 0.0
        %2949 = vmatpush1.msra.mxu0 %v2922
        %2950 = vmatprep.subr.mxu0 0.0
        %2951 = vmatpush1.msra.mxu0 %v2923
        %2952 = vmatprep.subr.mxu0 0.0
        %2953 = vmatpush1.msra.mxu0 %v2924
        %2954 = vmatprep.subr.mxu0 0.0
        %2955 = vmatpush1.msra.mxu0 %v2925
        %2956 = vmatprep.subr.mxu0 0.0
        %2957 = vmatpush1.msra.mxu0 %v2926
        %2958 = vmatprep.subr.mxu0 0.0
        %2959 = vmatpush1.msra.mxu0 %v2927
        %2960 = vmatprep.subr.mxu0 0.0
        %2961 = vmatpush1.msra.mxu0 %v2928
        %2962 = vmatprep.subr.mxu0 0.0
        %2963 = vmatpush1.msra.mxu0 %v2929
        %2964 = vmatprep.subr.mxu0 0.0
        %2965 = vmatpush1.msra.mxu0 %v2930
        %2966 = vmatprep.subr.mxu0 0.0
        %2967 = vmatpush1.msra.mxu0 %v2931
        %2968 = vmatprep.subr.mxu0 0.0
        %2969 = vmatpush1.msra.mxu0 0.0
        %2970 = vmatprep.subr.mxu0 0.0
        %2971 = vmatpush1.msra.mxu0 0.0
        %2972 = vmatprep.subr.mxu0 0.0
        %2973 = vmatpush1.msra.mxu0 0.0
        %2974 = vmatprep.subr.mxu0 0.0
        %2975 = vmatpush1.msra.mxu0 0.0
        %2976 = vmatprep.subr.mxu0 0.0
        %2977 = vmatpush1.msra.mxu0 0.0
        %2978 = vmatprep.subr.mxu0 0.0
        %2979 = vmatpush1.msra.mxu0 0.0
        %2980 = vmatprep.subr.mxu0 0.0
        %2981 = vmatpush1.msra.mxu0 0.0
        %2982 = vmatprep.subr.mxu0 0.0
        %2983 = vmatpush1.msra.mxu0 0.0
        %2984 = vmatprep.subr.mxu0 0.0
        %2985 = vmatpush1.msra.mxu0 0.0
        %2986 = vmatprep.subr.mxu0 0.0
        %2987 = vmatpush1.msra.mxu0 0.0
        %2988 = vmatprep.subr.mxu0 0.0
        %2989 = vmatpush1.msra.mxu0 0.0
        %2990 = vmatprep.subr.mxu0 0.0
        %2991 = vmatpush1.msra.mxu0 0.0
        %2992 = vmatprep.subr.mxu0 0.0
        %2993 = vmatpush1.msra.mxu0 0.0
        %2994 = vmatprep.subr.mxu0 0.0
        %2995 = vmatpush1.msra.mxu0 0.0
        %2996 = vmatprep.subr.mxu0 0.0
        %2997 = vmatpush1.msra.mxu0 0.0
        %2998 = vmatprep.subr.mxu0 0.0
        %2999 = vmatpush1.msra.mxu0 0.0
        %3000 = vmatprep.mubr.f32.mxu0 0.0
        %3001 = vmatmul.mubr.f32.gmra.mrb[0].mxu0 %v2914
        %v3002 = vpop.f32.mrb[0].mxu0
        %v3003 = vadd.f32 %v2935, %v3002
        %v3004 = vpop.f32.mrb[0].mxu0
        %3005 = vdwg.mxu0
        %v3006 = vadd.f32 %v2625, %v3003
        %v3007 = vadd.f32 %v3006, %v2808
        %v3008 = vld [vmem:[%s10] sm:$0xff]
        %vm3009 = vcmask 253952
        %v3010 = vsel %vm3009, %v3007, 0.0
        %3011 = vadd.xlane.f32.xlu0 %v3010
        %v3012 = vpop.xlane.xlu0 %3011
        %v3013 = vmul.f32 %v3012, %v499
        %v3014 = vsub.f32 %v3007, %v3013
        %v3015 = vmul.f32 %v3014, %v3014
        %v3016 = vsel %vm3009, %v3015, 0.0
        %3017 = vadd.xlane.f32.xlu0 %v3016
        %v3018 = vpop.xlane.xlu0 %3017
        %v3019 = vmul.f32 %v3018, %v499
        %v3020 = vadd.f32 %v3019, 1e-06
        %v3021 = vrsqrt.pop %v3020
        %v3022 = vmul.f32 %v3014, %v3021
        %v3023 = vmul.f32 %v3022, %v3008
        %v3025 = vrot.slane %v3008, 1
        %v3027 = vadd.f32 %v3023, %v3025
        %v3028 = vsel %vm495, %v3027, 0.0
        %3029 = vst [vmem:[%s378] sm:$0x1] %v3028
        %s3030 = sand.u32 %s269, 1
        %s3031 = scalar_lea.sflag [#allocation4], %s3030
        %s3032 = sand.u32 %s269, 1
        %s3033 = scalar_lea.vmem [#allocation3], %s3032
        // Predicated region
        $region65: #{vit_forward.1} parent=63 // pred_check
          %p3034 = pneg %p279
        $region66: #{vit_forward.1} parent=63 // pred_check_branch
          %3036 = sbr.rel (%p3034) target = $region68
        $region67: #{vit_forward.1} parent=63 // pred_region
          %s3038 = ssub.s32 16, 16
          %3039 = vsyncadd %s3031, %s3038
          %s3040 = smul.addr %s25, 16
          %s3041 = scalar_lea.hbm %s11, %s3040
          %s3043 = sshll.u32 %s3033, 4
          %s3044 = int_to_ptr.vmem [resolvable:$true] %s3043
          %3046 = dma.vmem_to_hbm [thread:$0]  %s3044, 16, %s3041, %s3031
        $region68: #{vit_forward.1} parent=63 // pred_fallthru
          _
      $region64: #{vit_forward.1} parent=5 // pred_fallthru
        _
      %p3047 = scmp.le.s32.totalorder 2, %s20
      // Predicated region
      $region69: #{vit_forward.1} parent=5 // pred_check
        %p3048 = pneg %p3047
      $region70: #{vit_forward.1} parent=5 // pred_check_branch
        %3050 = sbr.rel (%p3048) target = $region72
      $region71: #{vit_forward.1} parent=5 // pred_region
        %s3051 = ssub.s32 %s20, 2
        // Predicated region
        $region73: #{vit_forward.1} parent=71 // pred_check
          %p3052 = pneg %p285
        $region74: #{vit_forward.1} parent=71 // pred_check_branch
          %3054 = sbr.rel (%p3052) target = $region76
        $region75: #{vit_forward.1} parent=71 // pred_region
          %s3055 = sand.u32 %s270, 1
          %s3056 = scalar_lea.sflag [#allocation4], %s3055
          %s3057 = sand.u32 %s270, 1
          %s3058 = scalar_lea.vmem [#allocation3], %s3057
          %3059 = dma.done %s3056, 16
        $region76: #{vit_forward.1} parent=71 // pred_fallthru
          _
      $region72: #{vit_forward.1} parent=5 // pred_fallthru
        _
    $region6: #{vit_forward.1} parent=1 // loop_footer
      %s24 = sadd.s32 1, %s20
    $region7: #{vit_forward.1} parent=1 // loop_footer_branch
      %19 = sbr.rel target = $region3
    $region8: #{vit_forward.1} parent=1 // loop_exit
      _
    %3060 = vsyncpa [#allocation4], 1
    %s3061 = scalar_lea.sflag [#allocation4], 1
    %3062 = vsyncpa %s3061, 1

</llo_original>
